<compile_context>
chip_gen: v7x
topology: tpu7x:2x2x1
jax: 0.10.0
libtpu: 0.0.40
codegen_flags: <defaults>
</compile_context>

<pallas_src>
import jax
import jax.numpy as jnp
from jax.experimental import pallas as pl
from jax.experimental.pallas import tpu as pltpu

IN_FEATURES = 6400
HIDDEN_SIZE = 200
OUT_FEATURES = 1

MAX_BATCH_TILE_BF16 = 256  # rows per grid step when x is bf16
MAX_BATCH_TILE_F32 = 128   # rows per grid step when x is fp32


def _round_up(x, m):
    return (x + m - 1) // m * m


def _net_kernel(x_ref, w1_ref, b1_ref, w2_ref, b2_ref, o_ref):
    """Fused MLP kernel for one batch tile: (tm, 6400) -> (tm, 1).

    Single step over the full K=6400 contraction (no reduction grid axis, no
    scratch accumulator). Layer 1 runs on the MXU in bf16 with f32 accumulate;
    layer 2 (200 -> 1) is a cheap VPU lane reduction.
    """
    x = x_ref[...]
    if x.dtype != jnp.bfloat16:          # static (trace-time) branch
        x = x.astype(jnp.bfloat16)
    h = jnp.dot(x, w1_ref[...], preferred_element_type=jnp.float32)
    h = jnp.maximum(h + b1_ref[...], 0.0)        # bias + ReLU, f32
    # Second linear as a lane reduction (avoids a 1-wide MXU matmul + drain).
    y = jnp.sum(h * w2_ref[...], axis=-1, keepdims=True) + b2_ref[...]
    o_ref[...] = y.astype(o_ref.dtype)


def net_forward(x, w1_bf16, b1, w2, b2):
    """Forward pass of NET. x: any shape with prod(shape) % 6400 == 0.

    For best HBM bandwidth, pass x already in bf16 (the producer should emit
    bf16 directly; do not add a separate cast pass in the caller).
    """
    x2 = x.reshape(-1, IN_FEATURES)
    B = x2.shape[0]
    x_is_bf16 = x2.dtype == jnp.bfloat16
    x_bytes = 2 if x_is_bf16 else 4

    # Batch tile: multiple of 8 sublanes; no padding of x — partial last tile
    # is handled by Pallas (masked writes on the output block).
    max_tile = MAX_BATCH_TILE_BF16 if x_is_bf16 else MAX_BATCH_TILE_F32
    tm = min(max_tile, _round_up(B, 8))
    grid = pl.cdiv(B, tm)

    b1_2d = b1.reshape(1, HIDDEN_SIZE).astype(jnp.float32)
    w2_2d = w2.reshape(1, HIDDEN_SIZE).astype(jnp.float32)   # (200,1) -> (1,200) row
    b2_2d = b2.reshape(1, OUT_FEATURES).astype(jnp.float32)

    # Explicit scoped-VMEM budget: double-buffered x tile + double-buffered
    # bf16 w1 + f32 hidden temps + small operands, plus ~50% headroom.
    footprint = (
        2 * tm * IN_FEATURES * x_bytes            # x tile, double-buffered
        + 2 * IN_FEATURES * HIDDEN_SIZE * 2       # w1 bf16, double-buffered
        + 2 * tm * HIDDEN_SIZE * 4                # h / intermediate f32
        + 4 * 2 * HIDDEN_SIZE * 4                 # b1/w2/b2 + slack
        + 2 * tm * OUT_FEATURES * 4               # output tile
    )
    vmem_limit = max(footprint + footprint // 2 + (4 << 20), 16 << 20)

    out = pl.pallas_call(
        _net_kernel,
        out_shape=jax.ShapeDtypeStruct((B, OUT_FEATURES), jnp.float32),
        grid_spec=pltpu.PrefetchScalarGridSpec(
            num_scalar_prefetch=0,
            grid=(grid,),
            in_specs=[
                pl.BlockSpec((tm, IN_FEATURES), lambda i: (i, 0)),            # x tile
                pl.BlockSpec((IN_FEATURES, HIDDEN_SIZE), lambda i: (0, 0)),   # w1 (full, bf16)
                pl.BlockSpec((1, HIDDEN_SIZE), lambda i: (0, 0)),             # b1 (full)
                pl.BlockSpec((1, HIDDEN_SIZE), lambda i: (0, 0)),             # w2 row (full)
                pl.BlockSpec((1, OUT_FEATURES), lambda i: (0, 0)),            # b2 (full)
            ],
            out_specs=pl.BlockSpec((tm, OUT_FEATURES), lambda i: (i, 0)),
        ),
        compiler_params=pltpu.CompilerParams(
            dimension_semantics=("parallel",),   # batch axis -> megacore / 2 TCs on v7x
            vmem_limit_bytes=int(vmem_limit),
        ),
    )(x2, w1_bf16, b1_2d, w2_2d, b2_2d)

    return out


def _xavier_uniform(key, fan_in, fan_out, gain=1.0):
    # Matches torch.nn.init.xavier_uniform_: U(-a, a), a = gain*sqrt(6/(fan_in+fan_out)).
    a = gain * jnp.sqrt(6.0 / (fan_in + fan_out))
    return jax.random.uniform(
        key, (fan_in, fan_out), minval=-a, maxval=a, dtype=jnp.float32
    )


def init_params(key):
    k1, k2 = jax.random.split(key)
    w1 = _xavier_uniform(k1, IN_FEATURES, HIDDEN_SIZE)   # stored (in, out)
    w1_bf16 = w1.astype(jnp.bfloat16)                    # cast once; streamed as bf16
    # TODO(synk): optional int8 (v5e/v6e) / fp8 (v7x) w1 for the tiny-batch
    # weight-streaming-bound path, gated behind an accuracy check.
    b1 = jnp.zeros((HIDDEN_SIZE,), jnp.float32)          # init.constant(val=0)
    w2 = _xavier_uniform(k2, HIDDEN_SIZE, OUT_FEATURES)
    b2 = jnp.zeros((OUT_FEATURES,), jnp.float32)
    return w1_bf16, b1, w2, b2


if __name__ == "__main__":
    key = jax.random.PRNGKey(0)
    k_params, k_x = jax.random.split(key)

    w1_bf16, b1, w2, b2 = init_params(k_params)

    # Pong frame: batch=2, 80x80 = 6400 features (view(-1, 6400) in the module).
    # Produced directly in bf16 (recommended input contract — no extra cast pass).
    x = jax.random.normal(k_x, (2, 80, 80), dtype=jnp.bfloat16)

    out = net_forward(x, w1_bf16, b1, w2, b2)
    out = jax.block_until_ready(out)

    # Reference in plain JAX, using the same bf16 operands the kernel sees
    # (accumulation in f32).
    x_f32 = x.reshape(-1, IN_FEATURES).astype(jnp.float32)
    w1_f32 = w1_bf16.astype(jnp.float32)
    ref = jnp.maximum(x_f32 @ w1_f32 + b1, 0.0) @ w2 + b2

    assert out.shape == (2, 1)
    assert jnp.allclose(out, ref, atol=1e-3, rtol=1e-3)

    print("KERNEL_OK")
</pallas_src>

<mosaic_0001>
module attributes {stable_mosaic.version = 11 : i64} {
  func.func @_net_kernel(%arg0: i32, %arg1: memref<8x6400xbf16, #tpu.memory_space<vmem>>, %arg2: memref<6400x200xbf16, #tpu.memory_space<vmem>>, %arg3: memref<1x200xf32, #tpu.memory_space<vmem>>, %arg4: memref<1x200xf32, #tpu.memory_space<vmem>>, %arg5: memref<1x1xf32, #tpu.memory_space<vmem>>, %arg6: memref<8x1xf32, #tpu.memory_space<vmem>>) attributes {dimension_semantics = [#tpu.dimension_semantics<parallel>], iteration_bounds = array<i64: 1>, scalar_prefetch = 0 : i64, scratch_operands = 0 : i64, tpu.core_type = #tpu.core_type<tc>, window_params = [{transform_indices = @transform_0, window_bounds = array<i64: 8, 6400>}, {pipeline_mode = #tpu.pipeline_mode<synchronous>, transform_indices = @transform_1, window_bounds = array<i64: 6400, 200>}, {pipeline_mode = #tpu.pipeline_mode<synchronous>, transform_indices = @transform_2, window_bounds = array<i64: 1, 200>}, {pipeline_mode = #tpu.pipeline_mode<synchronous>, transform_indices = @transform_3, window_bounds = array<i64: 1, 200>}, {pipeline_mode = #tpu.pipeline_mode<synchronous>, transform_indices = @transform_4, window_bounds = array<i64: 1, 1>}, {transform_indices = @transform_5, window_bounds = array<i64: 8, 1>}]} {
    %c0 = arith.constant 0 : index
    %c0_0 = arith.constant 0 : index
    %0 = vector.load %arg1[%c0, %c0_0] : memref<8x6400xbf16, #tpu.memory_space<vmem>>, vector<8x6400xbf16>
    %c0_1 = arith.constant 0 : index
    %c0_2 = arith.constant 0 : index
    %1 = vector.load %arg2[%c0_1, %c0_2] : memref<6400x200xbf16, #tpu.memory_space<vmem>>, vector<6400x200xbf16>
    %cst = arith.constant dense<0.000000e+00> : vector<8x200xf32>
    %2 = tpu.matmul %0, %1, %cst {dimension_numbers = #tpu.dot_dimension_numbers<[1], [0], [0], [1], [0, 0, 1, 1], [], []>} : vector<8x6400xbf16>, vector<6400x200xbf16>, vector<8x200xf32> -> vector<8x200xf32>
    %c0_3 = arith.constant 0 : index
    %c0_4 = arith.constant 0 : index
    %3 = vector.load %arg3[%c0_3, %c0_4] : memref<1x200xf32, #tpu.memory_space<vmem>>, vector<1x200xf32>
    %4 = vector.broadcast %3 : vector<1x200xf32> to vector<8x200xf32>
    %5 = arith.addf %2, %4 : vector<8x200xf32>
    %cst_5 = arith.constant 0.000000e+00 : f32
    %6 = vector.broadcast %cst_5 : f32 to vector<8x200xf32>
    %7 = arith.maximumf %5, %6 : vector<8x200xf32>
    %c0_6 = arith.constant 0 : index
    %c0_7 = arith.constant 0 : index
    %8 = vector.load %arg4[%c0_6, %c0_7] : memref<1x200xf32, #tpu.memory_space<vmem>>, vector<1x200xf32>
    %9 = vector.broadcast %8 : vector<1x200xf32> to vector<8x200xf32>
    %10 = arith.mulf %7, %9 : vector<8x200xf32>
    %cst_8 = arith.constant dense<0.000000e+00> : vector<8xf32>
    %11 = vector.multi_reduction <add>, %10, %cst_8 [1] : vector<8x200xf32> to vector<8xf32>
    %12 = vector.shape_cast %11 : vector<8xf32> to vector<8x1xf32>
    %c0_9 = arith.constant 0 : index
    %c0_10 = arith.constant 0 : index
    %13 = vector.load %arg5[%c0_9, %c0_10] : memref<1x1xf32, #tpu.memory_space<vmem>>, vector<1x1xf32>
    %14 = vector.broadcast %13 : vector<1x1xf32> to vector<8x1xf32>
    %15 = arith.addf %12, %14 : vector<8x1xf32>
    %c0_11 = arith.constant 0 : index
    %c0_12 = arith.constant 0 : index
    %16 = vector.load %arg6[%c0_11, %c0_12] : memref<8x1xf32, #tpu.memory_space<vmem>>, vector<8x1xf32>
    tpu.vector_store %arg6[%c0_11, %c0_12], %15 {strides = array<i32>} : memref<8x1xf32, #tpu.memory_space<vmem>>, vector<8x1xf32>,
    return
  }
  func.func @transform_0(%arg0: i32) -> (i32, i32) {
    %c0_i32 = arith.constant 0 : i32
    %c0_i32_0 = arith.constant 0 : i32
    return %arg0, %c0_i32 : i32, i32
  }
  func.func @transform_1(%arg0: i32) -> (i32, i32) {
    %c0_i32 = arith.constant 0 : i32
    %c0_i32_0 = arith.constant 0 : i32
    %c0_i32_1 = arith.constant 0 : i32
    return %c0_i32, %c0_i32_0 : i32, i32
  }
  func.func @transform_2(%arg0: i32) -> (i32, i32) {
    %c0_i32 = arith.constant 0 : i32
    %c0_i32_0 = arith.constant 0 : i32
    %c0_i32_1 = arith.constant 0 : i32
    return %c0_i32, %c0_i32_0 : i32, i32
  }
  func.func @transform_3(%arg0: i32) -> (i32, i32) {
    %c0_i32 = arith.constant 0 : i32
    %c0_i32_0 = arith.constant 0 : i32
    %c0_i32_1 = arith.constant 0 : i32
    return %c0_i32, %c0_i32_0 : i32, i32
  }
  func.func @transform_4(%arg0: i32) -> (i32, i32) {
    %c0_i32 = arith.constant 0 : i32
    %c0_i32_0 = arith.constant 0 : i32
    %c0_i32_1 = arith.constant 0 : i32
    return %c0_i32, %c0_i32_0 : i32, i32
  }
  func.func @transform_5(%arg0: i32) -> (i32, i32) {
    %c0_i32 = arith.constant 0 : i32
    %c0_i32_0 = arith.constant 0 : i32
    return %arg0, %c0_i32 : i32, i32
  }
}

</mosaic_0001>

<llo_original>
// kernel: tpu_custom_call.1
$region0: #{tpu_custom_call.1}
  #allocation0 [shape = 'u32[]', space=smem, size = 0x4, offset = 0x4, fixed_abs, tag = 'smem constant byte address 0x4 - core index']
  #allocation1 [shape = 'u32[144,128]{1,0:T(1,128)}', space=vmem, size = 0x12000, scoped, tag = 'internal scratch']
  #allocation2 [shape = 'f32[1,1]{1,0:T(1,128)S(1)}', space=vmem, size = 0x200, scoped, tag = 'scoped memory for tpu_custom_call.1']
  %s0 = inlined_call_operand.vmem [shape: bf16[2,6400], index: 0, kind: input, shape index: {}]
  %s1 = inlined_call_operand.vmem [shape: bf16[6400,200], index: 1, kind: input, shape index: {}]
  %s2 = inlined_call_operand.vmem [shape: f32[1,200], index: 2, kind: input, shape index: {}]
  %s3 = inlined_call_operand.vmem [shape: f32[1,200], index: 3, kind: input, shape index: {}]
  %s4 = inlined_call_operand.<no memory space> [shape: f32[1,1], index: 4, kind: input, shape index: {}]
  %s5 = inlined_call_operand.vmem [shape: f32[2,1], index: 5, kind: output, shape index: {}]
  %s6 = sld [smem:[#allocation0]]
  $region60: #{tpu_custom_call.1} parent=0
    _
  %s8 = ssub.s32 1, %s6
  %s9 = scalar_select 0, %s8, %s6
  %v10 = vstv %s4
  %11 = vst [vmem:[#allocation2] sm:$0x1] %v10
  $region1: #{tpu_custom_call.1} parent=0
    #allocation3 [shape = 'u8[4096]{0}', space=vmem, size = 0x1000, scoped, tag = 'output window, operand 0, single buffered']
    // Predicated region
    $region2: #{tpu_custom_call.1} parent=1 // pred_check
      _
    $region3: #{tpu_custom_call.1} parent=1 // pred_check_branch
      %13 = sbr.rel (0) target = $region5
    $region4: #{tpu_custom_call.1} parent=1 // pred_region
      _
    $region5: #{tpu_custom_call.1} parent=1 // pred_fallthru
      _
    // Predicated region
    $region6: #{tpu_custom_call.1} parent=1 // pred_check
      _
    $region7: #{tpu_custom_call.1} parent=1 // pred_check_branch
      %15 = sbr.rel (0) target = $region9
    $region8: #{tpu_custom_call.1} parent=1 // pred_region
      _
    $region9: #{tpu_custom_call.1} parent=1 // pred_fallthru
      _
    // Predicated region
    $region10: #{tpu_custom_call.1} parent=1 // pred_check
      _
    $region11: #{tpu_custom_call.1} parent=1 // pred_check_branch
      %17 = sbr.rel (0) target = $region13
    $region12: #{tpu_custom_call.1} parent=1 // pred_region
      _
    $region13: #{tpu_custom_call.1} parent=1 // pred_fallthru
      _
    // Predicated region
    $region14: #{tpu_custom_call.1} parent=1 // pred_check
      _
    $region15: #{tpu_custom_call.1} parent=1 // pred_check_branch
      %19 = sbr.rel (0) target = $region17
    $region16: #{tpu_custom_call.1} parent=1 // pred_region
      _
    $region17: #{tpu_custom_call.1} parent=1 // pred_fallthru
      _
    // Predicated region
    $region18: #{tpu_custom_call.1} parent=1 // pred_check
      _
    $region19: #{tpu_custom_call.1} parent=1 // pred_check_branch
      %21 = sbr.rel (0) target = $region21
    $region20: #{tpu_custom_call.1} parent=1 // pred_region
      _
    $region21: #{tpu_custom_call.1} parent=1 // pred_fallthru
      _
    %v22 = vld [vmem:[%s0] sm:$0xff]
    %v23 = vld [vmem:[%s0 + $0x8] sm:$0xff]
    %v24 = vld [vmem:[%s0 + $0x10] sm:$0xff]
    %v25 = vld [vmem:[%s0 + $0x18] sm:$0xff]
    %v26 = vld [vmem:[%s0 + $0x20] sm:$0xff]
    %v27 = vld [vmem:[%s0 + $0x28] sm:$0xff]
    %v28 = vld [vmem:[%s0 + $0x30] sm:$0x3]
    %v29 = vld [vmem:[%s0 + $0x32] sm:$0xff]
    %v30 = vld [vmem:[%s0 + $0x3a] sm:$0xff]
    %v31 = vld [vmem:[%s0 + $0x42] sm:$0xff]
    %v32 = vld [vmem:[%s0 + $0x4a] sm:$0xff]
    %v33 = vld [vmem:[%s0 + $0x52] sm:$0xff]
    %v34 = vld [vmem:[%s0 + $0x5a] sm:$0xff]
    %v35 = vld [vmem:[%s0 + $0x62] sm:$0x3]
    %v36 = vld [vmem:[%s0 + $0x64] sm:$0xff]
    %v37 = vld [vmem:[%s0 + $0x6c] sm:$0xff]
    %v38 = vld [vmem:[%s0 + $0x74] sm:$0xff]
    %v39 = vld [vmem:[%s0 + $0x7c] sm:$0xff]
    %v40 = vld [vmem:[%s0 + $0x84] sm:$0xff]
    %v41 = vld [vmem:[%s0 + $0x8c] sm:$0xff]
    %v42 = vld [vmem:[%s0 + $0x94] sm:$0x3]
    %v43 = vld [vmem:[%s0 + $0x96] sm:$0xff]
    %v44 = vld [vmem:[%s0 + $0x9e] sm:$0xff]
    %v45 = vld [vmem:[%s0 + $0xa6] sm:$0xff]
    %v46 = vld [vmem:[%s0 + $0xae] sm:$0xff]
    %v47 = vld [vmem:[%s0 + $0xb6] sm:$0xff]
    %v48 = vld [vmem:[%s0 + $0xbe] sm:$0xff]
    %v49 = vld [vmem:[%s0 + $0xc6] sm:$0x3]
    %v50 = vld [vmem:[%s1] sm:$0xff]
    %v51 = vld [vmem:[%s1 + $0x8] sm:$0xff]
    %v52 = vld [vmem:[%s1 + $0x10] sm:$0xff]
    %v53 = vld [vmem:[%s1 + $0x18] sm:$0xff]
    %v54 = vld [vmem:[%s1 + $0x20] sm:$0xff]
    %v55 = vld [vmem:[%s1 + $0x28] sm:$0xff]
    %v56 = vld [vmem:[%s1 + $0x30] sm:$0xff]
    %v57 = vld [vmem:[%s1 + $0x38] sm:$0xff]
    %v58 = vld [vmem:[%s1 + $0x40] sm:$0xff]
    %v59 = vld [vmem:[%s1 + $0x48] sm:$0xff]
    %v60 = vld [vmem:[%s1 + $0x50] sm:$0xff]
    %v61 = vld [vmem:[%s1 + $0x58] sm:$0xff]
    %v62 = vld [vmem:[%s1 + $0x60] sm:$0xff]
    %v63 = vld [vmem:[%s1 + $0x68] sm:$0xff]
    %v64 = vld [vmem:[%s1 + $0x70] sm:$0xff]
    %v65 = vld [vmem:[%s1 + $0x78] sm:$0xff]
    %v66 = vld [vmem:[%s1 + $0x80] sm:$0xff]
    %v67 = vld [vmem:[%s1 + $0x88] sm:$0xff]
    %v68 = vld [vmem:[%s1 + $0x90] sm:$0xff]
    %v69 = vld [vmem:[%s1 + $0x98] sm:$0xff]
    %v70 = vld [vmem:[%s1 + $0xa0] sm:$0xff]
    %v71 = vld [vmem:[%s1 + $0xa8] sm:$0xff]
    %v72 = vld [vmem:[%s1 + $0xb0] sm:$0xff]
    %v73 = vld [vmem:[%s1 + $0xb8] sm:$0xff]
    %v74 = vld [vmem:[%s1 + $0xc0] sm:$0xff]
    %v75 = vld [vmem:[%s1 + $0xc8] sm:$0xff]
    %v76 = vld [vmem:[%s1 + $0xd0] sm:$0xff]
    %v77 = vld [vmem:[%s1 + $0xd8] sm:$0xff]
    %v78 = vld [vmem:[%s1 + $0xe0] sm:$0xff]
    %v79 = vld [vmem:[%s1 + $0xe8] sm:$0xff]
    %v80 = vld [vmem:[%s1 + $0xf0] sm:$0xff]
    %v81 = vld [vmem:[%s1 + $0xf8] sm:$0xff]
    %v82 = vld [vmem:[%s1 + $0x100] sm:$0xff]
    %v83 = vld [vmem:[%s1 + $0x108] sm:$0xff]
    %v84 = vld [vmem:[%s1 + $0x110] sm:$0xff]
    %v85 = vld [vmem:[%s1 + $0x118] sm:$0xff]
    %v86 = vld [vmem:[%s1 + $0x120] sm:$0xff]
    %v87 = vld [vmem:[%s1 + $0x128] sm:$0xff]
    %v88 = vld [vmem:[%s1 + $0x130] sm:$0xff]
    %v89 = vld [vmem:[%s1 + $0x138] sm:$0xff]
    %v90 = vld [vmem:[%s1 + $0x140] sm:$0xff]
    %v91 = vld [vmem:[%s1 + $0x148] sm:$0xff]
    %v92 = vld [vmem:[%s1 + $0x150] sm:$0xff]
    %v93 = vld [vmem:[%s1 + $0x158] sm:$0xff]
    %v94 = vld [vmem:[%s1 + $0x160] sm:$0xff]
    %v95 = vld [vmem:[%s1 + $0x168] sm:$0xff]
    %v96 = vld [vmem:[%s1 + $0x170] sm:$0xff]
    %v97 = vld [vmem:[%s1 + $0x178] sm:$0xff]
    %v98 = vld [vmem:[%s1 + $0x180] sm:$0xff]
    %v99 = vld [vmem:[%s1 + $0x188] sm:$0xff]
    %v100 = vld [vmem:[%s1 + $0x190] sm:$0xff]
    %v101 = vld [vmem:[%s1 + $0x198] sm:$0xff]
    %v102 = vld [vmem:[%s1 + $0x1a0] sm:$0xff]
    %v103 = vld [vmem:[%s1 + $0x1a8] sm:$0xff]
    %v104 = vld [vmem:[%s1 + $0x1b0] sm:$0xff]
    %v105 = vld [vmem:[%s1 + $0x1b8] sm:$0xff]
    %v106 = vld [vmem:[%s1 + $0x1c0] sm:$0xff]
    %v107 = vld [vmem:[%s1 + $0x1c8] sm:$0xff]
    %v108 = vld [vmem:[%s1 + $0x1d0] sm:$0xff]
    %v109 = vld [vmem:[%s1 + $0x1d8] sm:$0xff]
    %v110 = vld [vmem:[%s1 + $0x1e0] sm:$0xff]
    %v111 = vld [vmem:[%s1 + $0x1e8] sm:$0xff]
    %v112 = vld [vmem:[%s1 + $0x1f0] sm:$0xff]
    %v113 = vld [vmem:[%s1 + $0x1f8] sm:$0xff]
    %v114 = vld [vmem:[%s1 + $0x200] sm:$0xff]
    %v115 = vld [vmem:[%s1 + $0x208] sm:$0xff]
    %v116 = vld [vmem:[%s1 + $0x210] sm:$0xff]
    %v117 = vld [vmem:[%s1 + $0x218] sm:$0xff]
    %v118 = vld [vmem:[%s1 + $0x220] sm:$0xff]
    %v119 = vld [vmem:[%s1 + $0x228] sm:$0xff]
    %v120 = vld [vmem:[%s1 + $0x230] sm:$0xff]
    %v121 = vld [vmem:[%s1 + $0x238] sm:$0xff]
    %v122 = vld [vmem:[%s1 + $0x240] sm:$0xff]
    %v123 = vld [vmem:[%s1 + $0x248] sm:$0xff]
    %v124 = vld [vmem:[%s1 + $0x250] sm:$0xff]
    %v125 = vld [vmem:[%s1 + $0x258] sm:$0xff]
    %v126 = vld [vmem:[%s1 + $0x260] sm:$0xff]
    %v127 = vld [vmem:[%s1 + $0x268] sm:$0xff]
    %v128 = vld [vmem:[%s1 + $0x270] sm:$0xff]
    %v129 = vld [vmem:[%s1 + $0x278] sm:$0xff]
    %v130 = vld [vmem:[%s1 + $0x280] sm:$0xff]
    %v131 = vld [vmem:[%s1 + $0x288] sm:$0xff]
    %v132 = vld [vmem:[%s1 + $0x290] sm:$0xff]
    %v133 = vld [vmem:[%s1 + $0x298] sm:$0xff]
    %v134 = vld [vmem:[%s1 + $0x2a0] sm:$0xff]
    %v135 = vld [vmem:[%s1 + $0x2a8] sm:$0xff]
    %v136 = vld [vmem:[%s1 + $0x2b0] sm:$0xff]
    %v137 = vld [vmem:[%s1 + $0x2b8] sm:$0xff]
    %v138 = vld [vmem:[%s1 + $0x2c0] sm:$0xff]
    %v139 = vld [vmem:[%s1 + $0x2c8] sm:$0xff]
    %v140 = vld [vmem:[%s1 + $0x2d0] sm:$0xff]
    %v141 = vld [vmem:[%s1 + $0x2d8] sm:$0xff]
    %v142 = vld [vmem:[%s1 + $0x2e0] sm:$0xff]
    %v143 = vld [vmem:[%s1 + $0x2e8] sm:$0xff]
    %v144 = vld [vmem:[%s1 + $0x2f0] sm:$0xff]
    %v145 = vld [vmem:[%s1 + $0x2f8] sm:$0xff]
    %v146 = vld [vmem:[%s1 + $0x300] sm:$0xff]
    %v147 = vld [vmem:[%s1 + $0x308] sm:$0xff]
    %v148 = vld [vmem:[%s1 + $0x310] sm:$0xff]
    %v149 = vld [vmem:[%s1 + $0x318] sm:$0xff]
    %v150 = vld [vmem:[%s1 + $0x320] sm:$0xff]
    %v151 = vld [vmem:[%s1 + $0x328] sm:$0xff]
    %v152 = vld [vmem:[%s1 + $0x330] sm:$0xff]
    %v153 = vld [vmem:[%s1 + $0x338] sm:$0xff]
    %v154 = vld [vmem:[%s1 + $0x340] sm:$0xff]
    %v155 = vld [vmem:[%s1 + $0x348] sm:$0xff]
    %v156 = vld [vmem:[%s1 + $0x350] sm:$0xff]
    %v157 = vld [vmem:[%s1 + $0x358] sm:$0xff]
    %v158 = vld [vmem:[%s1 + $0x360] sm:$0xff]
    %v159 = vld [vmem:[%s1 + $0x368] sm:$0xff]
    %v160 = vld [vmem:[%s1 + $0x370] sm:$0xff]
    %v161 = vld [vmem:[%s1 + $0x378] sm:$0xff]
    %v162 = vld [vmem:[%s1 + $0x380] sm:$0xff]
    %v163 = vld [vmem:[%s1 + $0x388] sm:$0xff]
    %v164 = vld [vmem:[%s1 + $0x390] sm:$0xff]
    %v165 = vld [vmem:[%s1 + $0x398] sm:$0xff]
    %v166 = vld [vmem:[%s1 + $0x3a0] sm:$0xff]
    %v167 = vld [vmem:[%s1 + $0x3a8] sm:$0xff]
    %v168 = vld [vmem:[%s1 + $0x3b0] sm:$0xff]
    %v169 = vld [vmem:[%s1 + $0x3b8] sm:$0xff]
    %v170 = vld [vmem:[%s1 + $0x3c0] sm:$0xff]
    %v171 = vld [vmem:[%s1 + $0x3c8] sm:$0xff]
    %v172 = vld [vmem:[%s1 + $0x3d0] sm:$0xff]
    %v173 = vld [vmem:[%s1 + $0x3d8] sm:$0xff]
    %v174 = vld [vmem:[%s1 + $0x3e0] sm:$0xff]
    %v175 = vld [vmem:[%s1 + $0x3e8] sm:$0xff]
    %v176 = vld [vmem:[%s1 + $0x3f0] sm:$0xff]
    %v177 = vld [vmem:[%s1 + $0x3f8] sm:$0xff]
    %v178 = vld [vmem:[%s1 + $0x400] sm:$0xff]
    %v179 = vld [vmem:[%s1 + $0x408] sm:$0xff]
    %v180 = vld [vmem:[%s1 + $0x410] sm:$0xff]
    %v181 = vld [vmem:[%s1 + $0x418] sm:$0xff]
    %v182 = vld [vmem:[%s1 + $0x420] sm:$0xff]
    %v183 = vld [vmem:[%s1 + $0x428] sm:$0xff]
    %v184 = vld [vmem:[%s1 + $0x430] sm:$0xff]
    %v185 = vld [vmem:[%s1 + $0x438] sm:$0xff]
    %v186 = vld [vmem:[%s1 + $0x440] sm:$0xff]
    %v187 = vld [vmem:[%s1 + $0x448] sm:$0xff]
    %v188 = vld [vmem:[%s1 + $0x450] sm:$0xff]
    %v189 = vld [vmem:[%s1 + $0x458] sm:$0xff]
    %v190 = vld [vmem:[%s1 + $0x460] sm:$0xff]
    %v191 = vld [vmem:[%s1 + $0x468] sm:$0xff]
    %v192 = vld [vmem:[%s1 + $0x470] sm:$0xff]
    %v193 = vld [vmem:[%s1 + $0x478] sm:$0xff]
    %v194 = vld [vmem:[%s1 + $0x480] sm:$0xff]
    %v195 = vld [vmem:[%s1 + $0x488] sm:$0xff]
    %v196 = vld [vmem:[%s1 + $0x490] sm:$0xff]
    %v197 = vld [vmem:[%s1 + $0x498] sm:$0xff]
    %v198 = vld [vmem:[%s1 + $0x4a0] sm:$0xff]
    %v199 = vld [vmem:[%s1 + $0x4a8] sm:$0xff]
    %v200 = vld [vmem:[%s1 + $0x4b0] sm:$0xff]
    %v201 = vld [vmem:[%s1 + $0x4b8] sm:$0xff]
    %v202 = vld [vmem:[%s1 + $0x4c0] sm:$0xff]
    %v203 = vld [vmem:[%s1 + $0x4c8] sm:$0xff]
    %v204 = vld [vmem:[%s1 + $0x4d0] sm:$0xff]
    %v205 = vld [vmem:[%s1 + $0x4d8] sm:$0xff]
    %v206 = vld [vmem:[%s1 + $0x4e0] sm:$0xff]
    %v207 = vld [vmem:[%s1 + $0x4e8] sm:$0xff]
    %v208 = vld [vmem:[%s1 + $0x4f0] sm:$0xff]
    %v209 = vld [vmem:[%s1 + $0x4f8] sm:$0xff]
    %v210 = vld [vmem:[%s1 + $0x500] sm:$0xff]
    %v211 = vld [vmem:[%s1 + $0x508] sm:$0xff]
    %v212 = vld [vmem:[%s1 + $0x510] sm:$0xff]
    %v213 = vld [vmem:[%s1 + $0x518] sm:$0xff]
    %v214 = vld [vmem:[%s1 + $0x520] sm:$0xff]
    %v215 = vld [vmem:[%s1 + $0x528] sm:$0xff]
    %v216 = vld [vmem:[%s1 + $0x530] sm:$0xff]
    %v217 = vld [vmem:[%s1 + $0x538] sm:$0xff]
    %v218 = vld [vmem:[%s1 + $0x540] sm:$0xff]
    %v219 = vld [vmem:[%s1 + $0x548] sm:$0xff]
    %v220 = vld [vmem:[%s1 + $0x550] sm:$0xff]
    %v221 = vld [vmem:[%s1 + $0x558] sm:$0xff]
    %v222 = vld [vmem:[%s1 + $0x560] sm:$0xff]
    %v223 = vld [vmem:[%s1 + $0x568] sm:$0xff]
    %v224 = vld [vmem:[%s1 + $0x570] sm:$0xff]
    %v225 = vld [vmem:[%s1 + $0x578] sm:$0xff]
    %v226 = vld [vmem:[%s1 + $0x580] sm:$0xff]
    %v227 = vld [vmem:[%s1 + $0x588] sm:$0xff]
    %v228 = vld [vmem:[%s1 + $0x590] sm:$0xff]
    %v229 = vld [vmem:[%s1 + $0x598] sm:$0xff]
    %v230 = vld [vmem:[%s1 + $0x5a0] sm:$0xff]
    %v231 = vld [vmem:[%s1 + $0x5a8] sm:$0xff]
    %v232 = vld [vmem:[%s1 + $0x5b0] sm:$0xff]
    %v233 = vld [vmem:[%s1 + $0x5b8] sm:$0xff]
    %v234 = vld [vmem:[%s1 + $0x5c0] sm:$0xff]
    %v235 = vld [vmem:[%s1 + $0x5c8] sm:$0xff]
    %v236 = vld [vmem:[%s1 + $0x5d0] sm:$0xff]
    %v237 = vld [vmem:[%s1 + $0x5d8] sm:$0xff]
    %v238 = vld [vmem:[%s1 + $0x5e0] sm:$0xff]
    %v239 = vld [vmem:[%s1 + $0x5e8] sm:$0xff]
    %v240 = vld [vmem:[%s1 + $0x5f0] sm:$0xff]
    %v241 = vld [vmem:[%s1 + $0x5f8] sm:$0xff]
    %v242 = vld [vmem:[%s1 + $0x600] sm:$0xff]
    %v243 = vld [vmem:[%s1 + $0x608] sm:$0xff]
    %v244 = vld [vmem:[%s1 + $0x610] sm:$0xff]
    %v245 = vld [vmem:[%s1 + $0x618] sm:$0xff]
    %v246 = vld [vmem:[%s1 + $0x620] sm:$0xff]
    %v247 = vld [vmem:[%s1 + $0x628] sm:$0xff]
    %v248 = vld [vmem:[%s1 + $0x630] sm:$0xff]
    %v249 = vld [vmem:[%s1 + $0x638] sm:$0xff]
    %v250 = vld [vmem:[%s1 + $0x640] sm:$0xff]
    %v251 = vld [vmem:[%s1 + $0x648] sm:$0xff]
    %v252 = vld [vmem:[%s1 + $0x650] sm:$0xff]
    %v253 = vld [vmem:[%s1 + $0x658] sm:$0xff]
    %v254 = vld [vmem:[%s1 + $0x660] sm:$0xff]
    %v255 = vld [vmem:[%s1 + $0x668] sm:$0xff]
    %v256 = vld [vmem:[%s1 + $0x670] sm:$0xff]
    %v257 = vld [vmem:[%s1 + $0x678] sm:$0xff]
    %v258 = vld [vmem:[%s1 + $0x680] sm:$0xff]
    %v259 = vld [vmem:[%s1 + $0x688] sm:$0xff]
    %v260 = vld [vmem:[%s1 + $0x690] sm:$0xff]
    %v261 = vld [vmem:[%s1 + $0x698] sm:$0xff]
    %v262 = vld [vmem:[%s1 + $0x6a0] sm:$0xff]
    %v263 = vld [vmem:[%s1 + $0x6a8] sm:$0xff]
    %v264 = vld [vmem:[%s1 + $0x6b0] sm:$0xff]
    %v265 = vld [vmem:[%s1 + $0x6b8] sm:$0xff]
    %v266 = vld [vmem:[%s1 + $0x6c0] sm:$0xff]
    %v267 = vld [vmem:[%s1 + $0x6c8] sm:$0xff]
    %v268 = vld [vmem:[%s1 + $0x6d0] sm:$0xff]
    %v269 = vld [vmem:[%s1 + $0x6d8] sm:$0xff]
    %v270 = vld [vmem:[%s1 + $0x6e0] sm:$0xff]
    %v271 = vld [vmem:[%s1 + $0x6e8] sm:$0xff]
    %v272 = vld [vmem:[%s1 + $0x6f0] sm:$0xff]
    %v273 = vld [vmem:[%s1 + $0x6f8] sm:$0xff]
    %v274 = vld [vmem:[%s1 + $0x700] sm:$0xff]
    %v275 = vld [vmem:[%s1 + $0x708] sm:$0xff]
    %v276 = vld [vmem:[%s1 + $0x710] sm:$0xff]
    %v277 = vld [vmem:[%s1 + $0x718] sm:$0xff]
    %v278 = vld [vmem:[%s1 + $0x720] sm:$0xff]
    %v279 = vld [vmem:[%s1 + $0x728] sm:$0xff]
    %v280 = vld [vmem:[%s1 + $0x730] sm:$0xff]
    %v281 = vld [vmem:[%s1 + $0x738] sm:$0xff]
    %v282 = vld [vmem:[%s1 + $0x740] sm:$0xff]
    %v283 = vld [vmem:[%s1 + $0x748] sm:$0xff]
    %v284 = vld [vmem:[%s1 + $0x750] sm:$0xff]
    %v285 = vld [vmem:[%s1 + $0x758] sm:$0xff]
    %v286 = vld [vmem:[%s1 + $0x760] sm:$0xff]
    %v287 = vld [vmem:[%s1 + $0x768] sm:$0xff]
    %v288 = vld [vmem:[%s1 + $0x770] sm:$0xff]
    %v289 = vld [vmem:[%s1 + $0x778] sm:$0xff]
    %v290 = vld [vmem:[%s1 + $0x780] sm:$0xff]
    %v291 = vld [vmem:[%s1 + $0x788] sm:$0xff]
    %v292 = vld [vmem:[%s1 + $0x790] sm:$0xff]
    %v293 = vld [vmem:[%s1 + $0x798] sm:$0xff]
    %v294 = vld [vmem:[%s1 + $0x7a0] sm:$0xff]
    %v295 = vld [vmem:[%s1 + $0x7a8] sm:$0xff]
    %v296 = vld [vmem:[%s1 + $0x7b0] sm:$0xff]
    %v297 = vld [vmem:[%s1 + $0x7b8] sm:$0xff]
    %v298 = vld [vmem:[%s1 + $0x7c0] sm:$0xff]
    %v299 = vld [vmem:[%s1 + $0x7c8] sm:$0xff]
    %v300 = vld [vmem:[%s1 + $0x7d0] sm:$0xff]
    %v301 = vld [vmem:[%s1 + $0x7d8] sm:$0xff]
    %v302 = vld [vmem:[%s1 + $0x7e0] sm:$0xff]
    %v303 = vld [vmem:[%s1 + $0x7e8] sm:$0xff]
    %v304 = vld [vmem:[%s1 + $0x7f0] sm:$0xff]
    %v305 = vld [vmem:[%s1 + $0x7f8] sm:$0xff]
    %v306 = vld [vmem:[%s1 + $0x800] sm:$0xff]
    %v307 = vld [vmem:[%s1 + $0x808] sm:$0xff]
    %v308 = vld [vmem:[%s1 + $0x810] sm:$0xff]
    %v309 = vld [vmem:[%s1 + $0x818] sm:$0xff]
    %v310 = vld [vmem:[%s1 + $0x820] sm:$0xff]
    %v311 = vld [vmem:[%s1 + $0x828] sm:$0xff]
    %v312 = vld [vmem:[%s1 + $0x830] sm:$0xff]
    %v313 = vld [vmem:[%s1 + $0x838] sm:$0xff]
    %v314 = vld [vmem:[%s1 + $0x840] sm:$0xff]
    %v315 = vld [vmem:[%s1 + $0x848] sm:$0xff]
    %v316 = vld [vmem:[%s1 + $0x850] sm:$0xff]
    %v317 = vld [vmem:[%s1 + $0x858] sm:$0xff]
    %v318 = vld [vmem:[%s1 + $0x860] sm:$0xff]
    %v319 = vld [vmem:[%s1 + $0x868] sm:$0xff]
    %v320 = vld [vmem:[%s1 + $0x870] sm:$0xff]
    %v321 = vld [vmem:[%s1 + $0x878] sm:$0xff]
    %v322 = vld [vmem:[%s1 + $0x880] sm:$0xff]
    %v323 = vld [vmem:[%s1 + $0x888] sm:$0xff]
    %v324 = vld [vmem:[%s1 + $0x890] sm:$0xff]
    %v325 = vld [vmem:[%s1 + $0x898] sm:$0xff]
    %v326 = vld [vmem:[%s1 + $0x8a0] sm:$0xff]
    %v327 = vld [vmem:[%s1 + $0x8a8] sm:$0xff]
    %v328 = vld [vmem:[%s1 + $0x8b0] sm:$0xff]
    %v329 = vld [vmem:[%s1 + $0x8b8] sm:$0xff]
    %v330 = vld [vmem:[%s1 + $0x8c0] sm:$0xff]
    %v331 = vld [vmem:[%s1 + $0x8c8] sm:$0xff]
    %v332 = vld [vmem:[%s1 + $0x8d0] sm:$0xff]
    %v333 = vld [vmem:[%s1 + $0x8d8] sm:$0xff]
    %v334 = vld [vmem:[%s1 + $0x8e0] sm:$0xff]
    %v335 = vld [vmem:[%s1 + $0x8e8] sm:$0xff]
    %v336 = vld [vmem:[%s1 + $0x8f0] sm:$0xff]
    %v337 = vld [vmem:[%s1 + $0x8f8] sm:$0xff]
    %v338 = vld [vmem:[%s1 + $0x900] sm:$0xff]
    %v339 = vld [vmem:[%s1 + $0x908] sm:$0xff]
    %v340 = vld [vmem:[%s1 + $0x910] sm:$0xff]
    %v341 = vld [vmem:[%s1 + $0x918] sm:$0xff]
    %v342 = vld [vmem:[%s1 + $0x920] sm:$0xff]
    %v343 = vld [vmem:[%s1 + $0x928] sm:$0xff]
    %v344 = vld [vmem:[%s1 + $0x930] sm:$0xff]
    %v345 = vld [vmem:[%s1 + $0x938] sm:$0xff]
    %v346 = vld [vmem:[%s1 + $0x940] sm:$0xff]
    %v347 = vld [vmem:[%s1 + $0x948] sm:$0xff]
    %v348 = vld [vmem:[%s1 + $0x950] sm:$0xff]
    %v349 = vld [vmem:[%s1 + $0x958] sm:$0xff]
    %v350 = vld [vmem:[%s1 + $0x960] sm:$0xff]
    %v351 = vld [vmem:[%s1 + $0x968] sm:$0xff]
    %v352 = vld [vmem:[%s1 + $0x970] sm:$0xff]
    %v353 = vld [vmem:[%s1 + $0x978] sm:$0xff]
    %v354 = vld [vmem:[%s1 + $0x980] sm:$0xff]
    %v355 = vld [vmem:[%s1 + $0x988] sm:$0xff]
    %v356 = vld [vmem:[%s1 + $0x990] sm:$0xff]
    %v357 = vld [vmem:[%s1 + $0x998] sm:$0xff]
    %v358 = vld [vmem:[%s1 + $0x9a0] sm:$0xff]
    %v359 = vld [vmem:[%s1 + $0x9a8] sm:$0xff]
    %v360 = vld [vmem:[%s1 + $0x9b0] sm:$0xff]
    %v361 = vld [vmem:[%s1 + $0x9b8] sm:$0xff]
    %v362 = vld [vmem:[%s1 + $0x9c0] sm:$0xff]
    %v363 = vld [vmem:[%s1 + $0x9c8] sm:$0xff]
    %v364 = vld [vmem:[%s1 + $0x9d0] sm:$0xff]
    %v365 = vld [vmem:[%s1 + $0x9d8] sm:$0xff]
    %v366 = vld [vmem:[%s1 + $0x9e0] sm:$0xff]
    %v367 = vld [vmem:[%s1 + $0x9e8] sm:$0xff]
    %v368 = vld [vmem:[%s1 + $0x9f0] sm:$0xff]
    %v369 = vld [vmem:[%s1 + $0x9f8] sm:$0xff]
    %v370 = vld [vmem:[%s1 + $0xa00] sm:$0xff]
    %v371 = vld [vmem:[%s1 + $0xa08] sm:$0xff]
    %v372 = vld [vmem:[%s1 + $0xa10] sm:$0xff]
    %v373 = vld [vmem:[%s1 + $0xa18] sm:$0xff]
    %v374 = vld [vmem:[%s1 + $0xa20] sm:$0xff]
    %v375 = vld [vmem:[%s1 + $0xa28] sm:$0xff]
    %v376 = vld [vmem:[%s1 + $0xa30] sm:$0xff]
    %v377 = vld [vmem:[%s1 + $0xa38] sm:$0xff]
    %v378 = vld [vmem:[%s1 + $0xa40] sm:$0xff]
    %v379 = vld [vmem:[%s1 + $0xa48] sm:$0xff]
    %v380 = vld [vmem:[%s1 + $0xa50] sm:$0xff]
    %v381 = vld [vmem:[%s1 + $0xa58] sm:$0xff]
    %v382 = vld [vmem:[%s1 + $0xa60] sm:$0xff]
    %v383 = vld [vmem:[%s1 + $0xa68] sm:$0xff]
    %v384 = vld [vmem:[%s1 + $0xa70] sm:$0xff]
    %v385 = vld [vmem:[%s1 + $0xa78] sm:$0xff]
    %v386 = vld [vmem:[%s1 + $0xa80] sm:$0xff]
    %v387 = vld [vmem:[%s1 + $0xa88] sm:$0xff]
    %v388 = vld [vmem:[%s1 + $0xa90] sm:$0xff]
    %v389 = vld [vmem:[%s1 + $0xa98] sm:$0xff]
    %v390 = vld [vmem:[%s1 + $0xaa0] sm:$0xff]
    %v391 = vld [vmem:[%s1 + $0xaa8] sm:$0xff]
    %v392 = vld [vmem:[%s1 + $0xab0] sm:$0xff]
    %v393 = vld [vmem:[%s1 + $0xab8] sm:$0xff]
    %v394 = vld [vmem:[%s1 + $0xac0] sm:$0xff]
    %v395 = vld [vmem:[%s1 + $0xac8] sm:$0xff]
    %v396 = vld [vmem:[%s1 + $0xad0] sm:$0xff]
    %v397 = vld [vmem:[%s1 + $0xad8] sm:$0xff]
    %v398 = vld [vmem:[%s1 + $0xae0] sm:$0xff]
    %v399 = vld [vmem:[%s1 + $0xae8] sm:$0xff]
    %v400 = vld [vmem:[%s1 + $0xaf0] sm:$0xff]
    %v401 = vld [vmem:[%s1 + $0xaf8] sm:$0xff]
    %v402 = vld [vmem:[%s1 + $0xb00] sm:$0xff]
    %v403 = vld [vmem:[%s1 + $0xb08] sm:$0xff]
    %v404 = vld [vmem:[%s1 + $0xb10] sm:$0xff]
    %v405 = vld [vmem:[%s1 + $0xb18] sm:$0xff]
    %v406 = vld [vmem:[%s1 + $0xb20] sm:$0xff]
    %v407 = vld [vmem:[%s1 + $0xb28] sm:$0xff]
    %v408 = vld [vmem:[%s1 + $0xb30] sm:$0xff]
    %v409 = vld [vmem:[%s1 + $0xb38] sm:$0xff]
    %v410 = vld [vmem:[%s1 + $0xb40] sm:$0xff]
    %v411 = vld [vmem:[%s1 + $0xb48] sm:$0xff]
    %v412 = vld [vmem:[%s1 + $0xb50] sm:$0xff]
    %v413 = vld [vmem:[%s1 + $0xb58] sm:$0xff]
    %v414 = vld [vmem:[%s1 + $0xb60] sm:$0xff]
    %v415 = vld [vmem:[%s1 + $0xb68] sm:$0xff]
    %v416 = vld [vmem:[%s1 + $0xb70] sm:$0xff]
    %v417 = vld [vmem:[%s1 + $0xb78] sm:$0xff]
    %v418 = vld [vmem:[%s1 + $0xb80] sm:$0xff]
    %v419 = vld [vmem:[%s1 + $0xb88] sm:$0xff]
    %v420 = vld [vmem:[%s1 + $0xb90] sm:$0xff]
    %v421 = vld [vmem:[%s1 + $0xb98] sm:$0xff]
    %v422 = vld [vmem:[%s1 + $0xba0] sm:$0xff]
    %v423 = vld [vmem:[%s1 + $0xba8] sm:$0xff]
    %v424 = vld [vmem:[%s1 + $0xbb0] sm:$0xff]
    %v425 = vld [vmem:[%s1 + $0xbb8] sm:$0xff]
    %v426 = vld [vmem:[%s1 + $0xbc0] sm:$0xff]
    %v427 = vld [vmem:[%s1 + $0xbc8] sm:$0xff]
    %v428 = vld [vmem:[%s1 + $0xbd0] sm:$0xff]
    %v429 = vld [vmem:[%s1 + $0xbd8] sm:$0xff]
    %v430 = vld [vmem:[%s1 + $0xbe0] sm:$0xff]
    %v431 = vld [vmem:[%s1 + $0xbe8] sm:$0xff]
    %v432 = vld [vmem:[%s1 + $0xbf0] sm:$0xff]
    %v433 = vld [vmem:[%s1 + $0xbf8] sm:$0xff]
    %v434 = vld [vmem:[%s1 + $0xc00] sm:$0xff]
    %v435 = vld [vmem:[%s1 + $0xc08] sm:$0xff]
    %v436 = vld [vmem:[%s1 + $0xc10] sm:$0xff]
    %v437 = vld [vmem:[%s1 + $0xc18] sm:$0xff]
    %v438 = vld [vmem:[%s1 + $0xc20] sm:$0xff]
    %v439 = vld [vmem:[%s1 + $0xc28] sm:$0xff]
    %v440 = vld [vmem:[%s1 + $0xc30] sm:$0xff]
    %v441 = vld [vmem:[%s1 + $0xc38] sm:$0xff]
    %v442 = vld [vmem:[%s1 + $0xc40] sm:$0xff]
    %v443 = vld [vmem:[%s1 + $0xc48] sm:$0xff]
    %v444 = vld [vmem:[%s1 + $0xc50] sm:$0xff]
    %v445 = vld [vmem:[%s1 + $0xc58] sm:$0xff]
    %v446 = vld [vmem:[%s1 + $0xc60] sm:$0xff]
    %v447 = vld [vmem:[%s1 + $0xc68] sm:$0xff]
    %v448 = vld [vmem:[%s1 + $0xc70] sm:$0xff]
    %v449 = vld [vmem:[%s1 + $0xc78] sm:$0xff]
    %v450 = vld [vmem:[%s1 + $0xc80] sm:$0xff]
    %v451 = vld [vmem:[%s1 + $0xc88] sm:$0xff]
    %v452 = vld [vmem:[%s1 + $0xc90] sm:$0xff]
    %v453 = vld [vmem:[%s1 + $0xc98] sm:$0xff]
    %v454 = vld [vmem:[%s1 + $0xca0] sm:$0xff]
    %v455 = vld [vmem:[%s1 + $0xca8] sm:$0xff]
    %v456 = vld [vmem:[%s1 + $0xcb0] sm:$0xff]
    %v457 = vld [vmem:[%s1 + $0xcb8] sm:$0xff]
    %v458 = vld [vmem:[%s1 + $0xcc0] sm:$0xff]
    %v459 = vld [vmem:[%s1 + $0xcc8] sm:$0xff]
    %v460 = vld [vmem:[%s1 + $0xcd0] sm:$0xff]
    %v461 = vld [vmem:[%s1 + $0xcd8] sm:$0xff]
    %v462 = vld [vmem:[%s1 + $0xce0] sm:$0xff]
    %v463 = vld [vmem:[%s1 + $0xce8] sm:$0xff]
    %v464 = vld [vmem:[%s1 + $0xcf0] sm:$0xff]
    %v465 = vld [vmem:[%s1 + $0xcf8] sm:$0xff]
    %v466 = vld [vmem:[%s1 + $0xd00] sm:$0xff]
    %v467 = vld [vmem:[%s1 + $0xd08] sm:$0xff]
    %v468 = vld [vmem:[%s1 + $0xd10] sm:$0xff]
    %v469 = vld [vmem:[%s1 + $0xd18] sm:$0xff]
    %v470 = vld [vmem:[%s1 + $0xd20] sm:$0xff]
    %v471 = vld [vmem:[%s1 + $0xd28] sm:$0xff]
    %v472 = vld [vmem:[%s1 + $0xd30] sm:$0xff]
    %v473 = vld [vmem:[%s1 + $0xd38] sm:$0xff]
    %v474 = vld [vmem:[%s1 + $0xd40] sm:$0xff]
    %v475 = vld [vmem:[%s1 + $0xd48] sm:$0xff]
    %v476 = vld [vmem:[%s1 + $0xd50] sm:$0xff]
    %v477 = vld [vmem:[%s1 + $0xd58] sm:$0xff]
    %v478 = vld [vmem:[%s1 + $0xd60] sm:$0xff]
    %v479 = vld [vmem:[%s1 + $0xd68] sm:$0xff]
    %v480 = vld [vmem:[%s1 + $0xd70] sm:$0xff]
    %v481 = vld [vmem:[%s1 + $0xd78] sm:$0xff]
    %v482 = vld [vmem:[%s1 + $0xd80] sm:$0xff]
    %v483 = vld [vmem:[%s1 + $0xd88] sm:$0xff]
    %v484 = vld [vmem:[%s1 + $0xd90] sm:$0xff]
    %v485 = vld [vmem:[%s1 + $0xd98] sm:$0xff]
    %v486 = vld [vmem:[%s1 + $0xda0] sm:$0xff]
    %v487 = vld [vmem:[%s1 + $0xda8] sm:$0xff]
    %v488 = vld [vmem:[%s1 + $0xdb0] sm:$0xff]
    %v489 = vld [vmem:[%s1 + $0xdb8] sm:$0xff]
    %v490 = vld [vmem:[%s1 + $0xdc0] sm:$0xff]
    %v491 = vld [vmem:[%s1 + $0xdc8] sm:$0xff]
    %v492 = vld [vmem:[%s1 + $0xdd0] sm:$0xff]
    %v493 = vld [vmem:[%s1 + $0xdd8] sm:$0xff]
    %v494 = vld [vmem:[%s1 + $0xde0] sm:$0xff]
    %v495 = vld [vmem:[%s1 + $0xde8] sm:$0xff]
    %v496 = vld [vmem:[%s1 + $0xdf0] sm:$0xff]
    %v497 = vld [vmem:[%s1 + $0xdf8] sm:$0xff]
    %v498 = vld [vmem:[%s1 + $0xe00] sm:$0xff]
    %v499 = vld [vmem:[%s1 + $0xe08] sm:$0xff]
    %v500 = vld [vmem:[%s1 + $0xe10] sm:$0xff]
    %v501 = vld [vmem:[%s1 + $0xe18] sm:$0xff]
    %v502 = vld [vmem:[%s1 + $0xe20] sm:$0xff]
    %v503 = vld [vmem:[%s1 + $0xe28] sm:$0xff]
    %v504 = vld [vmem:[%s1 + $0xe30] sm:$0xff]
    %v505 = vld [vmem:[%s1 + $0xe38] sm:$0xff]
    %v506 = vld [vmem:[%s1 + $0xe40] sm:$0xff]
    %v507 = vld [vmem:[%s1 + $0xe48] sm:$0xff]
    %v508 = vld [vmem:[%s1 + $0xe50] sm:$0xff]
    %v509 = vld [vmem:[%s1 + $0xe58] sm:$0xff]
    %v510 = vld [vmem:[%s1 + $0xe60] sm:$0xff]
    %v511 = vld [vmem:[%s1 + $0xe68] sm:$0xff]
    %v512 = vld [vmem:[%s1 + $0xe70] sm:$0xff]
    %v513 = vld [vmem:[%s1 + $0xe78] sm:$0xff]
    %v514 = vld [vmem:[%s1 + $0xe80] sm:$0xff]
    %v515 = vld [vmem:[%s1 + $0xe88] sm:$0xff]
    %v516 = vld [vmem:[%s1 + $0xe90] sm:$0xff]
    %v517 = vld [vmem:[%s1 + $0xe98] sm:$0xff]
    %v518 = vld [vmem:[%s1 + $0xea0] sm:$0xff]
    %v519 = vld [vmem:[%s1 + $0xea8] sm:$0xff]
    %v520 = vld [vmem:[%s1 + $0xeb0] sm:$0xff]
    %v521 = vld [vmem:[%s1 + $0xeb8] sm:$0xff]
    %v522 = vld [vmem:[%s1 + $0xec0] sm:$0xff]
    %v523 = vld [vmem:[%s1 + $0xec8] sm:$0xff]
    %v524 = vld [vmem:[%s1 + $0xed0] sm:$0xff]
    %v525 = vld [vmem:[%s1 + $0xed8] sm:$0xff]
    %v526 = vld [vmem:[%s1 + $0xee0] sm:$0xff]
    %v527 = vld [vmem:[%s1 + $0xee8] sm:$0xff]
    %v528 = vld [vmem:[%s1 + $0xef0] sm:$0xff]
    %v529 = vld [vmem:[%s1 + $0xef8] sm:$0xff]
    %v530 = vld [vmem:[%s1 + $0xf00] sm:$0xff]
    %v531 = vld [vmem:[%s1 + $0xf08] sm:$0xff]
    %v532 = vld [vmem:[%s1 + $0xf10] sm:$0xff]
    %v533 = vld [vmem:[%s1 + $0xf18] sm:$0xff]
    %v534 = vld [vmem:[%s1 + $0xf20] sm:$0xff]
    %v535 = vld [vmem:[%s1 + $0xf28] sm:$0xff]
    %v536 = vld [vmem:[%s1 + $0xf30] sm:$0xff]
    %v537 = vld [vmem:[%s1 + $0xf38] sm:$0xff]
    %v538 = vld [vmem:[%s1 + $0xf40] sm:$0xff]
    %v539 = vld [vmem:[%s1 + $0xf48] sm:$0xff]
    %v540 = vld [vmem:[%s1 + $0xf50] sm:$0xff]
    %v541 = vld [vmem:[%s1 + $0xf58] sm:$0xff]
    %v542 = vld [vmem:[%s1 + $0xf60] sm:$0xff]
    %v543 = vld [vmem:[%s1 + $0xf68] sm:$0xff]
    %v544 = vld [vmem:[%s1 + $0xf70] sm:$0xff]
    %v545 = vld [vmem:[%s1 + $0xf78] sm:$0xff]
    %v546 = vld [vmem:[%s1 + $0xf80] sm:$0xff]
    %v547 = vld [vmem:[%s1 + $0xf88] sm:$0xff]
    %v548 = vld [vmem:[%s1 + $0xf90] sm:$0xff]
    %v549 = vld [vmem:[%s1 + $0xf98] sm:$0xff]
    %v550 = vld [vmem:[%s1 + $0xfa0] sm:$0xff]
    %v551 = vld [vmem:[%s1 + $0xfa8] sm:$0xff]
    %v552 = vld [vmem:[%s1 + $0xfb0] sm:$0xff]
    %v553 = vld [vmem:[%s1 + $0xfb8] sm:$0xff]
    %v554 = vld [vmem:[%s1 + $0xfc0] sm:$0xff]
    %v555 = vld [vmem:[%s1 + $0xfc8] sm:$0xff]
    %v556 = vld [vmem:[%s1 + $0xfd0] sm:$0xff]
    %v557 = vld [vmem:[%s1 + $0xfd8] sm:$0xff]
    %v558 = vld [vmem:[%s1 + $0xfe0] sm:$0xff]
    %v559 = vld [vmem:[%s1 + $0xfe8] sm:$0xff]
    %v560 = vld [vmem:[%s1 + $0xff0] sm:$0xff]
    %v561 = vld [vmem:[%s1 + $0xff8] sm:$0xff]
    %v562 = vld [vmem:[%s1 + $0x1000] sm:$0xff]
    %v563 = vld [vmem:[%s1 + $0x1008] sm:$0xff]
    %v564 = vld [vmem:[%s1 + $0x1010] sm:$0xff]
    %v565 = vld [vmem:[%s1 + $0x1018] sm:$0xff]
    %v566 = vld [vmem:[%s1 + $0x1020] sm:$0xff]
    %v567 = vld [vmem:[%s1 + $0x1028] sm:$0xff]
    %v568 = vld [vmem:[%s1 + $0x1030] sm:$0xff]
    %v569 = vld [vmem:[%s1 + $0x1038] sm:$0xff]
    %v570 = vld [vmem:[%s1 + $0x1040] sm:$0xff]
    %v571 = vld [vmem:[%s1 + $0x1048] sm:$0xff]
    %v572 = vld [vmem:[%s1 + $0x1050] sm:$0xff]
    %v573 = vld [vmem:[%s1 + $0x1058] sm:$0xff]
    %v574 = vld [vmem:[%s1 + $0x1060] sm:$0xff]
    %v575 = vld [vmem:[%s1 + $0x1068] sm:$0xff]
    %v576 = vld [vmem:[%s1 + $0x1070] sm:$0xff]
    %v577 = vld [vmem:[%s1 + $0x1078] sm:$0xff]
    %v578 = vld [vmem:[%s1 + $0x1080] sm:$0xff]
    %v579 = vld [vmem:[%s1 + $0x1088] sm:$0xff]
    %v580 = vld [vmem:[%s1 + $0x1090] sm:$0xff]
    %v581 = vld [vmem:[%s1 + $0x1098] sm:$0xff]
    %v582 = vld [vmem:[%s1 + $0x10a0] sm:$0xff]
    %v583 = vld [vmem:[%s1 + $0x10a8] sm:$0xff]
    %v584 = vld [vmem:[%s1 + $0x10b0] sm:$0xff]
    %v585 = vld [vmem:[%s1 + $0x10b8] sm:$0xff]
    %v586 = vld [vmem:[%s1 + $0x10c0] sm:$0xff]
    %v587 = vld [vmem:[%s1 + $0x10c8] sm:$0xff]
    %v588 = vld [vmem:[%s1 + $0x10d0] sm:$0xff]
    %v589 = vld [vmem:[%s1 + $0x10d8] sm:$0xff]
    %v590 = vld [vmem:[%s1 + $0x10e0] sm:$0xff]
    %v591 = vld [vmem:[%s1 + $0x10e8] sm:$0xff]
    %v592 = vld [vmem:[%s1 + $0x10f0] sm:$0xff]
    %v593 = vld [vmem:[%s1 + $0x10f8] sm:$0xff]
    %v594 = vld [vmem:[%s1 + $0x1100] sm:$0xff]
    %v595 = vld [vmem:[%s1 + $0x1108] sm:$0xff]
    %v596 = vld [vmem:[%s1 + $0x1110] sm:$0xff]
    %v597 = vld [vmem:[%s1 + $0x1118] sm:$0xff]
    %v598 = vld [vmem:[%s1 + $0x1120] sm:$0xff]
    %v599 = vld [vmem:[%s1 + $0x1128] sm:$0xff]
    %v600 = vld [vmem:[%s1 + $0x1130] sm:$0xff]
    %v601 = vld [vmem:[%s1 + $0x1138] sm:$0xff]
    %v602 = vld [vmem:[%s1 + $0x1140] sm:$0xff]
    %v603 = vld [vmem:[%s1 + $0x1148] sm:$0xff]
    %v604 = vld [vmem:[%s1 + $0x1150] sm:$0xff]
    %v605 = vld [vmem:[%s1 + $0x1158] sm:$0xff]
    %v606 = vld [vmem:[%s1 + $0x1160] sm:$0xff]
    %v607 = vld [vmem:[%s1 + $0x1168] sm:$0xff]
    %v608 = vld [vmem:[%s1 + $0x1170] sm:$0xff]
    %v609 = vld [vmem:[%s1 + $0x1178] sm:$0xff]
    %v610 = vld [vmem:[%s1 + $0x1180] sm:$0xff]
    %v611 = vld [vmem:[%s1 + $0x1188] sm:$0xff]
    %v612 = vld [vmem:[%s1 + $0x1190] sm:$0xff]
    %v613 = vld [vmem:[%s1 + $0x1198] sm:$0xff]
    %v614 = vld [vmem:[%s1 + $0x11a0] sm:$0xff]
    %v615 = vld [vmem:[%s1 + $0x11a8] sm:$0xff]
    %v616 = vld [vmem:[%s1 + $0x11b0] sm:$0xff]
    %v617 = vld [vmem:[%s1 + $0x11b8] sm:$0xff]
    %v618 = vld [vmem:[%s1 + $0x11c0] sm:$0xff]
    %v619 = vld [vmem:[%s1 + $0x11c8] sm:$0xff]
    %v620 = vld [vmem:[%s1 + $0x11d0] sm:$0xff]
    %v621 = vld [vmem:[%s1 + $0x11d8] sm:$0xff]
    %v622 = vld [vmem:[%s1 + $0x11e0] sm:$0xff]
    %v623 = vld [vmem:[%s1 + $0x11e8] sm:$0xff]
    %v624 = vld [vmem:[%s1 + $0x11f0] sm:$0xff]
    %v625 = vld [vmem:[%s1 + $0x11f8] sm:$0xff]
    %v626 = vld [vmem:[%s1 + $0x1200] sm:$0xff]
    %v627 = vld [vmem:[%s1 + $0x1208] sm:$0xff]
    %v628 = vld [vmem:[%s1 + $0x1210] sm:$0xff]
    %v629 = vld [vmem:[%s1 + $0x1218] sm:$0xff]
    %v630 = vld [vmem:[%s1 + $0x1220] sm:$0xff]
    %v631 = vld [vmem:[%s1 + $0x1228] sm:$0xff]
    %v632 = vld [vmem:[%s1 + $0x1230] sm:$0xff]
    %v633 = vld [vmem:[%s1 + $0x1238] sm:$0xff]
    %v634 = vld [vmem:[%s1 + $0x1240] sm:$0xff]
    %v635 = vld [vmem:[%s1 + $0x1248] sm:$0xff]
    %v636 = vld [vmem:[%s1 + $0x1250] sm:$0xff]
    %v637 = vld [vmem:[%s1 + $0x1258] sm:$0xff]
    %v638 = vld [vmem:[%s1 + $0x1260] sm:$0xff]
    %v639 = vld [vmem:[%s1 + $0x1268] sm:$0xff]
    %v640 = vld [vmem:[%s1 + $0x1270] sm:$0xff]
    %v641 = vld [vmem:[%s1 + $0x1278] sm:$0xff]
    %v642 = vld [vmem:[%s1 + $0x1280] sm:$0xff]
    %v643 = vld [vmem:[%s1 + $0x1288] sm:$0xff]
    %v644 = vld [vmem:[%s1 + $0x1290] sm:$0xff]
    %v645 = vld [vmem:[%s1 + $0x1298] sm:$0xff]
    %v646 = vld [vmem:[%s1 + $0x12a0] sm:$0xff]
    %v647 = vld [vmem:[%s1 + $0x12a8] sm:$0xff]
    %v648 = vld [vmem:[%s1 + $0x12b0] sm:$0xff]
    %v649 = vld [vmem:[%s1 + $0x12b8] sm:$0xff]
    %v650 = vld [vmem:[%s1 + $0x12c0] sm:$0xff]
    %v651 = vld [vmem:[%s1 + $0x12c8] sm:$0xff]
    %v652 = vld [vmem:[%s1 + $0x12d0] sm:$0xff]
    %v653 = vld [vmem:[%s1 + $0x12d8] sm:$0xff]
    %v654 = vld [vmem:[%s1 + $0x12e0] sm:$0xff]
    %v655 = vld [vmem:[%s1 + $0x12e8] sm:$0xff]
    %v656 = vld [vmem:[%s1 + $0x12f0] sm:$0xff]
    %v657 = vld [vmem:[%s1 + $0x12f8] sm:$0xff]
    %v658 = vld [vmem:[%s1 + $0x1300] sm:$0xff]
    %v659 = vld [vmem:[%s1 + $0x1308] sm:$0xff]
    %v660 = vld [vmem:[%s1 + $0x1310] sm:$0xff]
    %v661 = vld [vmem:[%s1 + $0x1318] sm:$0xff]
    %v662 = vld [vmem:[%s1 + $0x1320] sm:$0xff]
    %v663 = vld [vmem:[%s1 + $0x1328] sm:$0xff]
    %v664 = vld [vmem:[%s1 + $0x1330] sm:$0xff]
    %v665 = vld [vmem:[%s1 + $0x1338] sm:$0xff]
    %v666 = vld [vmem:[%s1 + $0x1340] sm:$0xff]
    %v667 = vld [vmem:[%s1 + $0x1348] sm:$0xff]
    %v668 = vld [vmem:[%s1 + $0x1350] sm:$0xff]
    %v669 = vld [vmem:[%s1 + $0x1358] sm:$0xff]
    %v670 = vld [vmem:[%s1 + $0x1360] sm:$0xff]
    %v671 = vld [vmem:[%s1 + $0x1368] sm:$0xff]
    %v672 = vld [vmem:[%s1 + $0x1370] sm:$0xff]
    %v673 = vld [vmem:[%s1 + $0x1378] sm:$0xff]
    %v674 = vld [vmem:[%s1 + $0x1380] sm:$0xff]
    %v675 = vld [vmem:[%s1 + $0x1388] sm:$0xff]
    %v676 = vld [vmem:[%s1 + $0x1390] sm:$0xff]
    %v677 = vld [vmem:[%s1 + $0x1398] sm:$0xff]
    %v678 = vld [vmem:[%s1 + $0x13a0] sm:$0xff]
    %v679 = vld [vmem:[%s1 + $0x13a8] sm:$0xff]
    %v680 = vld [vmem:[%s1 + $0x13b0] sm:$0xff]
    %v681 = vld [vmem:[%s1 + $0x13b8] sm:$0xff]
    %v682 = vld [vmem:[%s1 + $0x13c0] sm:$0xff]
    %v683 = vld [vmem:[%s1 + $0x13c8] sm:$0xff]
    %v684 = vld [vmem:[%s1 + $0x13d0] sm:$0xff]
    %v685 = vld [vmem:[%s1 + $0x13d8] sm:$0xff]
    %v686 = vld [vmem:[%s1 + $0x13e0] sm:$0xff]
    %v687 = vld [vmem:[%s1 + $0x13e8] sm:$0xff]
    %v688 = vld [vmem:[%s1 + $0x13f0] sm:$0xff]
    %v689 = vld [vmem:[%s1 + $0x13f8] sm:$0xff]
    %v690 = vld [vmem:[%s1 + $0x1400] sm:$0xff]
    %v691 = vld [vmem:[%s1 + $0x1408] sm:$0xff]
    %v692 = vld [vmem:[%s1 + $0x1410] sm:$0xff]
    %v693 = vld [vmem:[%s1 + $0x1418] sm:$0xff]
    %v694 = vld [vmem:[%s1 + $0x1420] sm:$0xff]
    %v695 = vld [vmem:[%s1 + $0x1428] sm:$0xff]
    %v696 = vld [vmem:[%s1 + $0x1430] sm:$0xff]
    %v697 = vld [vmem:[%s1 + $0x1438] sm:$0xff]
    %v698 = vld [vmem:[%s1 + $0x1440] sm:$0xff]
    %v699 = vld [vmem:[%s1 + $0x1448] sm:$0xff]
    %v700 = vld [vmem:[%s1 + $0x1450] sm:$0xff]
    %v701 = vld [vmem:[%s1 + $0x1458] sm:$0xff]
    %v702 = vld [vmem:[%s1 + $0x1460] sm:$0xff]
    %v703 = vld [vmem:[%s1 + $0x1468] sm:$0xff]
    %v704 = vld [vmem:[%s1 + $0x1470] sm:$0xff]
    %v705 = vld [vmem:[%s1 + $0x1478] sm:$0xff]
    %v706 = vld [vmem:[%s1 + $0x1480] sm:$0xff]
    %v707 = vld [vmem:[%s1 + $0x1488] sm:$0xff]
    %v708 = vld [vmem:[%s1 + $0x1490] sm:$0xff]
    %v709 = vld [vmem:[%s1 + $0x1498] sm:$0xff]
    %v710 = vld [vmem:[%s1 + $0x14a0] sm:$0xff]
    %v711 = vld [vmem:[%s1 + $0x14a8] sm:$0xff]
    %v712 = vld [vmem:[%s1 + $0x14b0] sm:$0xff]
    %v713 = vld [vmem:[%s1 + $0x14b8] sm:$0xff]
    %v714 = vld [vmem:[%s1 + $0x14c0] sm:$0xff]
    %v715 = vld [vmem:[%s1 + $0x14c8] sm:$0xff]
    %v716 = vld [vmem:[%s1 + $0x14d0] sm:$0xff]
    %v717 = vld [vmem:[%s1 + $0x14d8] sm:$0xff]
    %v718 = vld [vmem:[%s1 + $0x14e0] sm:$0xff]
    %v719 = vld [vmem:[%s1 + $0x14e8] sm:$0xff]
    %v720 = vld [vmem:[%s1 + $0x14f0] sm:$0xff]
    %v721 = vld [vmem:[%s1 + $0x14f8] sm:$0xff]
    %v722 = vld [vmem:[%s1 + $0x1500] sm:$0xff]
    %v723 = vld [vmem:[%s1 + $0x1508] sm:$0xff]
    %v724 = vld [vmem:[%s1 + $0x1510] sm:$0xff]
    %v725 = vld [vmem:[%s1 + $0x1518] sm:$0xff]
    %v726 = vld [vmem:[%s1 + $0x1520] sm:$0xff]
    %v727 = vld [vmem:[%s1 + $0x1528] sm:$0xff]
    %v728 = vld [vmem:[%s1 + $0x1530] sm:$0xff]
    %v729 = vld [vmem:[%s1 + $0x1538] sm:$0xff]
    %v730 = vld [vmem:[%s1 + $0x1540] sm:$0xff]
    %v731 = vld [vmem:[%s1 + $0x1548] sm:$0xff]
    %v732 = vld [vmem:[%s1 + $0x1550] sm:$0xff]
    %v733 = vld [vmem:[%s1 + $0x1558] sm:$0xff]
    %v734 = vld [vmem:[%s1 + $0x1560] sm:$0xff]
    %v735 = vld [vmem:[%s1 + $0x1568] sm:$0xff]
    %v736 = vld [vmem:[%s1 + $0x1570] sm:$0xff]
    %v737 = vld [vmem:[%s1 + $0x1578] sm:$0xff]
    %v738 = vld [vmem:[%s1 + $0x1580] sm:$0xff]
    %v739 = vld [vmem:[%s1 + $0x1588] sm:$0xff]
    %v740 = vld [vmem:[%s1 + $0x1590] sm:$0xff]
    %v741 = vld [vmem:[%s1 + $0x1598] sm:$0xff]
    %v742 = vld [vmem:[%s1 + $0x15a0] sm:$0xff]
    %v743 = vld [vmem:[%s1 + $0x15a8] sm:$0xff]
    %v744 = vld [vmem:[%s1 + $0x15b0] sm:$0xff]
    %v745 = vld [vmem:[%s1 + $0x15b8] sm:$0xff]
    %v746 = vld [vmem:[%s1 + $0x15c0] sm:$0xff]
    %v747 = vld [vmem:[%s1 + $0x15c8] sm:$0xff]
    %v748 = vld [vmem:[%s1 + $0x15d0] sm:$0xff]
    %v749 = vld [vmem:[%s1 + $0x15d8] sm:$0xff]
    %v750 = vld [vmem:[%s1 + $0x15e0] sm:$0xff]
    %v751 = vld [vmem:[%s1 + $0x15e8] sm:$0xff]
    %v752 = vld [vmem:[%s1 + $0x15f0] sm:$0xff]
    %v753 = vld [vmem:[%s1 + $0x15f8] sm:$0xff]
    %v754 = vld [vmem:[%s1 + $0x1600] sm:$0xff]
    %v755 = vld [vmem:[%s1 + $0x1608] sm:$0xff]
    %v756 = vld [vmem:[%s1 + $0x1610] sm:$0xff]
    %v757 = vld [vmem:[%s1 + $0x1618] sm:$0xff]
    %v758 = vld [vmem:[%s1 + $0x1620] sm:$0xff]
    %v759 = vld [vmem:[%s1 + $0x1628] sm:$0xff]
    %v760 = vld [vmem:[%s1 + $0x1630] sm:$0xff]
    %v761 = vld [vmem:[%s1 + $0x1638] sm:$0xff]
    %v762 = vld [vmem:[%s1 + $0x1640] sm:$0xff]
    %v763 = vld [vmem:[%s1 + $0x1648] sm:$0xff]
    %v764 = vld [vmem:[%s1 + $0x1650] sm:$0xff]
    %v765 = vld [vmem:[%s1 + $0x1658] sm:$0xff]
    %v766 = vld [vmem:[%s1 + $0x1660] sm:$0xff]
    %v767 = vld [vmem:[%s1 + $0x1668] sm:$0xff]
    %v768 = vld [vmem:[%s1 + $0x1670] sm:$0xff]
    %v769 = vld [vmem:[%s1 + $0x1678] sm:$0xff]
    %v770 = vld [vmem:[%s1 + $0x1680] sm:$0xff]
    %v771 = vld [vmem:[%s1 + $0x1688] sm:$0xff]
    %v772 = vld [vmem:[%s1 + $0x1690] sm:$0xff]
    %v773 = vld [vmem:[%s1 + $0x1698] sm:$0xff]
    %v774 = vld [vmem:[%s1 + $0x16a0] sm:$0xff]
    %v775 = vld [vmem:[%s1 + $0x16a8] sm:$0xff]
    %v776 = vld [vmem:[%s1 + $0x16b0] sm:$0xff]
    %v777 = vld [vmem:[%s1 + $0x16b8] sm:$0xff]
    %v778 = vld [vmem:[%s1 + $0x16c0] sm:$0xff]
    %v779 = vld [vmem:[%s1 + $0x16c8] sm:$0xff]
    %v780 = vld [vmem:[%s1 + $0x16d0] sm:$0xff]
    %v781 = vld [vmem:[%s1 + $0x16d8] sm:$0xff]
    %v782 = vld [vmem:[%s1 + $0x16e0] sm:$0xff]
    %v783 = vld [vmem:[%s1 + $0x16e8] sm:$0xff]
    %v784 = vld [vmem:[%s1 + $0x16f0] sm:$0xff]
    %v785 = vld [vmem:[%s1 + $0x16f8] sm:$0xff]
    %v786 = vld [vmem:[%s1 + $0x1700] sm:$0xff]
    %v787 = vld [vmem:[%s1 + $0x1708] sm:$0xff]
    %v788 = vld [vmem:[%s1 + $0x1710] sm:$0xff]
    %v789 = vld [vmem:[%s1 + $0x1718] sm:$0xff]
    %v790 = vld [vmem:[%s1 + $0x1720] sm:$0xff]
    %v791 = vld [vmem:[%s1 + $0x1728] sm:$0xff]
    %v792 = vld [vmem:[%s1 + $0x1730] sm:$0xff]
    %v793 = vld [vmem:[%s1 + $0x1738] sm:$0xff]
    %v794 = vld [vmem:[%s1 + $0x1740] sm:$0xff]
    %v795 = vld [vmem:[%s1 + $0x1748] sm:$0xff]
    %v796 = vld [vmem:[%s1 + $0x1750] sm:$0xff]
    %v797 = vld [vmem:[%s1 + $0x1758] sm:$0xff]
    %v798 = vld [vmem:[%s1 + $0x1760] sm:$0xff]
    %v799 = vld [vmem:[%s1 + $0x1768] sm:$0xff]
    %v800 = vld [vmem:[%s1 + $0x1770] sm:$0xff]
    %v801 = vld [vmem:[%s1 + $0x1778] sm:$0xff]
    %v802 = vld [vmem:[%s1 + $0x1780] sm:$0xff]
    %v803 = vld [vmem:[%s1 + $0x1788] sm:$0xff]
    %v804 = vld [vmem:[%s1 + $0x1790] sm:$0xff]
    %v805 = vld [vmem:[%s1 + $0x1798] sm:$0xff]
    %v806 = vld [vmem:[%s1 + $0x17a0] sm:$0xff]
    %v807 = vld [vmem:[%s1 + $0x17a8] sm:$0xff]
    %v808 = vld [vmem:[%s1 + $0x17b0] sm:$0xff]
    %v809 = vld [vmem:[%s1 + $0x17b8] sm:$0xff]
    %v810 = vld [vmem:[%s1 + $0x17c0] sm:$0xff]
    %v811 = vld [vmem:[%s1 + $0x17c8] sm:$0xff]
    %v812 = vld [vmem:[%s1 + $0x17d0] sm:$0xff]
    %v813 = vld [vmem:[%s1 + $0x17d8] sm:$0xff]
    %v814 = vld [vmem:[%s1 + $0x17e0] sm:$0xff]
    %v815 = vld [vmem:[%s1 + $0x17e8] sm:$0xff]
    %v816 = vld [vmem:[%s1 + $0x17f0] sm:$0xff]
    %v817 = vld [vmem:[%s1 + $0x17f8] sm:$0xff]
    %v818 = vld [vmem:[%s1 + $0x1800] sm:$0xff]
    %v819 = vld [vmem:[%s1 + $0x1808] sm:$0xff]
    %v820 = vld [vmem:[%s1 + $0x1810] sm:$0xff]
    %v821 = vld [vmem:[%s1 + $0x1818] sm:$0xff]
    %v822 = vld [vmem:[%s1 + $0x1820] sm:$0xff]
    %v823 = vld [vmem:[%s1 + $0x1828] sm:$0xff]
    %v824 = vld [vmem:[%s1 + $0x1830] sm:$0xff]
    %v825 = vld [vmem:[%s1 + $0x1838] sm:$0xff]
    %v826 = vld [vmem:[%s1 + $0x1840] sm:$0xff]
    %v827 = vld [vmem:[%s1 + $0x1848] sm:$0xff]
    %v828 = vld [vmem:[%s1 + $0x1850] sm:$0xff]
    %v829 = vld [vmem:[%s1 + $0x1858] sm:$0xff]
    %v830 = vld [vmem:[%s1 + $0x1860] sm:$0xff]
    %v831 = vld [vmem:[%s1 + $0x1868] sm:$0xff]
    %v832 = vld [vmem:[%s1 + $0x1870] sm:$0xff]
    %v833 = vld [vmem:[%s1 + $0x1878] sm:$0xff]
    %v834 = vld [vmem:[%s1 + $0x1880] sm:$0xff]
    %v835 = vld [vmem:[%s1 + $0x1888] sm:$0xff]
    %v836 = vld [vmem:[%s1 + $0x1890] sm:$0xff]
    %v837 = vld [vmem:[%s1 + $0x1898] sm:$0xff]
    %v838 = vld [vmem:[%s1 + $0x18a0] sm:$0xff]
    %v839 = vld [vmem:[%s1 + $0x18a8] sm:$0xff]
    %v840 = vld [vmem:[%s1 + $0x18b0] sm:$0xff]
    %v841 = vld [vmem:[%s1 + $0x18b8] sm:$0xff]
    %v842 = vld [vmem:[%s1 + $0x18c0] sm:$0xff]
    %v843 = vld [vmem:[%s1 + $0x18c8] sm:$0xff]
    %v844 = vld [vmem:[%s1 + $0x18d0] sm:$0xff]
    %v845 = vld [vmem:[%s1 + $0x18d8] sm:$0xff]
    %v846 = vld [vmem:[%s1 + $0x18e0] sm:$0xff]
    %v847 = vld [vmem:[%s1 + $0x18e8] sm:$0xff]
    %v848 = vld [vmem:[%s1 + $0x18f0] sm:$0xff]
    %v849 = vld [vmem:[%s1 + $0x18f8] sm:$0xff]
    %v850 = vld [vmem:[%s2] sm:$0x3]
    %v852 = vlaneseq
    %v853 = vshrl.u32 %v852, 7
    %v854 = vsub.s32 0, %v853
    %v855 = vrot.slane %v850, %v854
    %v856 = vlaneseq
    %v857 = vshrl.u32 %v856, 7
    %v858 = vsub.s32 1, %v857
    %v859 = vrot.slane %v850, %v858
    %v890 = vcombine.low %v22, %v29
    %v891 = vcombine.high %v22, %v29
    %v892 = vcombine.low %v36, %v43
    %v893 = vcombine.high %v36, %v43
    %v895 = vunpack.c.l.s4 1966171168
    %v896 = vunpack.c.0.s8 %v895
    %v897 = vlaneseq
    %v898 = vshrl.u32 %v897, 7
    %v899 = vsub.s32 %v896, %v898
    %v900 = vrot.slane %v890, %v899
    %v902 = vunpack.c.l.s4 1966171168
    %v903 = vunpack.c.0.s8 %v902
    %v904 = vlaneseq
    %v905 = vshrl.u32 %v904, 7
    %v906 = vsub.s32 %v903, %v905
    %v907 = vrot.slane %v891, %v906
    %v909 = vunpack.c.l.s4 1966171168
    %v910 = vunpack.c.0.s8 %v909
    %v911 = vlaneseq
    %v912 = vshrl.u32 %v911, 7
    %v913 = vsub.s32 %v910, %v912
    %v914 = vrot.slane %v892, %v913
    %v916 = vunpack.c.l.s4 1966171168
    %v917 = vunpack.c.0.s8 %v916
    %v918 = vlaneseq
    %v919 = vshrl.u32 %v918, 7
    %v920 = vsub.s32 %v917, %v919
    %v921 = vrot.slane %v893, %v920
    %v922 = vcombine.low %v900, %v914
    %v923 = vcombine.high %v900, %v914
    %v924 = vcombine.low %v907, %v921
    %v925 = vcombine.high %v907, %v921
    %v927 = vunpack.c.l.s4 1966171168
    %v928 = vunpack.c.0.s8 %v927
    %v929 = vlaneseq
    %v930 = vshrl.u32 %v929, 7
    %v931 = vsub.s32 %v928, %v930
    %v932 = vrot.slane %v922, %v931
    %v934 = vunpack.c.l.s4 1966171168
    %v935 = vunpack.c.0.s8 %v934
    %v936 = vlaneseq
    %v937 = vshrl.u32 %v936, 7
    %v938 = vsub.s32 %v935, %v937
    %v939 = vrot.slane %v924, %v938
    %v941 = vunpack.c.l.s4 1966171168
    %v942 = vunpack.c.0.s8 %v941
    %v943 = vlaneseq
    %v944 = vshrl.u32 %v943, 7
    %v945 = vsub.s32 %v942, %v944
    %v946 = vrot.slane %v923, %v945
    %v948 = vunpack.c.l.s4 1966171168
    %v949 = vunpack.c.0.s8 %v948
    %v950 = vlaneseq
    %v951 = vshrl.u32 %v950, 7
    %v952 = vsub.s32 %v949, %v951
    %v953 = vrot.slane %v925, %v952
    %v954 = vcombine.high %v932, %v932
    %v955 = vcombine.high %v939, %v939
    %v956 = vcombine.high %v946, %v946
    %v957 = vcombine.high %v953, %v953
    %v958 = vcombine.low %v23, %v30
    %v959 = vcombine.high %v23, %v30
    %v960 = vcombine.low %v37, %v44
    %v961 = vcombine.high %v37, %v44
    %v963 = vunpack.c.l.s4 1966171168
    %v964 = vunpack.c.0.s8 %v963
    %v965 = vlaneseq
    %v966 = vshrl.u32 %v965, 7
    %v967 = vsub.s32 %v964, %v966
    %v968 = vrot.slane %v958, %v967
    %v970 = vunpack.c.l.s4 1966171168
    %v971 = vunpack.c.0.s8 %v970
    %v972 = vlaneseq
    %v973 = vshrl.u32 %v972, 7
    %v974 = vsub.s32 %v971, %v973
    %v975 = vrot.slane %v959, %v974
    %v977 = vunpack.c.l.s4 1966171168
    %v978 = vunpack.c.0.s8 %v977
    %v979 = vlaneseq
    %v980 = vshrl.u32 %v979, 7
    %v981 = vsub.s32 %v978, %v980
    %v982 = vrot.slane %v960, %v981
    %v984 = vunpack.c.l.s4 1966171168
    %v985 = vunpack.c.0.s8 %v984
    %v986 = vlaneseq
    %v987 = vshrl.u32 %v986, 7
    %v988 = vsub.s32 %v985, %v987
    %v989 = vrot.slane %v961, %v988
    %v990 = vcombine.low %v968, %v982
    %v991 = vcombine.high %v968, %v982
    %v992 = vcombine.low %v975, %v989
    %v993 = vcombine.high %v975, %v989
    %v995 = vunpack.c.l.s4 1966171168
    %v996 = vunpack.c.0.s8 %v995
    %v997 = vlaneseq
    %v998 = vshrl.u32 %v997, 7
    %v999 = vsub.s32 %v996, %v998
    %v1000 = vrot.slane %v990, %v999
    %v1002 = vunpack.c.l.s4 1966171168
    %v1003 = vunpack.c.0.s8 %v1002
    %v1004 = vlaneseq
    %v1005 = vshrl.u32 %v1004, 7
    %v1006 = vsub.s32 %v1003, %v1005
    %v1007 = vrot.slane %v992, %v1006
    %v1009 = vunpack.c.l.s4 1966171168
    %v1010 = vunpack.c.0.s8 %v1009
    %v1011 = vlaneseq
    %v1012 = vshrl.u32 %v1011, 7
    %v1013 = vsub.s32 %v1010, %v1012
    %v1014 = vrot.slane %v991, %v1013
    %v1016 = vunpack.c.l.s4 1966171168
    %v1017 = vunpack.c.0.s8 %v1016
    %v1018 = vlaneseq
    %v1019 = vshrl.u32 %v1018, 7
    %v1020 = vsub.s32 %v1017, %v1019
    %v1021 = vrot.slane %v993, %v1020
    %v1022 = vcombine.high %v1000, %v1000
    %v1023 = vcombine.high %v1007, %v1007
    %v1024 = vcombine.high %v1014, %v1014
    %v1025 = vcombine.high %v1021, %v1021
    %v1026 = vcombine.low %v24, %v31
    %v1027 = vcombine.high %v24, %v31
    %v1028 = vcombine.low %v38, %v45
    %v1029 = vcombine.high %v38, %v45
    %v1031 = vunpack.c.l.s4 1966171168
    %v1032 = vunpack.c.0.s8 %v1031
    %v1033 = vlaneseq
    %v1034 = vshrl.u32 %v1033, 7
    %v1035 = vsub.s32 %v1032, %v1034
    %v1036 = vrot.slane %v1026, %v1035
    %v1038 = vunpack.c.l.s4 1966171168
    %v1039 = vunpack.c.0.s8 %v1038
    %v1040 = vlaneseq
    %v1041 = vshrl.u32 %v1040, 7
    %v1042 = vsub.s32 %v1039, %v1041
    %v1043 = vrot.slane %v1027, %v1042
    %v1045 = vunpack.c.l.s4 1966171168
    %v1046 = vunpack.c.0.s8 %v1045
    %v1047 = vlaneseq
    %v1048 = vshrl.u32 %v1047, 7
    %v1049 = vsub.s32 %v1046, %v1048
    %v1050 = vrot.slane %v1028, %v1049
    %v1052 = vunpack.c.l.s4 1966171168
    %v1053 = vunpack.c.0.s8 %v1052
    %v1054 = vlaneseq
    %v1055 = vshrl.u32 %v1054, 7
    %v1056 = vsub.s32 %v1053, %v1055
    %v1057 = vrot.slane %v1029, %v1056
    %v1058 = vcombine.low %v1036, %v1050
    %v1059 = vcombine.high %v1036, %v1050
    %v1060 = vcombine.low %v1043, %v1057
    %v1061 = vcombine.high %v1043, %v1057
    %v1063 = vunpack.c.l.s4 1966171168
    %v1064 = vunpack.c.0.s8 %v1063
    %v1065 = vlaneseq
    %v1066 = vshrl.u32 %v1065, 7
    %v1067 = vsub.s32 %v1064, %v1066
    %v1068 = vrot.slane %v1058, %v1067
    %v1070 = vunpack.c.l.s4 1966171168
    %v1071 = vunpack.c.0.s8 %v1070
    %v1072 = vlaneseq
    %v1073 = vshrl.u32 %v1072, 7
    %v1074 = vsub.s32 %v1071, %v1073
    %v1075 = vrot.slane %v1060, %v1074
    %v1077 = vunpack.c.l.s4 1966171168
    %v1078 = vunpack.c.0.s8 %v1077
    %v1079 = vlaneseq
    %v1080 = vshrl.u32 %v1079, 7
    %v1081 = vsub.s32 %v1078, %v1080
    %v1082 = vrot.slane %v1059, %v1081
    %v1084 = vunpack.c.l.s4 1966171168
    %v1085 = vunpack.c.0.s8 %v1084
    %v1086 = vlaneseq
    %v1087 = vshrl.u32 %v1086, 7
    %v1088 = vsub.s32 %v1085, %v1087
    %v1089 = vrot.slane %v1061, %v1088
    %v1090 = vcombine.high %v1068, %v1068
    %v1091 = vcombine.high %v1075, %v1075
    %v1092 = vcombine.high %v1082, %v1082
    %v1093 = vcombine.high %v1089, %v1089
    %v1094 = vcombine.low %v25, %v32
    %v1095 = vcombine.high %v25, %v32
    %v1096 = vcombine.low %v39, %v46
    %v1097 = vcombine.high %v39, %v46
    %v1099 = vunpack.c.l.s4 1966171168
    %v1100 = vunpack.c.0.s8 %v1099
    %v1101 = vlaneseq
    %v1102 = vshrl.u32 %v1101, 7
    %v1103 = vsub.s32 %v1100, %v1102
    %v1104 = vrot.slane %v1094, %v1103
    %v1106 = vunpack.c.l.s4 1966171168
    %v1107 = vunpack.c.0.s8 %v1106
    %v1108 = vlaneseq
    %v1109 = vshrl.u32 %v1108, 7
    %v1110 = vsub.s32 %v1107, %v1109
    %v1111 = vrot.slane %v1095, %v1110
    %v1113 = vunpack.c.l.s4 1966171168
    %v1114 = vunpack.c.0.s8 %v1113
    %v1115 = vlaneseq
    %v1116 = vshrl.u32 %v1115, 7
    %v1117 = vsub.s32 %v1114, %v1116
    %v1118 = vrot.slane %v1096, %v1117
    %v1120 = vunpack.c.l.s4 1966171168
    %v1121 = vunpack.c.0.s8 %v1120
    %v1122 = vlaneseq
    %v1123 = vshrl.u32 %v1122, 7
    %v1124 = vsub.s32 %v1121, %v1123
    %v1125 = vrot.slane %v1097, %v1124
    %v1126 = vcombine.low %v1104, %v1118
    %v1127 = vcombine.high %v1104, %v1118
    %v1128 = vcombine.low %v1111, %v1125
    %v1129 = vcombine.high %v1111, %v1125
    %v1131 = vunpack.c.l.s4 1966171168
    %v1132 = vunpack.c.0.s8 %v1131
    %v1133 = vlaneseq
    %v1134 = vshrl.u32 %v1133, 7
    %v1135 = vsub.s32 %v1132, %v1134
    %v1136 = vrot.slane %v1126, %v1135
    %v1138 = vunpack.c.l.s4 1966171168
    %v1139 = vunpack.c.0.s8 %v1138
    %v1140 = vlaneseq
    %v1141 = vshrl.u32 %v1140, 7
    %v1142 = vsub.s32 %v1139, %v1141
    %v1143 = vrot.slane %v1128, %v1142
    %v1145 = vunpack.c.l.s4 1966171168
    %v1146 = vunpack.c.0.s8 %v1145
    %v1147 = vlaneseq
    %v1148 = vshrl.u32 %v1147, 7
    %v1149 = vsub.s32 %v1146, %v1148
    %v1150 = vrot.slane %v1127, %v1149
    %v1152 = vunpack.c.l.s4 1966171168
    %v1153 = vunpack.c.0.s8 %v1152
    %v1154 = vlaneseq
    %v1155 = vshrl.u32 %v1154, 7
    %v1156 = vsub.s32 %v1153, %v1155
    %v1157 = vrot.slane %v1129, %v1156
    %v1158 = vcombine.high %v1136, %v1136
    %v1159 = vcombine.high %v1143, %v1143
    %v1160 = vcombine.high %v1150, %v1150
    %v1161 = vcombine.high %v1157, %v1157
    %v1162 = vcombine.low %v26, %v33
    %v1163 = vcombine.high %v26, %v33
    %v1164 = vcombine.low %v40, %v47
    %v1165 = vcombine.high %v40, %v47
    %v1167 = vunpack.c.l.s4 1966171168
    %v1168 = vunpack.c.0.s8 %v1167
    %v1169 = vlaneseq
    %v1170 = vshrl.u32 %v1169, 7
    %v1171 = vsub.s32 %v1168, %v1170
    %v1172 = vrot.slane %v1162, %v1171
    %v1174 = vunpack.c.l.s4 1966171168
    %v1175 = vunpack.c.0.s8 %v1174
    %v1176 = vlaneseq
    %v1177 = vshrl.u32 %v1176, 7
    %v1178 = vsub.s32 %v1175, %v1177
    %v1179 = vrot.slane %v1163, %v1178
    %v1181 = vunpack.c.l.s4 1966171168
    %v1182 = vunpack.c.0.s8 %v1181
    %v1183 = vlaneseq
    %v1184 = vshrl.u32 %v1183, 7
    %v1185 = vsub.s32 %v1182, %v1184
    %v1186 = vrot.slane %v1164, %v1185
    %v1188 = vunpack.c.l.s4 1966171168
    %v1189 = vunpack.c.0.s8 %v1188
    %v1190 = vlaneseq
    %v1191 = vshrl.u32 %v1190, 7
    %v1192 = vsub.s32 %v1189, %v1191
    %v1193 = vrot.slane %v1165, %v1192
    %v1194 = vcombine.low %v1172, %v1186
    %v1195 = vcombine.high %v1172, %v1186
    %v1196 = vcombine.low %v1179, %v1193
    %v1197 = vcombine.high %v1179, %v1193
    %v1199 = vunpack.c.l.s4 1966171168
    %v1200 = vunpack.c.0.s8 %v1199
    %v1201 = vlaneseq
    %v1202 = vshrl.u32 %v1201, 7
    %v1203 = vsub.s32 %v1200, %v1202
    %v1204 = vrot.slane %v1194, %v1203
    %v1206 = vunpack.c.l.s4 1966171168
    %v1207 = vunpack.c.0.s8 %v1206
    %v1208 = vlaneseq
    %v1209 = vshrl.u32 %v1208, 7
    %v1210 = vsub.s32 %v1207, %v1209
    %v1211 = vrot.slane %v1196, %v1210
    %v1213 = vunpack.c.l.s4 1966171168
    %v1214 = vunpack.c.0.s8 %v1213
    %v1215 = vlaneseq
    %v1216 = vshrl.u32 %v1215, 7
    %v1217 = vsub.s32 %v1214, %v1216
    %v1218 = vrot.slane %v1195, %v1217
    %v1220 = vunpack.c.l.s4 1966171168
    %v1221 = vunpack.c.0.s8 %v1220
    %v1222 = vlaneseq
    %v1223 = vshrl.u32 %v1222, 7
    %v1224 = vsub.s32 %v1221, %v1223
    %v1225 = vrot.slane %v1197, %v1224
    %v1226 = vcombine.high %v1204, %v1204
    %v1227 = vcombine.high %v1211, %v1211
    %v1228 = vcombine.high %v1218, %v1218
    %v1229 = vcombine.high %v1225, %v1225
    %v1230 = vcombine.low %v27, %v34
    %v1231 = vcombine.high %v27, %v34
    %v1232 = vcombine.low %v41, %v48
    %v1233 = vcombine.high %v41, %v48
    %v1235 = vunpack.c.l.s4 1966171168
    %v1236 = vunpack.c.0.s8 %v1235
    %v1237 = vlaneseq
    %v1238 = vshrl.u32 %v1237, 7
    %v1239 = vsub.s32 %v1236, %v1238
    %v1240 = vrot.slane %v1230, %v1239
    %v1242 = vunpack.c.l.s4 1966171168
    %v1243 = vunpack.c.0.s8 %v1242
    %v1244 = vlaneseq
    %v1245 = vshrl.u32 %v1244, 7
    %v1246 = vsub.s32 %v1243, %v1245
    %v1247 = vrot.slane %v1231, %v1246
    %v1249 = vunpack.c.l.s4 1966171168
    %v1250 = vunpack.c.0.s8 %v1249
    %v1251 = vlaneseq
    %v1252 = vshrl.u32 %v1251, 7
    %v1253 = vsub.s32 %v1250, %v1252
    %v1254 = vrot.slane %v1232, %v1253
    %v1256 = vunpack.c.l.s4 1966171168
    %v1257 = vunpack.c.0.s8 %v1256
    %v1258 = vlaneseq
    %v1259 = vshrl.u32 %v1258, 7
    %v1260 = vsub.s32 %v1257, %v1259
    %v1261 = vrot.slane %v1233, %v1260
    %v1262 = vcombine.low %v1240, %v1254
    %v1263 = vcombine.high %v1240, %v1254
    %v1264 = vcombine.low %v1247, %v1261
    %v1265 = vcombine.high %v1247, %v1261
    %v1267 = vunpack.c.l.s4 1966171168
    %v1268 = vunpack.c.0.s8 %v1267
    %v1269 = vlaneseq
    %v1270 = vshrl.u32 %v1269, 7
    %v1271 = vsub.s32 %v1268, %v1270
    %v1272 = vrot.slane %v1262, %v1271
    %v1274 = vunpack.c.l.s4 1966171168
    %v1275 = vunpack.c.0.s8 %v1274
    %v1276 = vlaneseq
    %v1277 = vshrl.u32 %v1276, 7
    %v1278 = vsub.s32 %v1275, %v1277
    %v1279 = vrot.slane %v1264, %v1278
    %v1281 = vunpack.c.l.s4 1966171168
    %v1282 = vunpack.c.0.s8 %v1281
    %v1283 = vlaneseq
    %v1284 = vshrl.u32 %v1283, 7
    %v1285 = vsub.s32 %v1282, %v1284
    %v1286 = vrot.slane %v1263, %v1285
    %v1288 = vunpack.c.l.s4 1966171168
    %v1289 = vunpack.c.0.s8 %v1288
    %v1290 = vlaneseq
    %v1291 = vshrl.u32 %v1290, 7
    %v1292 = vsub.s32 %v1289, %v1291
    %v1293 = vrot.slane %v1265, %v1292
    %v1294 = vcombine.high %v1272, %v1272
    %v1295 = vcombine.high %v1279, %v1279
    %v1296 = vcombine.high %v1286, %v1286
    %v1297 = vcombine.high %v1293, %v1293
    %v1298 = vcombine.low %v28, %v35
    %v1299 = vcombine.low %v42, %v49
    %v1301 = vunpack.c.l.s4 1966171168
    %v1302 = vunpack.c.0.s8 %v1301
    %v1303 = vlaneseq
    %v1304 = vshrl.u32 %v1303, 7
    %v1305 = vsub.s32 %v1302, %v1304
    %v1306 = vrot.slane %v1298, %v1305
    %v1308 = vunpack.c.l.s4 1966171168
    %v1309 = vunpack.c.0.s8 %v1308
    %v1310 = vlaneseq
    %v1311 = vshrl.u32 %v1310, 7
    %v1312 = vsub.s32 %v1309, %v1311
    %v1313 = vrot.slane %v1299, %v1312
    %v1314 = vcombine.low %v1306, %v1313
    %v1315 = vcombine.high %v1306, %v1313
    %v1317 = vunpack.c.l.s4 1966171168
    %v1318 = vunpack.c.0.s8 %v1317
    %v1319 = vlaneseq
    %v1320 = vshrl.u32 %v1319, 7
    %v1321 = vsub.s32 %v1318, %v1320
    %v1322 = vrot.slane %v1314, %v1321
    %v1324 = vunpack.c.l.s4 1966171168
    %v1325 = vunpack.c.0.s8 %v1324
    %v1326 = vlaneseq
    %v1327 = vshrl.u32 %v1326, 7
    %v1328 = vsub.s32 %v1325, %v1327
    %v1329 = vrot.slane %v1315, %v1328
    %v2180 = vunpack.c.l.b16 %v50
    %v2181 = vunpack.c.h.b16 %v50
    %v2182 = vunpack.c.l.b16 %v51
    %v2183 = vunpack.c.h.b16 %v51
    %v2184 = vunpack.c.l.b16 %v52
    %v2185 = vunpack.c.h.b16 %v52
    %v2186 = vunpack.c.l.b16 %v53
    %v2187 = vunpack.c.h.b16 %v53
    %v2188 = vunpack.c.l.b16 %v54
    %v2189 = vunpack.c.h.b16 %v54
    %v2190 = vunpack.c.l.b16 %v55
    %v2191 = vunpack.c.h.b16 %v55
    %v2192 = vunpack.c.l.b16 %v56
    %v2193 = vunpack.c.h.b16 %v56
    %v2194 = vunpack.c.l.b16 %v57
    %v2195 = vunpack.c.h.b16 %v57
    %v2196 = vunpack.c.l.b16 %v58
    %v2197 = vunpack.c.h.b16 %v58
    %v2198 = vunpack.c.l.b16 %v59
    %v2199 = vunpack.c.h.b16 %v59
    %v2200 = vunpack.c.l.b16 %v60
    %v2201 = vunpack.c.h.b16 %v60
    %v2202 = vunpack.c.l.b16 %v61
    %v2203 = vunpack.c.h.b16 %v61
    %v2204 = vunpack.c.l.b16 %v62
    %v2205 = vunpack.c.h.b16 %v62
    %v2206 = vunpack.c.l.b16 %v63
    %v2207 = vunpack.c.h.b16 %v63
    %v2208 = vunpack.c.l.b16 %v64
    %v2209 = vunpack.c.h.b16 %v64
    %v2210 = vunpack.c.l.b16 %v65
    %v2211 = vunpack.c.h.b16 %v65
    %v2212 = vunpack.c.l.b16 %v66
    %v2213 = vunpack.c.h.b16 %v66
    %v2214 = vunpack.c.l.b16 %v67
    %v2215 = vunpack.c.h.b16 %v67
    %v2216 = vunpack.c.l.b16 %v68
    %v2217 = vunpack.c.h.b16 %v68
    %v2218 = vunpack.c.l.b16 %v69
    %v2219 = vunpack.c.h.b16 %v69
    %v2220 = vunpack.c.l.b16 %v70
    %v2221 = vunpack.c.h.b16 %v70
    %v2222 = vunpack.c.l.b16 %v71
    %v2223 = vunpack.c.h.b16 %v71
    %v2224 = vunpack.c.l.b16 %v72
    %v2225 = vunpack.c.h.b16 %v72
    %v2226 = vunpack.c.l.b16 %v73
    %v2227 = vunpack.c.h.b16 %v73
    %v2228 = vunpack.c.l.b16 %v74
    %v2229 = vunpack.c.h.b16 %v74
    %v2230 = vunpack.c.l.b16 %v75
    %v2231 = vunpack.c.h.b16 %v75
    %v2232 = vunpack.c.l.b16 %v76
    %v2233 = vunpack.c.h.b16 %v76
    %v2234 = vunpack.c.l.b16 %v77
    %v2235 = vunpack.c.h.b16 %v77
    %v2236 = vunpack.c.l.b16 %v78
    %v2237 = vunpack.c.h.b16 %v78
    %v2238 = vunpack.c.l.b16 %v79
    %v2239 = vunpack.c.h.b16 %v79
    %v2240 = vunpack.c.l.b16 %v80
    %v2241 = vunpack.c.h.b16 %v80
    %v2242 = vunpack.c.l.b16 %v81
    %v2243 = vunpack.c.h.b16 %v81
    %v2244 = vunpack.c.l.b16 %v82
    %v2245 = vunpack.c.h.b16 %v82
    %v2246 = vunpack.c.l.b16 %v83
    %v2247 = vunpack.c.h.b16 %v83
    %v2248 = vunpack.c.l.b16 %v84
    %v2249 = vunpack.c.h.b16 %v84
    %v2250 = vunpack.c.l.b16 %v85
    %v2251 = vunpack.c.h.b16 %v85
    %v2252 = vunpack.c.l.b16 %v86
    %v2253 = vunpack.c.h.b16 %v86
    %v2254 = vunpack.c.l.b16 %v87
    %v2255 = vunpack.c.h.b16 %v87
    %v2256 = vunpack.c.l.b16 %v88
    %v2257 = vunpack.c.h.b16 %v88
    %v2258 = vunpack.c.l.b16 %v89
    %v2259 = vunpack.c.h.b16 %v89
    %v2260 = vunpack.c.l.b16 %v90
    %v2261 = vunpack.c.h.b16 %v90
    %v2262 = vunpack.c.l.b16 %v91
    %v2263 = vunpack.c.h.b16 %v91
    %v2264 = vunpack.c.l.b16 %v92
    %v2265 = vunpack.c.h.b16 %v92
    %v2266 = vunpack.c.l.b16 %v93
    %v2267 = vunpack.c.h.b16 %v93
    %v2268 = vunpack.c.l.b16 %v94
    %v2269 = vunpack.c.h.b16 %v94
    %v2270 = vunpack.c.l.b16 %v95
    %v2271 = vunpack.c.h.b16 %v95
    %v2272 = vunpack.c.l.b16 %v96
    %v2273 = vunpack.c.h.b16 %v96
    %v2274 = vunpack.c.l.b16 %v97
    %v2275 = vunpack.c.h.b16 %v97
    %v2276 = vunpack.c.l.b16 %v98
    %v2277 = vunpack.c.h.b16 %v98
    %v2278 = vunpack.c.l.b16 %v99
    %v2279 = vunpack.c.h.b16 %v99
    %v2280 = vunpack.c.l.b16 %v100
    %v2281 = vunpack.c.h.b16 %v100
    %v2282 = vunpack.c.l.b16 %v101
    %v2283 = vunpack.c.h.b16 %v101
    %v2284 = vunpack.c.l.b16 %v102
    %v2285 = vunpack.c.h.b16 %v102
    %v2286 = vunpack.c.l.b16 %v103
    %v2287 = vunpack.c.h.b16 %v103
    %v2288 = vunpack.c.l.b16 %v104
    %v2289 = vunpack.c.h.b16 %v104
    %v2290 = vunpack.c.l.b16 %v105
    %v2291 = vunpack.c.h.b16 %v105
    %v2292 = vunpack.c.l.b16 %v106
    %v2293 = vunpack.c.h.b16 %v106
    %v2294 = vunpack.c.l.b16 %v107
    %v2295 = vunpack.c.h.b16 %v107
    %v2296 = vunpack.c.l.b16 %v108
    %v2297 = vunpack.c.h.b16 %v108
    %v2298 = vunpack.c.l.b16 %v109
    %v2299 = vunpack.c.h.b16 %v109
    %v2300 = vunpack.c.l.b16 %v110
    %v2301 = vunpack.c.h.b16 %v110
    %v2302 = vunpack.c.l.b16 %v111
    %v2303 = vunpack.c.h.b16 %v111
    %v2304 = vunpack.c.l.b16 %v112
    %v2305 = vunpack.c.h.b16 %v112
    %v2306 = vunpack.c.l.b16 %v113
    %v2307 = vunpack.c.h.b16 %v113
    %v2308 = vunpack.c.l.b16 %v114
    %v2309 = vunpack.c.h.b16 %v114
    %v2310 = vunpack.c.l.b16 %v115
    %v2311 = vunpack.c.h.b16 %v115
    %v2312 = vunpack.c.l.b16 %v116
    %v2313 = vunpack.c.h.b16 %v116
    %v2314 = vunpack.c.l.b16 %v117
    %v2315 = vunpack.c.h.b16 %v117
    %v2316 = vunpack.c.l.b16 %v118
    %v2317 = vunpack.c.h.b16 %v118
    %v2318 = vunpack.c.l.b16 %v119
    %v2319 = vunpack.c.h.b16 %v119
    %v2320 = vunpack.c.l.b16 %v120
    %v2321 = vunpack.c.h.b16 %v120
    %v2322 = vunpack.c.l.b16 %v121
    %v2323 = vunpack.c.h.b16 %v121
    %v2324 = vunpack.c.l.b16 %v122
    %v2325 = vunpack.c.h.b16 %v122
    %v2326 = vunpack.c.l.b16 %v123
    %v2327 = vunpack.c.h.b16 %v123
    %v2328 = vunpack.c.l.b16 %v124
    %v2329 = vunpack.c.h.b16 %v124
    %v2330 = vunpack.c.l.b16 %v125
    %v2331 = vunpack.c.h.b16 %v125
    %v2332 = vunpack.c.l.b16 %v126
    %v2333 = vunpack.c.h.b16 %v126
    %v2334 = vunpack.c.l.b16 %v127
    %v2335 = vunpack.c.h.b16 %v127
    %v2336 = vunpack.c.l.b16 %v128
    %v2337 = vunpack.c.h.b16 %v128
    %v2338 = vunpack.c.l.b16 %v129
    %v2339 = vunpack.c.h.b16 %v129
    %v2340 = vunpack.c.l.b16 %v130
    %v2341 = vunpack.c.h.b16 %v130
    %v2342 = vunpack.c.l.b16 %v131
    %v2343 = vunpack.c.h.b16 %v131
    %v2344 = vunpack.c.l.b16 %v132
    %v2345 = vunpack.c.h.b16 %v132
    %v2346 = vunpack.c.l.b16 %v133
    %v2347 = vunpack.c.h.b16 %v133
    %v2348 = vunpack.c.l.b16 %v134
    %v2349 = vunpack.c.h.b16 %v134
    %v2350 = vunpack.c.l.b16 %v135
    %v2351 = vunpack.c.h.b16 %v135
    %v2352 = vunpack.c.l.b16 %v136
    %v2353 = vunpack.c.h.b16 %v136
    %v2354 = vunpack.c.l.b16 %v137
    %v2355 = vunpack.c.h.b16 %v137
    %v2356 = vunpack.c.l.b16 %v138
    %v2357 = vunpack.c.h.b16 %v138
    %v2358 = vunpack.c.l.b16 %v139
    %v2359 = vunpack.c.h.b16 %v139
    %v2360 = vunpack.c.l.b16 %v140
    %v2361 = vunpack.c.h.b16 %v140
    %v2362 = vunpack.c.l.b16 %v141
    %v2363 = vunpack.c.h.b16 %v141
    %v2364 = vunpack.c.l.b16 %v142
    %v2365 = vunpack.c.h.b16 %v142
    %v2366 = vunpack.c.l.b16 %v143
    %v2367 = vunpack.c.h.b16 %v143
    %v2368 = vunpack.c.l.b16 %v144
    %v2369 = vunpack.c.h.b16 %v144
    %v2370 = vunpack.c.l.b16 %v145
    %v2371 = vunpack.c.h.b16 %v145
    %v2372 = vunpack.c.l.b16 %v146
    %v2373 = vunpack.c.h.b16 %v146
    %v2374 = vunpack.c.l.b16 %v147
    %v2375 = vunpack.c.h.b16 %v147
    %v2376 = vunpack.c.l.b16 %v148
    %v2377 = vunpack.c.h.b16 %v148
    %v2378 = vunpack.c.l.b16 %v149
    %v2379 = vunpack.c.h.b16 %v149
    %v2380 = vunpack.c.l.b16 %v150
    %v2381 = vunpack.c.h.b16 %v150
    %v2382 = vunpack.c.l.b16 %v151
    %v2383 = vunpack.c.h.b16 %v151
    %v2384 = vunpack.c.l.b16 %v152
    %v2385 = vunpack.c.h.b16 %v152
    %v2386 = vunpack.c.l.b16 %v153
    %v2387 = vunpack.c.h.b16 %v153
    %v2388 = vunpack.c.l.b16 %v154
    %v2389 = vunpack.c.h.b16 %v154
    %v2390 = vunpack.c.l.b16 %v155
    %v2391 = vunpack.c.h.b16 %v155
    %v2392 = vunpack.c.l.b16 %v156
    %v2393 = vunpack.c.h.b16 %v156
    %v2394 = vunpack.c.l.b16 %v157
    %v2395 = vunpack.c.h.b16 %v157
    %v2396 = vunpack.c.l.b16 %v158
    %v2397 = vunpack.c.h.b16 %v158
    %v2398 = vunpack.c.l.b16 %v159
    %v2399 = vunpack.c.h.b16 %v159
    %v2400 = vunpack.c.l.b16 %v160
    %v2401 = vunpack.c.h.b16 %v160
    %v2402 = vunpack.c.l.b16 %v161
    %v2403 = vunpack.c.h.b16 %v161
    %v2404 = vunpack.c.l.b16 %v162
    %v2405 = vunpack.c.h.b16 %v162
    %v2406 = vunpack.c.l.b16 %v163
    %v2407 = vunpack.c.h.b16 %v163
    %v2408 = vunpack.c.l.b16 %v164
    %v2409 = vunpack.c.h.b16 %v164
    %v2410 = vunpack.c.l.b16 %v165
    %v2411 = vunpack.c.h.b16 %v165
    %v2412 = vunpack.c.l.b16 %v166
    %v2413 = vunpack.c.h.b16 %v166
    %v2414 = vunpack.c.l.b16 %v167
    %v2415 = vunpack.c.h.b16 %v167
    %v2416 = vunpack.c.l.b16 %v168
    %v2417 = vunpack.c.h.b16 %v168
    %v2418 = vunpack.c.l.b16 %v169
    %v2419 = vunpack.c.h.b16 %v169
    %v2420 = vunpack.c.l.b16 %v170
    %v2421 = vunpack.c.h.b16 %v170
    %v2422 = vunpack.c.l.b16 %v171
    %v2423 = vunpack.c.h.b16 %v171
    %v2424 = vunpack.c.l.b16 %v172
    %v2425 = vunpack.c.h.b16 %v172
    %v2426 = vunpack.c.l.b16 %v173
    %v2427 = vunpack.c.h.b16 %v173
    %v2428 = vunpack.c.l.b16 %v174
    %v2429 = vunpack.c.h.b16 %v174
    %v2430 = vunpack.c.l.b16 %v175
    %v2431 = vunpack.c.h.b16 %v175
    %v2432 = vunpack.c.l.b16 %v176
    %v2433 = vunpack.c.h.b16 %v176
    %v2434 = vunpack.c.l.b16 %v177
    %v2435 = vunpack.c.h.b16 %v177
    %v2436 = vunpack.c.l.b16 %v178
    %v2437 = vunpack.c.h.b16 %v178
    %v2438 = vunpack.c.l.b16 %v179
    %v2439 = vunpack.c.h.b16 %v179
    %v2440 = vunpack.c.l.b16 %v180
    %v2441 = vunpack.c.h.b16 %v180
    %v2442 = vunpack.c.l.b16 %v181
    %v2443 = vunpack.c.h.b16 %v181
    %v2444 = vunpack.c.l.b16 %v182
    %v2445 = vunpack.c.h.b16 %v182
    %v2446 = vunpack.c.l.b16 %v183
    %v2447 = vunpack.c.h.b16 %v183
    %v2448 = vunpack.c.l.b16 %v184
    %v2449 = vunpack.c.h.b16 %v184
    %v2450 = vunpack.c.l.b16 %v185
    %v2451 = vunpack.c.h.b16 %v185
    %v2452 = vunpack.c.l.b16 %v186
    %v2453 = vunpack.c.h.b16 %v186
    %v2454 = vunpack.c.l.b16 %v187
    %v2455 = vunpack.c.h.b16 %v187
    %v2456 = vunpack.c.l.b16 %v188
    %v2457 = vunpack.c.h.b16 %v188
    %v2458 = vunpack.c.l.b16 %v189
    %v2459 = vunpack.c.h.b16 %v189
    %v2460 = vunpack.c.l.b16 %v190
    %v2461 = vunpack.c.h.b16 %v190
    %v2462 = vunpack.c.l.b16 %v191
    %v2463 = vunpack.c.h.b16 %v191
    %v2464 = vunpack.c.l.b16 %v192
    %v2465 = vunpack.c.h.b16 %v192
    %v2466 = vunpack.c.l.b16 %v193
    %v2467 = vunpack.c.h.b16 %v193
    %v2468 = vunpack.c.l.b16 %v194
    %v2469 = vunpack.c.h.b16 %v194
    %v2470 = vunpack.c.l.b16 %v195
    %v2471 = vunpack.c.h.b16 %v195
    %v2472 = vunpack.c.l.b16 %v196
    %v2473 = vunpack.c.h.b16 %v196
    %v2474 = vunpack.c.l.b16 %v197
    %v2475 = vunpack.c.h.b16 %v197
    %v2476 = vunpack.c.l.b16 %v198
    %v2477 = vunpack.c.h.b16 %v198
    %v2478 = vunpack.c.l.b16 %v199
    %v2479 = vunpack.c.h.b16 %v199
    %v2480 = vunpack.c.l.b16 %v200
    %v2481 = vunpack.c.h.b16 %v200
    %v2482 = vunpack.c.l.b16 %v201
    %v2483 = vunpack.c.h.b16 %v201
    %v2484 = vunpack.c.l.b16 %v202
    %v2485 = vunpack.c.h.b16 %v202
    %v2486 = vunpack.c.l.b16 %v203
    %v2487 = vunpack.c.h.b16 %v203
    %v2488 = vunpack.c.l.b16 %v204
    %v2489 = vunpack.c.h.b16 %v204
    %v2490 = vunpack.c.l.b16 %v205
    %v2491 = vunpack.c.h.b16 %v205
    %v2492 = vunpack.c.l.b16 %v206
    %v2493 = vunpack.c.h.b16 %v206
    %v2494 = vunpack.c.l.b16 %v207
    %v2495 = vunpack.c.h.b16 %v207
    %v2496 = vunpack.c.l.b16 %v208
    %v2497 = vunpack.c.h.b16 %v208
    %v2498 = vunpack.c.l.b16 %v209
    %v2499 = vunpack.c.h.b16 %v209
    %v2500 = vunpack.c.l.b16 %v210
    %v2501 = vunpack.c.h.b16 %v210
    %v2502 = vunpack.c.l.b16 %v211
    %v2503 = vunpack.c.h.b16 %v211
    %v2504 = vunpack.c.l.b16 %v212
    %v2505 = vunpack.c.h.b16 %v212
    %v2506 = vunpack.c.l.b16 %v213
    %v2507 = vunpack.c.h.b16 %v213
    %v2508 = vunpack.c.l.b16 %v214
    %v2509 = vunpack.c.h.b16 %v214
    %v2510 = vunpack.c.l.b16 %v215
    %v2511 = vunpack.c.h.b16 %v215
    %v2512 = vunpack.c.l.b16 %v216
    %v2513 = vunpack.c.h.b16 %v216
    %v2514 = vunpack.c.l.b16 %v217
    %v2515 = vunpack.c.h.b16 %v217
    %v2516 = vunpack.c.l.b16 %v218
    %v2517 = vunpack.c.h.b16 %v218
    %v2518 = vunpack.c.l.b16 %v219
    %v2519 = vunpack.c.h.b16 %v219
    %v2520 = vunpack.c.l.b16 %v220
    %v2521 = vunpack.c.h.b16 %v220
    %v2522 = vunpack.c.l.b16 %v221
    %v2523 = vunpack.c.h.b16 %v221
    %v2524 = vunpack.c.l.b16 %v222
    %v2525 = vunpack.c.h.b16 %v222
    %v2526 = vunpack.c.l.b16 %v223
    %v2527 = vunpack.c.h.b16 %v223
    %v2528 = vunpack.c.l.b16 %v224
    %v2529 = vunpack.c.h.b16 %v224
    %v2530 = vunpack.c.l.b16 %v225
    %v2531 = vunpack.c.h.b16 %v225
    %v2532 = vunpack.c.l.b16 %v226
    %v2533 = vunpack.c.h.b16 %v226
    %v2534 = vunpack.c.l.b16 %v227
    %v2535 = vunpack.c.h.b16 %v227
    %v2536 = vunpack.c.l.b16 %v228
    %v2537 = vunpack.c.h.b16 %v228
    %v2538 = vunpack.c.l.b16 %v229
    %v2539 = vunpack.c.h.b16 %v229
    %v2540 = vunpack.c.l.b16 %v230
    %v2541 = vunpack.c.h.b16 %v230
    %v2542 = vunpack.c.l.b16 %v231
    %v2543 = vunpack.c.h.b16 %v231
    %v2544 = vunpack.c.l.b16 %v232
    %v2545 = vunpack.c.h.b16 %v232
    %v2546 = vunpack.c.l.b16 %v233
    %v2547 = vunpack.c.h.b16 %v233
    %v2548 = vunpack.c.l.b16 %v234
    %v2549 = vunpack.c.h.b16 %v234
    %v2550 = vunpack.c.l.b16 %v235
    %v2551 = vunpack.c.h.b16 %v235
    %v2552 = vunpack.c.l.b16 %v236
    %v2553 = vunpack.c.h.b16 %v236
    %v2554 = vunpack.c.l.b16 %v237
    %v2555 = vunpack.c.h.b16 %v237
    %v2556 = vunpack.c.l.b16 %v238
    %v2557 = vunpack.c.h.b16 %v238
    %v2558 = vunpack.c.l.b16 %v239
    %v2559 = vunpack.c.h.b16 %v239
    %v2560 = vunpack.c.l.b16 %v240
    %v2561 = vunpack.c.h.b16 %v240
    %v2562 = vunpack.c.l.b16 %v241
    %v2563 = vunpack.c.h.b16 %v241
    %v2564 = vunpack.c.l.b16 %v242
    %v2565 = vunpack.c.h.b16 %v242
    %v2566 = vunpack.c.l.b16 %v243
    %v2567 = vunpack.c.h.b16 %v243
    %v2568 = vunpack.c.l.b16 %v244
    %v2569 = vunpack.c.h.b16 %v244
    %v2570 = vunpack.c.l.b16 %v245
    %v2571 = vunpack.c.h.b16 %v245
    %v2572 = vunpack.c.l.b16 %v246
    %v2573 = vunpack.c.h.b16 %v246
    %v2574 = vunpack.c.l.b16 %v247
    %v2575 = vunpack.c.h.b16 %v247
    %v2576 = vunpack.c.l.b16 %v248
    %v2577 = vunpack.c.h.b16 %v248
    %v2578 = vunpack.c.l.b16 %v249
    %v2579 = vunpack.c.h.b16 %v249
    %v2580 = vunpack.c.l.b16 %v250
    %v2581 = vunpack.c.h.b16 %v250
    %v2582 = vunpack.c.l.b16 %v251
    %v2583 = vunpack.c.h.b16 %v251
    %v2584 = vunpack.c.l.b16 %v252
    %v2585 = vunpack.c.h.b16 %v252
    %v2586 = vunpack.c.l.b16 %v253
    %v2587 = vunpack.c.h.b16 %v253
    %v2588 = vunpack.c.l.b16 %v254
    %v2589 = vunpack.c.h.b16 %v254
    %v2590 = vunpack.c.l.b16 %v255
    %v2591 = vunpack.c.h.b16 %v255
    %v2592 = vunpack.c.l.b16 %v256
    %v2593 = vunpack.c.h.b16 %v256
    %v2594 = vunpack.c.l.b16 %v257
    %v2595 = vunpack.c.h.b16 %v257
    %v2596 = vunpack.c.l.b16 %v258
    %v2597 = vunpack.c.h.b16 %v258
    %v2598 = vunpack.c.l.b16 %v259
    %v2599 = vunpack.c.h.b16 %v259
    %v2600 = vunpack.c.l.b16 %v260
    %v2601 = vunpack.c.h.b16 %v260
    %v2602 = vunpack.c.l.b16 %v261
    %v2603 = vunpack.c.h.b16 %v261
    %v2604 = vunpack.c.l.b16 %v262
    %v2605 = vunpack.c.h.b16 %v262
    %v2606 = vunpack.c.l.b16 %v263
    %v2607 = vunpack.c.h.b16 %v263
    %v2608 = vunpack.c.l.b16 %v264
    %v2609 = vunpack.c.h.b16 %v264
    %v2610 = vunpack.c.l.b16 %v265
    %v2611 = vunpack.c.h.b16 %v265
    %v2612 = vunpack.c.l.b16 %v266
    %v2613 = vunpack.c.h.b16 %v266
    %v2614 = vunpack.c.l.b16 %v267
    %v2615 = vunpack.c.h.b16 %v267
    %v2616 = vunpack.c.l.b16 %v268
    %v2617 = vunpack.c.h.b16 %v268
    %v2618 = vunpack.c.l.b16 %v269
    %v2619 = vunpack.c.h.b16 %v269
    %v2620 = vunpack.c.l.b16 %v270
    %v2621 = vunpack.c.h.b16 %v270
    %v2622 = vunpack.c.l.b16 %v271
    %v2623 = vunpack.c.h.b16 %v271
    %v2624 = vunpack.c.l.b16 %v272
    %v2625 = vunpack.c.h.b16 %v272
    %v2626 = vunpack.c.l.b16 %v273
    %v2627 = vunpack.c.h.b16 %v273
    %v2628 = vunpack.c.l.b16 %v274
    %v2629 = vunpack.c.h.b16 %v274
    %v2630 = vunpack.c.l.b16 %v275
    %v2631 = vunpack.c.h.b16 %v275
    %v2632 = vunpack.c.l.b16 %v276
    %v2633 = vunpack.c.h.b16 %v276
    %v2634 = vunpack.c.l.b16 %v277
    %v2635 = vunpack.c.h.b16 %v277
    %v2636 = vunpack.c.l.b16 %v278
    %v2637 = vunpack.c.h.b16 %v278
    %v2638 = vunpack.c.l.b16 %v279
    %v2639 = vunpack.c.h.b16 %v279
    %v2640 = vunpack.c.l.b16 %v280
    %v2641 = vunpack.c.h.b16 %v280
    %v2642 = vunpack.c.l.b16 %v281
    %v2643 = vunpack.c.h.b16 %v281
    %v2644 = vunpack.c.l.b16 %v282
    %v2645 = vunpack.c.h.b16 %v282
    %v2646 = vunpack.c.l.b16 %v283
    %v2647 = vunpack.c.h.b16 %v283
    %v2648 = vunpack.c.l.b16 %v284
    %v2649 = vunpack.c.h.b16 %v284
    %v2650 = vunpack.c.l.b16 %v285
    %v2651 = vunpack.c.h.b16 %v285
    %v2652 = vunpack.c.l.b16 %v286
    %v2653 = vunpack.c.h.b16 %v286
    %v2654 = vunpack.c.l.b16 %v287
    %v2655 = vunpack.c.h.b16 %v287
    %v2656 = vunpack.c.l.b16 %v288
    %v2657 = vunpack.c.h.b16 %v288
    %v2658 = vunpack.c.l.b16 %v289
    %v2659 = vunpack.c.h.b16 %v289
    %v2660 = vunpack.c.l.b16 %v290
    %v2661 = vunpack.c.h.b16 %v290
    %v2662 = vunpack.c.l.b16 %v291
    %v2663 = vunpack.c.h.b16 %v291
    %v2664 = vunpack.c.l.b16 %v292
    %v2665 = vunpack.c.h.b16 %v292
    %v2666 = vunpack.c.l.b16 %v293
    %v2667 = vunpack.c.h.b16 %v293
    %v2668 = vunpack.c.l.b16 %v294
    %v2669 = vunpack.c.h.b16 %v294
    %v2670 = vunpack.c.l.b16 %v295
    %v2671 = vunpack.c.h.b16 %v295
    %v2672 = vunpack.c.l.b16 %v296
    %v2673 = vunpack.c.h.b16 %v296
    %v2674 = vunpack.c.l.b16 %v297
    %v2675 = vunpack.c.h.b16 %v297
    %v2676 = vunpack.c.l.b16 %v298
    %v2677 = vunpack.c.h.b16 %v298
    %v2678 = vunpack.c.l.b16 %v299
    %v2679 = vunpack.c.h.b16 %v299
    %v2680 = vunpack.c.l.b16 %v300
    %v2681 = vunpack.c.h.b16 %v300
    %v2682 = vunpack.c.l.b16 %v301
    %v2683 = vunpack.c.h.b16 %v301
    %v2684 = vunpack.c.l.b16 %v302
    %v2685 = vunpack.c.h.b16 %v302
    %v2686 = vunpack.c.l.b16 %v303
    %v2687 = vunpack.c.h.b16 %v303
    %v2688 = vunpack.c.l.b16 %v304
    %v2689 = vunpack.c.h.b16 %v304
    %v2690 = vunpack.c.l.b16 %v305
    %v2691 = vunpack.c.h.b16 %v305
    %v2692 = vunpack.c.l.b16 %v306
    %v2693 = vunpack.c.h.b16 %v306
    %v2694 = vunpack.c.l.b16 %v307
    %v2695 = vunpack.c.h.b16 %v307
    %v2696 = vunpack.c.l.b16 %v308
    %v2697 = vunpack.c.h.b16 %v308
    %v2698 = vunpack.c.l.b16 %v309
    %v2699 = vunpack.c.h.b16 %v309
    %v2700 = vunpack.c.l.b16 %v310
    %v2701 = vunpack.c.h.b16 %v310
    %v2702 = vunpack.c.l.b16 %v311
    %v2703 = vunpack.c.h.b16 %v311
    %v2704 = vunpack.c.l.b16 %v312
    %v2705 = vunpack.c.h.b16 %v312
    %v2706 = vunpack.c.l.b16 %v313
    %v2707 = vunpack.c.h.b16 %v313
    %v2708 = vunpack.c.l.b16 %v314
    %v2709 = vunpack.c.h.b16 %v314
    %v2710 = vunpack.c.l.b16 %v315
    %v2711 = vunpack.c.h.b16 %v315
    %v2712 = vunpack.c.l.b16 %v316
    %v2713 = vunpack.c.h.b16 %v316
    %v2714 = vunpack.c.l.b16 %v317
    %v2715 = vunpack.c.h.b16 %v317
    %v2716 = vunpack.c.l.b16 %v318
    %v2717 = vunpack.c.h.b16 %v318
    %v2718 = vunpack.c.l.b16 %v319
    %v2719 = vunpack.c.h.b16 %v319
    %v2720 = vunpack.c.l.b16 %v320
    %v2721 = vunpack.c.h.b16 %v320
    %v2722 = vunpack.c.l.b16 %v321
    %v2723 = vunpack.c.h.b16 %v321
    %v2724 = vunpack.c.l.b16 %v322
    %v2725 = vunpack.c.h.b16 %v322
    %v2726 = vunpack.c.l.b16 %v323
    %v2727 = vunpack.c.h.b16 %v323
    %v2728 = vunpack.c.l.b16 %v324
    %v2729 = vunpack.c.h.b16 %v324
    %v2730 = vunpack.c.l.b16 %v325
    %v2731 = vunpack.c.h.b16 %v325
    %v2732 = vunpack.c.l.b16 %v326
    %v2733 = vunpack.c.h.b16 %v326
    %v2734 = vunpack.c.l.b16 %v327
    %v2735 = vunpack.c.h.b16 %v327
    %v2736 = vunpack.c.l.b16 %v328
    %v2737 = vunpack.c.h.b16 %v328
    %v2738 = vunpack.c.l.b16 %v329
    %v2739 = vunpack.c.h.b16 %v329
    %v2740 = vunpack.c.l.b16 %v330
    %v2741 = vunpack.c.h.b16 %v330
    %v2742 = vunpack.c.l.b16 %v331
    %v2743 = vunpack.c.h.b16 %v331
    %v2744 = vunpack.c.l.b16 %v332
    %v2745 = vunpack.c.h.b16 %v332
    %v2746 = vunpack.c.l.b16 %v333
    %v2747 = vunpack.c.h.b16 %v333
    %v2748 = vunpack.c.l.b16 %v334
    %v2749 = vunpack.c.h.b16 %v334
    %v2750 = vunpack.c.l.b16 %v335
    %v2751 = vunpack.c.h.b16 %v335
    %v2752 = vunpack.c.l.b16 %v336
    %v2753 = vunpack.c.h.b16 %v336
    %v2754 = vunpack.c.l.b16 %v337
    %v2755 = vunpack.c.h.b16 %v337
    %v2756 = vunpack.c.l.b16 %v338
    %v2757 = vunpack.c.h.b16 %v338
    %v2758 = vunpack.c.l.b16 %v339
    %v2759 = vunpack.c.h.b16 %v339
    %v2760 = vunpack.c.l.b16 %v340
    %v2761 = vunpack.c.h.b16 %v340
    %v2762 = vunpack.c.l.b16 %v341
    %v2763 = vunpack.c.h.b16 %v341
    %v2764 = vunpack.c.l.b16 %v342
    %v2765 = vunpack.c.h.b16 %v342
    %v2766 = vunpack.c.l.b16 %v343
    %v2767 = vunpack.c.h.b16 %v343
    %v2768 = vunpack.c.l.b16 %v344
    %v2769 = vunpack.c.h.b16 %v344
    %v2770 = vunpack.c.l.b16 %v345
    %v2771 = vunpack.c.h.b16 %v345
    %v2772 = vunpack.c.l.b16 %v346
    %v2773 = vunpack.c.h.b16 %v346
    %v2774 = vunpack.c.l.b16 %v347
    %v2775 = vunpack.c.h.b16 %v347
    %v2776 = vunpack.c.l.b16 %v348
    %v2777 = vunpack.c.h.b16 %v348
    %v2778 = vunpack.c.l.b16 %v349
    %v2779 = vunpack.c.h.b16 %v349
    %v2780 = vunpack.c.l.b16 %v350
    %v2781 = vunpack.c.h.b16 %v350
    %v2782 = vunpack.c.l.b16 %v351
    %v2783 = vunpack.c.h.b16 %v351
    %v2784 = vunpack.c.l.b16 %v352
    %v2785 = vunpack.c.h.b16 %v352
    %v2786 = vunpack.c.l.b16 %v353
    %v2787 = vunpack.c.h.b16 %v353
    %v2788 = vunpack.c.l.b16 %v354
    %v2789 = vunpack.c.h.b16 %v354
    %v2790 = vunpack.c.l.b16 %v355
    %v2791 = vunpack.c.h.b16 %v355
    %v2792 = vunpack.c.l.b16 %v356
    %v2793 = vunpack.c.h.b16 %v356
    %v2794 = vunpack.c.l.b16 %v357
    %v2795 = vunpack.c.h.b16 %v357
    %v2796 = vunpack.c.l.b16 %v358
    %v2797 = vunpack.c.h.b16 %v358
    %v2798 = vunpack.c.l.b16 %v359
    %v2799 = vunpack.c.h.b16 %v359
    %v2800 = vunpack.c.l.b16 %v360
    %v2801 = vunpack.c.h.b16 %v360
    %v2802 = vunpack.c.l.b16 %v361
    %v2803 = vunpack.c.h.b16 %v361
    %v2804 = vunpack.c.l.b16 %v362
    %v2805 = vunpack.c.h.b16 %v362
    %v2806 = vunpack.c.l.b16 %v363
    %v2807 = vunpack.c.h.b16 %v363
    %v2808 = vunpack.c.l.b16 %v364
    %v2809 = vunpack.c.h.b16 %v364
    %v2810 = vunpack.c.l.b16 %v365
    %v2811 = vunpack.c.h.b16 %v365
    %v2812 = vunpack.c.l.b16 %v366
    %v2813 = vunpack.c.h.b16 %v366
    %v2814 = vunpack.c.l.b16 %v367
    %v2815 = vunpack.c.h.b16 %v367
    %v2816 = vunpack.c.l.b16 %v368
    %v2817 = vunpack.c.h.b16 %v368
    %v2818 = vunpack.c.l.b16 %v369
    %v2819 = vunpack.c.h.b16 %v369
    %v2820 = vunpack.c.l.b16 %v370
    %v2821 = vunpack.c.h.b16 %v370
    %v2822 = vunpack.c.l.b16 %v371
    %v2823 = vunpack.c.h.b16 %v371
    %v2824 = vunpack.c.l.b16 %v372
    %v2825 = vunpack.c.h.b16 %v372
    %v2826 = vunpack.c.l.b16 %v373
    %v2827 = vunpack.c.h.b16 %v373
    %v2828 = vunpack.c.l.b16 %v374
    %v2829 = vunpack.c.h.b16 %v374
    %v2830 = vunpack.c.l.b16 %v375
    %v2831 = vunpack.c.h.b16 %v375
    %v2832 = vunpack.c.l.b16 %v376
    %v2833 = vunpack.c.h.b16 %v376
    %v2834 = vunpack.c.l.b16 %v377
    %v2835 = vunpack.c.h.b16 %v377
    %v2836 = vunpack.c.l.b16 %v378
    %v2837 = vunpack.c.h.b16 %v378
    %v2838 = vunpack.c.l.b16 %v379
    %v2839 = vunpack.c.h.b16 %v379
    %v2840 = vunpack.c.l.b16 %v380
    %v2841 = vunpack.c.h.b16 %v380
    %v2842 = vunpack.c.l.b16 %v381
    %v2843 = vunpack.c.h.b16 %v381
    %v2844 = vunpack.c.l.b16 %v382
    %v2845 = vunpack.c.h.b16 %v382
    %v2846 = vunpack.c.l.b16 %v383
    %v2847 = vunpack.c.h.b16 %v383
    %v2848 = vunpack.c.l.b16 %v384
    %v2849 = vunpack.c.h.b16 %v384
    %v2850 = vunpack.c.l.b16 %v385
    %v2851 = vunpack.c.h.b16 %v385
    %v2852 = vunpack.c.l.b16 %v386
    %v2853 = vunpack.c.h.b16 %v386
    %v2854 = vunpack.c.l.b16 %v387
    %v2855 = vunpack.c.h.b16 %v387
    %v2856 = vunpack.c.l.b16 %v388
    %v2857 = vunpack.c.h.b16 %v388
    %v2858 = vunpack.c.l.b16 %v389
    %v2859 = vunpack.c.h.b16 %v389
    %v2860 = vunpack.c.l.b16 %v390
    %v2861 = vunpack.c.h.b16 %v390
    %v2862 = vunpack.c.l.b16 %v391
    %v2863 = vunpack.c.h.b16 %v391
    %v2864 = vunpack.c.l.b16 %v392
    %v2865 = vunpack.c.h.b16 %v392
    %v2866 = vunpack.c.l.b16 %v393
    %v2867 = vunpack.c.h.b16 %v393
    %v2868 = vunpack.c.l.b16 %v394
    %v2869 = vunpack.c.h.b16 %v394
    %v2870 = vunpack.c.l.b16 %v395
    %v2871 = vunpack.c.h.b16 %v395
    %v2872 = vunpack.c.l.b16 %v396
    %v2873 = vunpack.c.h.b16 %v396
    %v2874 = vunpack.c.l.b16 %v397
    %v2875 = vunpack.c.h.b16 %v397
    %v2876 = vunpack.c.l.b16 %v398
    %v2877 = vunpack.c.h.b16 %v398
    %v2878 = vunpack.c.l.b16 %v399
    %v2879 = vunpack.c.h.b16 %v399
    %v2880 = vunpack.c.l.b16 %v400
    %v2881 = vunpack.c.h.b16 %v400
    %v2882 = vunpack.c.l.b16 %v401
    %v2883 = vunpack.c.h.b16 %v401
    %v2884 = vunpack.c.l.b16 %v402
    %v2885 = vunpack.c.h.b16 %v402
    %v2886 = vunpack.c.l.b16 %v403
    %v2887 = vunpack.c.h.b16 %v403
    %v2888 = vunpack.c.l.b16 %v404
    %v2889 = vunpack.c.h.b16 %v404
    %v2890 = vunpack.c.l.b16 %v405
    %v2891 = vunpack.c.h.b16 %v405
    %v2892 = vunpack.c.l.b16 %v406
    %v2893 = vunpack.c.h.b16 %v406
    %v2894 = vunpack.c.l.b16 %v407
    %v2895 = vunpack.c.h.b16 %v407
    %v2896 = vunpack.c.l.b16 %v408
    %v2897 = vunpack.c.h.b16 %v408
    %v2898 = vunpack.c.l.b16 %v409
    %v2899 = vunpack.c.h.b16 %v409
    %v2900 = vunpack.c.l.b16 %v410
    %v2901 = vunpack.c.h.b16 %v410
    %v2902 = vunpack.c.l.b16 %v411
    %v2903 = vunpack.c.h.b16 %v411
    %v2904 = vunpack.c.l.b16 %v412
    %v2905 = vunpack.c.h.b16 %v412
    %v2906 = vunpack.c.l.b16 %v413
    %v2907 = vunpack.c.h.b16 %v413
    %v2908 = vunpack.c.l.b16 %v414
    %v2909 = vunpack.c.h.b16 %v414
    %v2910 = vunpack.c.l.b16 %v415
    %v2911 = vunpack.c.h.b16 %v415
    %v2912 = vunpack.c.l.b16 %v416
    %v2913 = vunpack.c.h.b16 %v416
    %v2914 = vunpack.c.l.b16 %v417
    %v2915 = vunpack.c.h.b16 %v417
    %v2916 = vunpack.c.l.b16 %v418
    %v2917 = vunpack.c.h.b16 %v418
    %v2918 = vunpack.c.l.b16 %v419
    %v2919 = vunpack.c.h.b16 %v419
    %v2920 = vunpack.c.l.b16 %v420
    %v2921 = vunpack.c.h.b16 %v420
    %v2922 = vunpack.c.l.b16 %v421
    %v2923 = vunpack.c.h.b16 %v421
    %v2924 = vunpack.c.l.b16 %v422
    %v2925 = vunpack.c.h.b16 %v422
    %v2926 = vunpack.c.l.b16 %v423
    %v2927 = vunpack.c.h.b16 %v423
    %v2928 = vunpack.c.l.b16 %v424
    %v2929 = vunpack.c.h.b16 %v424
    %v2930 = vunpack.c.l.b16 %v425
    %v2931 = vunpack.c.h.b16 %v425
    %v2932 = vunpack.c.l.b16 %v426
    %v2933 = vunpack.c.h.b16 %v426
    %v2934 = vunpack.c.l.b16 %v427
    %v2935 = vunpack.c.h.b16 %v427
    %v2936 = vunpack.c.l.b16 %v428
    %v2937 = vunpack.c.h.b16 %v428
    %v2938 = vunpack.c.l.b16 %v429
    %v2939 = vunpack.c.h.b16 %v429
    %v2940 = vunpack.c.l.b16 %v430
    %v2941 = vunpack.c.h.b16 %v430
    %v2942 = vunpack.c.l.b16 %v431
    %v2943 = vunpack.c.h.b16 %v431
    %v2944 = vunpack.c.l.b16 %v432
    %v2945 = vunpack.c.h.b16 %v432
    %v2946 = vunpack.c.l.b16 %v433
    %v2947 = vunpack.c.h.b16 %v433
    %v2948 = vunpack.c.l.b16 %v434
    %v2949 = vunpack.c.h.b16 %v434
    %v2950 = vunpack.c.l.b16 %v435
    %v2951 = vunpack.c.h.b16 %v435
    %v2952 = vunpack.c.l.b16 %v436
    %v2953 = vunpack.c.h.b16 %v436
    %v2954 = vunpack.c.l.b16 %v437
    %v2955 = vunpack.c.h.b16 %v437
    %v2956 = vunpack.c.l.b16 %v438
    %v2957 = vunpack.c.h.b16 %v438
    %v2958 = vunpack.c.l.b16 %v439
    %v2959 = vunpack.c.h.b16 %v439
    %v2960 = vunpack.c.l.b16 %v440
    %v2961 = vunpack.c.h.b16 %v440
    %v2962 = vunpack.c.l.b16 %v441
    %v2963 = vunpack.c.h.b16 %v441
    %v2964 = vunpack.c.l.b16 %v442
    %v2965 = vunpack.c.h.b16 %v442
    %v2966 = vunpack.c.l.b16 %v443
    %v2967 = vunpack.c.h.b16 %v443
    %v2968 = vunpack.c.l.b16 %v444
    %v2969 = vunpack.c.h.b16 %v444
    %v2970 = vunpack.c.l.b16 %v445
    %v2971 = vunpack.c.h.b16 %v445
    %v2972 = vunpack.c.l.b16 %v446
    %v2973 = vunpack.c.h.b16 %v446
    %v2974 = vunpack.c.l.b16 %v447
    %v2975 = vunpack.c.h.b16 %v447
    %v2976 = vunpack.c.l.b16 %v448
    %v2977 = vunpack.c.h.b16 %v448
    %v2978 = vunpack.c.l.b16 %v449
    %v2979 = vunpack.c.h.b16 %v449
    %v2980 = vunpack.c.l.b16 %v450
    %v2981 = vunpack.c.h.b16 %v450
    %v2982 = vunpack.c.l.b16 %v451
    %v2983 = vunpack.c.h.b16 %v451
    %v2984 = vunpack.c.l.b16 %v452
    %v2985 = vunpack.c.h.b16 %v452
    %v2986 = vunpack.c.l.b16 %v453
    %v2987 = vunpack.c.h.b16 %v453
    %v2988 = vunpack.c.l.b16 %v454
    %v2989 = vunpack.c.h.b16 %v454
    %v2990 = vunpack.c.l.b16 %v455
    %v2991 = vunpack.c.h.b16 %v455
    %v2992 = vunpack.c.l.b16 %v456
    %v2993 = vunpack.c.h.b16 %v456
    %v2994 = vunpack.c.l.b16 %v457
    %v2995 = vunpack.c.h.b16 %v457
    %v2996 = vunpack.c.l.b16 %v458
    %v2997 = vunpack.c.h.b16 %v458
    %v2998 = vunpack.c.l.b16 %v459
    %v2999 = vunpack.c.h.b16 %v459
    %v3000 = vunpack.c.l.b16 %v460
    %v3001 = vunpack.c.h.b16 %v460
    %v3002 = vunpack.c.l.b16 %v461
    %v3003 = vunpack.c.h.b16 %v461
    %v3004 = vunpack.c.l.b16 %v462
    %v3005 = vunpack.c.h.b16 %v462
    %v3006 = vunpack.c.l.b16 %v463
    %v3007 = vunpack.c.h.b16 %v463
    %v3008 = vunpack.c.l.b16 %v464
    %v3009 = vunpack.c.h.b16 %v464
    %v3010 = vunpack.c.l.b16 %v465
    %v3011 = vunpack.c.h.b16 %v465
    %v3012 = vunpack.c.l.b16 %v466
    %v3013 = vunpack.c.h.b16 %v466
    %v3014 = vunpack.c.l.b16 %v467
    %v3015 = vunpack.c.h.b16 %v467
    %v3016 = vunpack.c.l.b16 %v468
    %v3017 = vunpack.c.h.b16 %v468
    %v3018 = vunpack.c.l.b16 %v469
    %v3019 = vunpack.c.h.b16 %v469
    %v3020 = vunpack.c.l.b16 %v470
    %v3021 = vunpack.c.h.b16 %v470
    %v3022 = vunpack.c.l.b16 %v471
    %v3023 = vunpack.c.h.b16 %v471
    %v3024 = vunpack.c.l.b16 %v472
    %v3025 = vunpack.c.h.b16 %v472
    %v3026 = vunpack.c.l.b16 %v473
    %v3027 = vunpack.c.h.b16 %v473
    %v3028 = vunpack.c.l.b16 %v474
    %v3029 = vunpack.c.h.b16 %v474
    %v3030 = vunpack.c.l.b16 %v475
    %v3031 = vunpack.c.h.b16 %v475
    %v3032 = vunpack.c.l.b16 %v476
    %v3033 = vunpack.c.h.b16 %v476
    %v3034 = vunpack.c.l.b16 %v477
    %v3035 = vunpack.c.h.b16 %v477
    %v3036 = vunpack.c.l.b16 %v478
    %v3037 = vunpack.c.h.b16 %v478
    %v3038 = vunpack.c.l.b16 %v479
    %v3039 = vunpack.c.h.b16 %v479
    %v3040 = vunpack.c.l.b16 %v480
    %v3041 = vunpack.c.h.b16 %v480
    %v3042 = vunpack.c.l.b16 %v481
    %v3043 = vunpack.c.h.b16 %v481
    %v3044 = vunpack.c.l.b16 %v482
    %v3045 = vunpack.c.h.b16 %v482
    %v3046 = vunpack.c.l.b16 %v483
    %v3047 = vunpack.c.h.b16 %v483
    %v3048 = vunpack.c.l.b16 %v484
    %v3049 = vunpack.c.h.b16 %v484
    %v3050 = vunpack.c.l.b16 %v485
    %v3051 = vunpack.c.h.b16 %v485
    %v3052 = vunpack.c.l.b16 %v486
    %v3053 = vunpack.c.h.b16 %v486
    %v3054 = vunpack.c.l.b16 %v487
    %v3055 = vunpack.c.h.b16 %v487
    %v3056 = vunpack.c.l.b16 %v488
    %v3057 = vunpack.c.h.b16 %v488
    %v3058 = vunpack.c.l.b16 %v489
    %v3059 = vunpack.c.h.b16 %v489
    %v3060 = vunpack.c.l.b16 %v490
    %v3061 = vunpack.c.h.b16 %v490
    %v3062 = vunpack.c.l.b16 %v491
    %v3063 = vunpack.c.h.b16 %v491
    %v3064 = vunpack.c.l.b16 %v492
    %v3065 = vunpack.c.h.b16 %v492
    %v3066 = vunpack.c.l.b16 %v493
    %v3067 = vunpack.c.h.b16 %v493
    %v3068 = vunpack.c.l.b16 %v494
    %v3069 = vunpack.c.h.b16 %v494
    %v3070 = vunpack.c.l.b16 %v495
    %v3071 = vunpack.c.h.b16 %v495
    %v3072 = vunpack.c.l.b16 %v496
    %v3073 = vunpack.c.h.b16 %v496
    %v3074 = vunpack.c.l.b16 %v497
    %v3075 = vunpack.c.h.b16 %v497
    %v3076 = vunpack.c.l.b16 %v498
    %v3077 = vunpack.c.h.b16 %v498
    %v3078 = vunpack.c.l.b16 %v499
    %v3079 = vunpack.c.h.b16 %v499
    %v3080 = vunpack.c.l.b16 %v500
    %v3081 = vunpack.c.h.b16 %v500
    %v3082 = vunpack.c.l.b16 %v501
    %v3083 = vunpack.c.h.b16 %v501
    %v3084 = vunpack.c.l.b16 %v502
    %v3085 = vunpack.c.h.b16 %v502
    %v3086 = vunpack.c.l.b16 %v503
    %v3087 = vunpack.c.h.b16 %v503
    %v3088 = vunpack.c.l.b16 %v504
    %v3089 = vunpack.c.h.b16 %v504
    %v3090 = vunpack.c.l.b16 %v505
    %v3091 = vunpack.c.h.b16 %v505
    %v3092 = vunpack.c.l.b16 %v506
    %v3093 = vunpack.c.h.b16 %v506
    %v3094 = vunpack.c.l.b16 %v507
    %v3095 = vunpack.c.h.b16 %v507
    %v3096 = vunpack.c.l.b16 %v508
    %v3097 = vunpack.c.h.b16 %v508
    %v3098 = vunpack.c.l.b16 %v509
    %v3099 = vunpack.c.h.b16 %v509
    %v3100 = vunpack.c.l.b16 %v510
    %v3101 = vunpack.c.h.b16 %v510
    %v3102 = vunpack.c.l.b16 %v511
    %v3103 = vunpack.c.h.b16 %v511
    %v3104 = vunpack.c.l.b16 %v512
    %v3105 = vunpack.c.h.b16 %v512
    %v3106 = vunpack.c.l.b16 %v513
    %v3107 = vunpack.c.h.b16 %v513
    %v3108 = vunpack.c.l.b16 %v514
    %v3109 = vunpack.c.h.b16 %v514
    %v3110 = vunpack.c.l.b16 %v515
    %v3111 = vunpack.c.h.b16 %v515
    %v3112 = vunpack.c.l.b16 %v516
    %v3113 = vunpack.c.h.b16 %v516
    %v3114 = vunpack.c.l.b16 %v517
    %v3115 = vunpack.c.h.b16 %v517
    %v3116 = vunpack.c.l.b16 %v518
    %v3117 = vunpack.c.h.b16 %v518
    %v3118 = vunpack.c.l.b16 %v519
    %v3119 = vunpack.c.h.b16 %v519
    %v3120 = vunpack.c.l.b16 %v520
    %v3121 = vunpack.c.h.b16 %v520
    %v3122 = vunpack.c.l.b16 %v521
    %v3123 = vunpack.c.h.b16 %v521
    %v3124 = vunpack.c.l.b16 %v522
    %v3125 = vunpack.c.h.b16 %v522
    %v3126 = vunpack.c.l.b16 %v523
    %v3127 = vunpack.c.h.b16 %v523
    %v3128 = vunpack.c.l.b16 %v524
    %v3129 = vunpack.c.h.b16 %v524
    %v3130 = vunpack.c.l.b16 %v525
    %v3131 = vunpack.c.h.b16 %v525
    %v3132 = vunpack.c.l.b16 %v526
    %v3133 = vunpack.c.h.b16 %v526
    %v3134 = vunpack.c.l.b16 %v527
    %v3135 = vunpack.c.h.b16 %v527
    %v3136 = vunpack.c.l.b16 %v528
    %v3137 = vunpack.c.h.b16 %v528
    %v3138 = vunpack.c.l.b16 %v529
    %v3139 = vunpack.c.h.b16 %v529
    %v3140 = vunpack.c.l.b16 %v530
    %v3141 = vunpack.c.h.b16 %v530
    %v3142 = vunpack.c.l.b16 %v531
    %v3143 = vunpack.c.h.b16 %v531
    %v3144 = vunpack.c.l.b16 %v532
    %v3145 = vunpack.c.h.b16 %v532
    %v3146 = vunpack.c.l.b16 %v533
    %v3147 = vunpack.c.h.b16 %v533
    %v3148 = vunpack.c.l.b16 %v534
    %v3149 = vunpack.c.h.b16 %v534
    %v3150 = vunpack.c.l.b16 %v535
    %v3151 = vunpack.c.h.b16 %v535
    %v3152 = vunpack.c.l.b16 %v536
    %v3153 = vunpack.c.h.b16 %v536
    %v3154 = vunpack.c.l.b16 %v537
    %v3155 = vunpack.c.h.b16 %v537
    %v3156 = vunpack.c.l.b16 %v538
    %v3157 = vunpack.c.h.b16 %v538
    %v3158 = vunpack.c.l.b16 %v539
    %v3159 = vunpack.c.h.b16 %v539
    %v3160 = vunpack.c.l.b16 %v540
    %v3161 = vunpack.c.h.b16 %v540
    %v3162 = vunpack.c.l.b16 %v541
    %v3163 = vunpack.c.h.b16 %v541
    %v3164 = vunpack.c.l.b16 %v542
    %v3165 = vunpack.c.h.b16 %v542
    %v3166 = vunpack.c.l.b16 %v543
    %v3167 = vunpack.c.h.b16 %v543
    %v3168 = vunpack.c.l.b16 %v544
    %v3169 = vunpack.c.h.b16 %v544
    %v3170 = vunpack.c.l.b16 %v545
    %v3171 = vunpack.c.h.b16 %v545
    %v3172 = vunpack.c.l.b16 %v546
    %v3173 = vunpack.c.h.b16 %v546
    %v3174 = vunpack.c.l.b16 %v547
    %v3175 = vunpack.c.h.b16 %v547
    %v3176 = vunpack.c.l.b16 %v548
    %v3177 = vunpack.c.h.b16 %v548
    %v3178 = vunpack.c.l.b16 %v549
    %v3179 = vunpack.c.h.b16 %v549
    %v3180 = vunpack.c.l.b16 %v550
    %v3181 = vunpack.c.h.b16 %v550
    %v3182 = vunpack.c.l.b16 %v551
    %v3183 = vunpack.c.h.b16 %v551
    %v3184 = vunpack.c.l.b16 %v552
    %v3185 = vunpack.c.h.b16 %v552
    %v3186 = vunpack.c.l.b16 %v553
    %v3187 = vunpack.c.h.b16 %v553
    %v3188 = vunpack.c.l.b16 %v554
    %v3189 = vunpack.c.h.b16 %v554
    %v3190 = vunpack.c.l.b16 %v555
    %v3191 = vunpack.c.h.b16 %v555
    %v3192 = vunpack.c.l.b16 %v556
    %v3193 = vunpack.c.h.b16 %v556
    %v3194 = vunpack.c.l.b16 %v557
    %v3195 = vunpack.c.h.b16 %v557
    %v3196 = vunpack.c.l.b16 %v558
    %v3197 = vunpack.c.h.b16 %v558
    %v3198 = vunpack.c.l.b16 %v559
    %v3199 = vunpack.c.h.b16 %v559
    %v3200 = vunpack.c.l.b16 %v560
    %v3201 = vunpack.c.h.b16 %v560
    %v3202 = vunpack.c.l.b16 %v561
    %v3203 = vunpack.c.h.b16 %v561
    %v3204 = vunpack.c.l.b16 %v562
    %v3205 = vunpack.c.h.b16 %v562
    %v3206 = vunpack.c.l.b16 %v563
    %v3207 = vunpack.c.h.b16 %v563
    %v3208 = vunpack.c.l.b16 %v564
    %v3209 = vunpack.c.h.b16 %v564
    %v3210 = vunpack.c.l.b16 %v565
    %v3211 = vunpack.c.h.b16 %v565
    %v3212 = vunpack.c.l.b16 %v566
    %v3213 = vunpack.c.h.b16 %v566
    %v3214 = vunpack.c.l.b16 %v567
    %v3215 = vunpack.c.h.b16 %v567
    %v3216 = vunpack.c.l.b16 %v568
    %v3217 = vunpack.c.h.b16 %v568
    %v3218 = vunpack.c.l.b16 %v569
    %v3219 = vunpack.c.h.b16 %v569
    %v3220 = vunpack.c.l.b16 %v570
    %v3221 = vunpack.c.h.b16 %v570
    %v3222 = vunpack.c.l.b16 %v571
    %v3223 = vunpack.c.h.b16 %v571
    %v3224 = vunpack.c.l.b16 %v572
    %v3225 = vunpack.c.h.b16 %v572
    %v3226 = vunpack.c.l.b16 %v573
    %v3227 = vunpack.c.h.b16 %v573
    %v3228 = vunpack.c.l.b16 %v574
    %v3229 = vunpack.c.h.b16 %v574
    %v3230 = vunpack.c.l.b16 %v575
    %v3231 = vunpack.c.h.b16 %v575
    %v3232 = vunpack.c.l.b16 %v576
    %v3233 = vunpack.c.h.b16 %v576
    %v3234 = vunpack.c.l.b16 %v577
    %v3235 = vunpack.c.h.b16 %v577
    %v3236 = vunpack.c.l.b16 %v578
    %v3237 = vunpack.c.h.b16 %v578
    %v3238 = vunpack.c.l.b16 %v579
    %v3239 = vunpack.c.h.b16 %v579
    %v3240 = vunpack.c.l.b16 %v580
    %v3241 = vunpack.c.h.b16 %v580
    %v3242 = vunpack.c.l.b16 %v581
    %v3243 = vunpack.c.h.b16 %v581
    %v3244 = vunpack.c.l.b16 %v582
    %v3245 = vunpack.c.h.b16 %v582
    %v3246 = vunpack.c.l.b16 %v583
    %v3247 = vunpack.c.h.b16 %v583
    %v3248 = vunpack.c.l.b16 %v584
    %v3249 = vunpack.c.h.b16 %v584
    %v3250 = vunpack.c.l.b16 %v585
    %v3251 = vunpack.c.h.b16 %v585
    %v3252 = vunpack.c.l.b16 %v586
    %v3253 = vunpack.c.h.b16 %v586
    %v3254 = vunpack.c.l.b16 %v587
    %v3255 = vunpack.c.h.b16 %v587
    %v3256 = vunpack.c.l.b16 %v588
    %v3257 = vunpack.c.h.b16 %v588
    %v3258 = vunpack.c.l.b16 %v589
    %v3259 = vunpack.c.h.b16 %v589
    %v3260 = vunpack.c.l.b16 %v590
    %v3261 = vunpack.c.h.b16 %v590
    %v3262 = vunpack.c.l.b16 %v591
    %v3263 = vunpack.c.h.b16 %v591
    %v3264 = vunpack.c.l.b16 %v592
    %v3265 = vunpack.c.h.b16 %v592
    %v3266 = vunpack.c.l.b16 %v593
    %v3267 = vunpack.c.h.b16 %v593
    %v3268 = vunpack.c.l.b16 %v594
    %v3269 = vunpack.c.h.b16 %v594
    %v3270 = vunpack.c.l.b16 %v595
    %v3271 = vunpack.c.h.b16 %v595
    %v3272 = vunpack.c.l.b16 %v596
    %v3273 = vunpack.c.h.b16 %v596
    %v3274 = vunpack.c.l.b16 %v597
    %v3275 = vunpack.c.h.b16 %v597
    %v3276 = vunpack.c.l.b16 %v598
    %v3277 = vunpack.c.h.b16 %v598
    %v3278 = vunpack.c.l.b16 %v599
    %v3279 = vunpack.c.h.b16 %v599
    %v3280 = vunpack.c.l.b16 %v600
    %v3281 = vunpack.c.h.b16 %v600
    %v3282 = vunpack.c.l.b16 %v601
    %v3283 = vunpack.c.h.b16 %v601
    %v3284 = vunpack.c.l.b16 %v602
    %v3285 = vunpack.c.h.b16 %v602
    %v3286 = vunpack.c.l.b16 %v603
    %v3287 = vunpack.c.h.b16 %v603
    %v3288 = vunpack.c.l.b16 %v604
    %v3289 = vunpack.c.h.b16 %v604
    %v3290 = vunpack.c.l.b16 %v605
    %v3291 = vunpack.c.h.b16 %v605
    %v3292 = vunpack.c.l.b16 %v606
    %v3293 = vunpack.c.h.b16 %v606
    %v3294 = vunpack.c.l.b16 %v607
    %v3295 = vunpack.c.h.b16 %v607
    %v3296 = vunpack.c.l.b16 %v608
    %v3297 = vunpack.c.h.b16 %v608
    %v3298 = vunpack.c.l.b16 %v609
    %v3299 = vunpack.c.h.b16 %v609
    %v3300 = vunpack.c.l.b16 %v610
    %v3301 = vunpack.c.h.b16 %v610
    %v3302 = vunpack.c.l.b16 %v611
    %v3303 = vunpack.c.h.b16 %v611
    %v3304 = vunpack.c.l.b16 %v612
    %v3305 = vunpack.c.h.b16 %v612
    %v3306 = vunpack.c.l.b16 %v613
    %v3307 = vunpack.c.h.b16 %v613
    %v3308 = vunpack.c.l.b16 %v614
    %v3309 = vunpack.c.h.b16 %v614
    %v3310 = vunpack.c.l.b16 %v615
    %v3311 = vunpack.c.h.b16 %v615
    %v3312 = vunpack.c.l.b16 %v616
    %v3313 = vunpack.c.h.b16 %v616
    %v3314 = vunpack.c.l.b16 %v617
    %v3315 = vunpack.c.h.b16 %v617
    %v3316 = vunpack.c.l.b16 %v618
    %v3317 = vunpack.c.h.b16 %v618
    %v3318 = vunpack.c.l.b16 %v619
    %v3319 = vunpack.c.h.b16 %v619
    %v3320 = vunpack.c.l.b16 %v620
    %v3321 = vunpack.c.h.b16 %v620
    %v3322 = vunpack.c.l.b16 %v621
    %v3323 = vunpack.c.h.b16 %v621
    %v3324 = vunpack.c.l.b16 %v622
    %v3325 = vunpack.c.h.b16 %v622
    %v3326 = vunpack.c.l.b16 %v623
    %v3327 = vunpack.c.h.b16 %v623
    %v3328 = vunpack.c.l.b16 %v624
    %v3329 = vunpack.c.h.b16 %v624
    %v3330 = vunpack.c.l.b16 %v625
    %v3331 = vunpack.c.h.b16 %v625
    %v3332 = vunpack.c.l.b16 %v626
    %v3333 = vunpack.c.h.b16 %v626
    %v3334 = vunpack.c.l.b16 %v627
    %v3335 = vunpack.c.h.b16 %v627
    %v3336 = vunpack.c.l.b16 %v628
    %v3337 = vunpack.c.h.b16 %v628
    %v3338 = vunpack.c.l.b16 %v629
    %v3339 = vunpack.c.h.b16 %v629
    %v3340 = vunpack.c.l.b16 %v630
    %v3341 = vunpack.c.h.b16 %v630
    %v3342 = vunpack.c.l.b16 %v631
    %v3343 = vunpack.c.h.b16 %v631
    %v3344 = vunpack.c.l.b16 %v632
    %v3345 = vunpack.c.h.b16 %v632
    %v3346 = vunpack.c.l.b16 %v633
    %v3347 = vunpack.c.h.b16 %v633
    %v3348 = vunpack.c.l.b16 %v634
    %v3349 = vunpack.c.h.b16 %v634
    %v3350 = vunpack.c.l.b16 %v635
    %v3351 = vunpack.c.h.b16 %v635
    %v3352 = vunpack.c.l.b16 %v636
    %v3353 = vunpack.c.h.b16 %v636
    %v3354 = vunpack.c.l.b16 %v637
    %v3355 = vunpack.c.h.b16 %v637
    %v3356 = vunpack.c.l.b16 %v638
    %v3357 = vunpack.c.h.b16 %v638
    %v3358 = vunpack.c.l.b16 %v639
    %v3359 = vunpack.c.h.b16 %v639
    %v3360 = vunpack.c.l.b16 %v640
    %v3361 = vunpack.c.h.b16 %v640
    %v3362 = vunpack.c.l.b16 %v641
    %v3363 = vunpack.c.h.b16 %v641
    %v3364 = vunpack.c.l.b16 %v642
    %v3365 = vunpack.c.h.b16 %v642
    %v3366 = vunpack.c.l.b16 %v643
    %v3367 = vunpack.c.h.b16 %v643
    %v3368 = vunpack.c.l.b16 %v644
    %v3369 = vunpack.c.h.b16 %v644
    %v3370 = vunpack.c.l.b16 %v645
    %v3371 = vunpack.c.h.b16 %v645
    %v3372 = vunpack.c.l.b16 %v646
    %v3373 = vunpack.c.h.b16 %v646
    %v3374 = vunpack.c.l.b16 %v647
    %v3375 = vunpack.c.h.b16 %v647
    %v3376 = vunpack.c.l.b16 %v648
    %v3377 = vunpack.c.h.b16 %v648
    %v3378 = vunpack.c.l.b16 %v649
    %v3379 = vunpack.c.h.b16 %v649
    %v3380 = vunpack.c.l.b16 %v650
    %v3381 = vunpack.c.h.b16 %v650
    %v3382 = vunpack.c.l.b16 %v651
    %v3383 = vunpack.c.h.b16 %v651
    %v3384 = vunpack.c.l.b16 %v652
    %v3385 = vunpack.c.h.b16 %v652
    %v3386 = vunpack.c.l.b16 %v653
    %v3387 = vunpack.c.h.b16 %v653
    %v3388 = vunpack.c.l.b16 %v654
    %v3389 = vunpack.c.h.b16 %v654
    %v3390 = vunpack.c.l.b16 %v655
    %v3391 = vunpack.c.h.b16 %v655
    %v3392 = vunpack.c.l.b16 %v656
    %v3393 = vunpack.c.h.b16 %v656
    %v3394 = vunpack.c.l.b16 %v657
    %v3395 = vunpack.c.h.b16 %v657
    %v3396 = vunpack.c.l.b16 %v658
    %v3397 = vunpack.c.h.b16 %v658
    %v3398 = vunpack.c.l.b16 %v659
    %v3399 = vunpack.c.h.b16 %v659
    %v3400 = vunpack.c.l.b16 %v660
    %v3401 = vunpack.c.h.b16 %v660
    %v3402 = vunpack.c.l.b16 %v661
    %v3403 = vunpack.c.h.b16 %v661
    %v3404 = vunpack.c.l.b16 %v662
    %v3405 = vunpack.c.h.b16 %v662
    %v3406 = vunpack.c.l.b16 %v663
    %v3407 = vunpack.c.h.b16 %v663
    %v3408 = vunpack.c.l.b16 %v664
    %v3409 = vunpack.c.h.b16 %v664
    %v3410 = vunpack.c.l.b16 %v665
    %v3411 = vunpack.c.h.b16 %v665
    %v3412 = vunpack.c.l.b16 %v666
    %v3413 = vunpack.c.h.b16 %v666
    %v3414 = vunpack.c.l.b16 %v667
    %v3415 = vunpack.c.h.b16 %v667
    %v3416 = vunpack.c.l.b16 %v668
    %v3417 = vunpack.c.h.b16 %v668
    %v3418 = vunpack.c.l.b16 %v669
    %v3419 = vunpack.c.h.b16 %v669
    %v3420 = vunpack.c.l.b16 %v670
    %v3421 = vunpack.c.h.b16 %v670
    %v3422 = vunpack.c.l.b16 %v671
    %v3423 = vunpack.c.h.b16 %v671
    %v3424 = vunpack.c.l.b16 %v672
    %v3425 = vunpack.c.h.b16 %v672
    %v3426 = vunpack.c.l.b16 %v673
    %v3427 = vunpack.c.h.b16 %v673
    %v3428 = vunpack.c.l.b16 %v674
    %v3429 = vunpack.c.h.b16 %v674
    %v3430 = vunpack.c.l.b16 %v675
    %v3431 = vunpack.c.h.b16 %v675
    %v3432 = vunpack.c.l.b16 %v676
    %v3433 = vunpack.c.h.b16 %v676
    %v3434 = vunpack.c.l.b16 %v677
    %v3435 = vunpack.c.h.b16 %v677
    %v3436 = vunpack.c.l.b16 %v678
    %v3437 = vunpack.c.h.b16 %v678
    %v3438 = vunpack.c.l.b16 %v679
    %v3439 = vunpack.c.h.b16 %v679
    %v3440 = vunpack.c.l.b16 %v680
    %v3441 = vunpack.c.h.b16 %v680
    %v3442 = vunpack.c.l.b16 %v681
    %v3443 = vunpack.c.h.b16 %v681
    %v3444 = vunpack.c.l.b16 %v682
    %v3445 = vunpack.c.h.b16 %v682
    %v3446 = vunpack.c.l.b16 %v683
    %v3447 = vunpack.c.h.b16 %v683
    %v3448 = vunpack.c.l.b16 %v684
    %v3449 = vunpack.c.h.b16 %v684
    %v3450 = vunpack.c.l.b16 %v685
    %v3451 = vunpack.c.h.b16 %v685
    %v3452 = vunpack.c.l.b16 %v686
    %v3453 = vunpack.c.h.b16 %v686
    %v3454 = vunpack.c.l.b16 %v687
    %v3455 = vunpack.c.h.b16 %v687
    %v3456 = vunpack.c.l.b16 %v688
    %v3457 = vunpack.c.h.b16 %v688
    %v3458 = vunpack.c.l.b16 %v689
    %v3459 = vunpack.c.h.b16 %v689
    %v3460 = vunpack.c.l.b16 %v690
    %v3461 = vunpack.c.h.b16 %v690
    %v3462 = vunpack.c.l.b16 %v691
    %v3463 = vunpack.c.h.b16 %v691
    %v3464 = vunpack.c.l.b16 %v692
    %v3465 = vunpack.c.h.b16 %v692
    %v3466 = vunpack.c.l.b16 %v693
    %v3467 = vunpack.c.h.b16 %v693
    %v3468 = vunpack.c.l.b16 %v694
    %v3469 = vunpack.c.h.b16 %v694
    %v3470 = vunpack.c.l.b16 %v695
    %v3471 = vunpack.c.h.b16 %v695
    %v3472 = vunpack.c.l.b16 %v696
    %v3473 = vunpack.c.h.b16 %v696
    %v3474 = vunpack.c.l.b16 %v697
    %v3475 = vunpack.c.h.b16 %v697
    %v3476 = vunpack.c.l.b16 %v698
    %v3477 = vunpack.c.h.b16 %v698
    %v3478 = vunpack.c.l.b16 %v699
    %v3479 = vunpack.c.h.b16 %v699
    %v3480 = vunpack.c.l.b16 %v700
    %v3481 = vunpack.c.h.b16 %v700
    %v3482 = vunpack.c.l.b16 %v701
    %v3483 = vunpack.c.h.b16 %v701
    %v3484 = vunpack.c.l.b16 %v702
    %v3485 = vunpack.c.h.b16 %v702
    %v3486 = vunpack.c.l.b16 %v703
    %v3487 = vunpack.c.h.b16 %v703
    %v3488 = vunpack.c.l.b16 %v704
    %v3489 = vunpack.c.h.b16 %v704
    %v3490 = vunpack.c.l.b16 %v705
    %v3491 = vunpack.c.h.b16 %v705
    %v3492 = vunpack.c.l.b16 %v706
    %v3493 = vunpack.c.h.b16 %v706
    %v3494 = vunpack.c.l.b16 %v707
    %v3495 = vunpack.c.h.b16 %v707
    %v3496 = vunpack.c.l.b16 %v708
    %v3497 = vunpack.c.h.b16 %v708
    %v3498 = vunpack.c.l.b16 %v709
    %v3499 = vunpack.c.h.b16 %v709
    %v3500 = vunpack.c.l.b16 %v710
    %v3501 = vunpack.c.h.b16 %v710
    %v3502 = vunpack.c.l.b16 %v711
    %v3503 = vunpack.c.h.b16 %v711
    %v3504 = vunpack.c.l.b16 %v712
    %v3505 = vunpack.c.h.b16 %v712
    %v3506 = vunpack.c.l.b16 %v713
    %v3507 = vunpack.c.h.b16 %v713
    %v3508 = vunpack.c.l.b16 %v714
    %v3509 = vunpack.c.h.b16 %v714
    %v3510 = vunpack.c.l.b16 %v715
    %v3511 = vunpack.c.h.b16 %v715
    %v3512 = vunpack.c.l.b16 %v716
    %v3513 = vunpack.c.h.b16 %v716
    %v3514 = vunpack.c.l.b16 %v717
    %v3515 = vunpack.c.h.b16 %v717
    %v3516 = vunpack.c.l.b16 %v718
    %v3517 = vunpack.c.h.b16 %v718
    %v3518 = vunpack.c.l.b16 %v719
    %v3519 = vunpack.c.h.b16 %v719
    %v3520 = vunpack.c.l.b16 %v720
    %v3521 = vunpack.c.h.b16 %v720
    %v3522 = vunpack.c.l.b16 %v721
    %v3523 = vunpack.c.h.b16 %v721
    %v3524 = vunpack.c.l.b16 %v722
    %v3525 = vunpack.c.h.b16 %v722
    %v3526 = vunpack.c.l.b16 %v723
    %v3527 = vunpack.c.h.b16 %v723
    %v3528 = vunpack.c.l.b16 %v724
    %v3529 = vunpack.c.h.b16 %v724
    %v3530 = vunpack.c.l.b16 %v725
    %v3531 = vunpack.c.h.b16 %v725
    %v3532 = vunpack.c.l.b16 %v726
    %v3533 = vunpack.c.h.b16 %v726
    %v3534 = vunpack.c.l.b16 %v727
    %v3535 = vunpack.c.h.b16 %v727
    %v3536 = vunpack.c.l.b16 %v728
    %v3537 = vunpack.c.h.b16 %v728
    %v3538 = vunpack.c.l.b16 %v729
    %v3539 = vunpack.c.h.b16 %v729
    %v3540 = vunpack.c.l.b16 %v730
    %v3541 = vunpack.c.h.b16 %v730
    %v3542 = vunpack.c.l.b16 %v731
    %v3543 = vunpack.c.h.b16 %v731
    %v3544 = vunpack.c.l.b16 %v732
    %v3545 = vunpack.c.h.b16 %v732
    %v3546 = vunpack.c.l.b16 %v733
    %v3547 = vunpack.c.h.b16 %v733
    %v3548 = vunpack.c.l.b16 %v734
    %v3549 = vunpack.c.h.b16 %v734
    %v3550 = vunpack.c.l.b16 %v735
    %v3551 = vunpack.c.h.b16 %v735
    %v3552 = vunpack.c.l.b16 %v736
    %v3553 = vunpack.c.h.b16 %v736
    %v3554 = vunpack.c.l.b16 %v737
    %v3555 = vunpack.c.h.b16 %v737
    %v3556 = vunpack.c.l.b16 %v738
    %v3557 = vunpack.c.h.b16 %v738
    %v3558 = vunpack.c.l.b16 %v739
    %v3559 = vunpack.c.h.b16 %v739
    %v3560 = vunpack.c.l.b16 %v740
    %v3561 = vunpack.c.h.b16 %v740
    %v3562 = vunpack.c.l.b16 %v741
    %v3563 = vunpack.c.h.b16 %v741
    %v3564 = vunpack.c.l.b16 %v742
    %v3565 = vunpack.c.h.b16 %v742
    %v3566 = vunpack.c.l.b16 %v743
    %v3567 = vunpack.c.h.b16 %v743
    %v3568 = vunpack.c.l.b16 %v744
    %v3569 = vunpack.c.h.b16 %v744
    %v3570 = vunpack.c.l.b16 %v745
    %v3571 = vunpack.c.h.b16 %v745
    %v3572 = vunpack.c.l.b16 %v746
    %v3573 = vunpack.c.h.b16 %v746
    %v3574 = vunpack.c.l.b16 %v747
    %v3575 = vunpack.c.h.b16 %v747
    %v3576 = vunpack.c.l.b16 %v748
    %v3577 = vunpack.c.h.b16 %v748
    %v3578 = vunpack.c.l.b16 %v749
    %v3579 = vunpack.c.h.b16 %v749
    %v3580 = vunpack.c.l.b16 %v750
    %v3581 = vunpack.c.h.b16 %v750
    %v3582 = vunpack.c.l.b16 %v751
    %v3583 = vunpack.c.h.b16 %v751
    %v3584 = vunpack.c.l.b16 %v752
    %v3585 = vunpack.c.h.b16 %v752
    %v3586 = vunpack.c.l.b16 %v753
    %v3587 = vunpack.c.h.b16 %v753
    %v3588 = vunpack.c.l.b16 %v754
    %v3589 = vunpack.c.h.b16 %v754
    %v3590 = vunpack.c.l.b16 %v755
    %v3591 = vunpack.c.h.b16 %v755
    %v3592 = vunpack.c.l.b16 %v756
    %v3593 = vunpack.c.h.b16 %v756
    %v3594 = vunpack.c.l.b16 %v757
    %v3595 = vunpack.c.h.b16 %v757
    %v3596 = vunpack.c.l.b16 %v758
    %v3597 = vunpack.c.h.b16 %v758
    %v3598 = vunpack.c.l.b16 %v759
    %v3599 = vunpack.c.h.b16 %v759
    %v3600 = vunpack.c.l.b16 %v760
    %v3601 = vunpack.c.h.b16 %v760
    %v3602 = vunpack.c.l.b16 %v761
    %v3603 = vunpack.c.h.b16 %v761
    %v3604 = vunpack.c.l.b16 %v762
    %v3605 = vunpack.c.h.b16 %v762
    %v3606 = vunpack.c.l.b16 %v763
    %v3607 = vunpack.c.h.b16 %v763
    %v3608 = vunpack.c.l.b16 %v764
    %v3609 = vunpack.c.h.b16 %v764
    %v3610 = vunpack.c.l.b16 %v765
    %v3611 = vunpack.c.h.b16 %v765
    %v3612 = vunpack.c.l.b16 %v766
    %v3613 = vunpack.c.h.b16 %v766
    %v3614 = vunpack.c.l.b16 %v767
    %v3615 = vunpack.c.h.b16 %v767
    %v3616 = vunpack.c.l.b16 %v768
    %v3617 = vunpack.c.h.b16 %v768
    %v3618 = vunpack.c.l.b16 %v769
    %v3619 = vunpack.c.h.b16 %v769
    %v3620 = vunpack.c.l.b16 %v770
    %v3621 = vunpack.c.h.b16 %v770
    %v3622 = vunpack.c.l.b16 %v771
    %v3623 = vunpack.c.h.b16 %v771
    %v3624 = vunpack.c.l.b16 %v772
    %v3625 = vunpack.c.h.b16 %v772
    %v3626 = vunpack.c.l.b16 %v773
    %v3627 = vunpack.c.h.b16 %v773
    %v3628 = vunpack.c.l.b16 %v774
    %v3629 = vunpack.c.h.b16 %v774
    %v3630 = vunpack.c.l.b16 %v775
    %v3631 = vunpack.c.h.b16 %v775
    %v3632 = vunpack.c.l.b16 %v776
    %v3633 = vunpack.c.h.b16 %v776
    %v3634 = vunpack.c.l.b16 %v777
    %v3635 = vunpack.c.h.b16 %v777
    %v3636 = vunpack.c.l.b16 %v778
    %v3637 = vunpack.c.h.b16 %v778
    %v3638 = vunpack.c.l.b16 %v779
    %v3639 = vunpack.c.h.b16 %v779
    %v3640 = vunpack.c.l.b16 %v780
    %v3641 = vunpack.c.h.b16 %v780
    %v3642 = vunpack.c.l.b16 %v781
    %v3643 = vunpack.c.h.b16 %v781
    %v3644 = vunpack.c.l.b16 %v782
    %v3645 = vunpack.c.h.b16 %v782
    %v3646 = vunpack.c.l.b16 %v783
    %v3647 = vunpack.c.h.b16 %v783
    %v3648 = vunpack.c.l.b16 %v784
    %v3649 = vunpack.c.h.b16 %v784
    %v3650 = vunpack.c.l.b16 %v785
    %v3651 = vunpack.c.h.b16 %v785
    %v3652 = vunpack.c.l.b16 %v786
    %v3653 = vunpack.c.h.b16 %v786
    %v3654 = vunpack.c.l.b16 %v787
    %v3655 = vunpack.c.h.b16 %v787
    %v3656 = vunpack.c.l.b16 %v788
    %v3657 = vunpack.c.h.b16 %v788
    %v3658 = vunpack.c.l.b16 %v789
    %v3659 = vunpack.c.h.b16 %v789
    %v3660 = vunpack.c.l.b16 %v790
    %v3661 = vunpack.c.h.b16 %v790
    %v3662 = vunpack.c.l.b16 %v791
    %v3663 = vunpack.c.h.b16 %v791
    %v3664 = vunpack.c.l.b16 %v792
    %v3665 = vunpack.c.h.b16 %v792
    %v3666 = vunpack.c.l.b16 %v793
    %v3667 = vunpack.c.h.b16 %v793
    %v3668 = vunpack.c.l.b16 %v794
    %v3669 = vunpack.c.h.b16 %v794
    %v3670 = vunpack.c.l.b16 %v795
    %v3671 = vunpack.c.h.b16 %v795
    %v3672 = vunpack.c.l.b16 %v796
    %v3673 = vunpack.c.h.b16 %v796
    %v3674 = vunpack.c.l.b16 %v797
    %v3675 = vunpack.c.h.b16 %v797
    %v3676 = vunpack.c.l.b16 %v798
    %v3677 = vunpack.c.h.b16 %v798
    %v3678 = vunpack.c.l.b16 %v799
    %v3679 = vunpack.c.h.b16 %v799
    %v3680 = vunpack.c.l.b16 %v800
    %v3681 = vunpack.c.h.b16 %v800
    %v3682 = vunpack.c.l.b16 %v801
    %v3683 = vunpack.c.h.b16 %v801
    %v3684 = vunpack.c.l.b16 %v802
    %v3685 = vunpack.c.h.b16 %v802
    %v3686 = vunpack.c.l.b16 %v803
    %v3687 = vunpack.c.h.b16 %v803
    %v3688 = vunpack.c.l.b16 %v804
    %v3689 = vunpack.c.h.b16 %v804
    %v3690 = vunpack.c.l.b16 %v805
    %v3691 = vunpack.c.h.b16 %v805
    %v3692 = vunpack.c.l.b16 %v806
    %v3693 = vunpack.c.h.b16 %v806
    %v3694 = vunpack.c.l.b16 %v807
    %v3695 = vunpack.c.h.b16 %v807
    %v3696 = vunpack.c.l.b16 %v808
    %v3697 = vunpack.c.h.b16 %v808
    %v3698 = vunpack.c.l.b16 %v809
    %v3699 = vunpack.c.h.b16 %v809
    %v3700 = vunpack.c.l.b16 %v810
    %v3701 = vunpack.c.h.b16 %v810
    %v3702 = vunpack.c.l.b16 %v811
    %v3703 = vunpack.c.h.b16 %v811
    %v3704 = vunpack.c.l.b16 %v812
    %v3705 = vunpack.c.h.b16 %v812
    %v3706 = vunpack.c.l.b16 %v813
    %v3707 = vunpack.c.h.b16 %v813
    %v3708 = vunpack.c.l.b16 %v814
    %v3709 = vunpack.c.h.b16 %v814
    %v3710 = vunpack.c.l.b16 %v815
    %v3711 = vunpack.c.h.b16 %v815
    %v3712 = vunpack.c.l.b16 %v816
    %v3713 = vunpack.c.h.b16 %v816
    %v3714 = vunpack.c.l.b16 %v817
    %v3715 = vunpack.c.h.b16 %v817
    %v3716 = vunpack.c.l.b16 %v818
    %v3717 = vunpack.c.h.b16 %v818
    %v3718 = vunpack.c.l.b16 %v819
    %v3719 = vunpack.c.h.b16 %v819
    %v3720 = vunpack.c.l.b16 %v820
    %v3721 = vunpack.c.h.b16 %v820
    %v3722 = vunpack.c.l.b16 %v821
    %v3723 = vunpack.c.h.b16 %v821
    %v3724 = vunpack.c.l.b16 %v822
    %v3725 = vunpack.c.h.b16 %v822
    %v3726 = vunpack.c.l.b16 %v823
    %v3727 = vunpack.c.h.b16 %v823
    %v3728 = vunpack.c.l.b16 %v824
    %v3729 = vunpack.c.h.b16 %v824
    %v3730 = vunpack.c.l.b16 %v825
    %v3731 = vunpack.c.h.b16 %v825
    %v3732 = vunpack.c.l.b16 %v826
    %v3733 = vunpack.c.h.b16 %v826
    %v3734 = vunpack.c.l.b16 %v827
    %v3735 = vunpack.c.h.b16 %v827
    %v3736 = vunpack.c.l.b16 %v828
    %v3737 = vunpack.c.h.b16 %v828
    %v3738 = vunpack.c.l.b16 %v829
    %v3739 = vunpack.c.h.b16 %v829
    %v3740 = vunpack.c.l.b16 %v830
    %v3741 = vunpack.c.h.b16 %v830
    %v3742 = vunpack.c.l.b16 %v831
    %v3743 = vunpack.c.h.b16 %v831
    %v3744 = vunpack.c.l.b16 %v832
    %v3745 = vunpack.c.h.b16 %v832
    %v3746 = vunpack.c.l.b16 %v833
    %v3747 = vunpack.c.h.b16 %v833
    %v3748 = vunpack.c.l.b16 %v834
    %v3749 = vunpack.c.h.b16 %v834
    %v3750 = vunpack.c.l.b16 %v835
    %v3751 = vunpack.c.h.b16 %v835
    %v3752 = vunpack.c.l.b16 %v836
    %v3753 = vunpack.c.h.b16 %v836
    %v3754 = vunpack.c.l.b16 %v837
    %v3755 = vunpack.c.h.b16 %v837
    %v3756 = vunpack.c.l.b16 %v838
    %v3757 = vunpack.c.h.b16 %v838
    %v3758 = vunpack.c.l.b16 %v839
    %v3759 = vunpack.c.h.b16 %v839
    %v3760 = vunpack.c.l.b16 %v840
    %v3761 = vunpack.c.h.b16 %v840
    %v3762 = vunpack.c.l.b16 %v841
    %v3763 = vunpack.c.h.b16 %v841
    %v3764 = vunpack.c.l.b16 %v842
    %v3765 = vunpack.c.h.b16 %v842
    %v3766 = vunpack.c.l.b16 %v843
    %v3767 = vunpack.c.h.b16 %v843
    %v3768 = vunpack.c.l.b16 %v844
    %v3769 = vunpack.c.h.b16 %v844
    %v3770 = vunpack.c.l.b16 %v845
    %v3771 = vunpack.c.h.b16 %v845
    %v3772 = vunpack.c.l.b16 %v846
    %v3773 = vunpack.c.h.b16 %v846
    %v3774 = vunpack.c.l.b16 %v847
    %v3775 = vunpack.c.h.b16 %v847
    %v3776 = vunpack.c.l.b16 %v848
    %v3777 = vunpack.c.h.b16 %v848
    %v3778 = vunpack.c.l.b16 %v849
    %v3779 = vunpack.c.h.b16 %v849
    %v3780 = vpack.c.b16 %v2182, %v2180
    %v3781 = vpack.c.b16 %v2183, %v2181
    %v3782 = vpack.c.b16 %v2186, %v2184
    %v3783 = vpack.c.b16 %v2187, %v2185
    %v3784 = vpack.c.b16 %v2190, %v2188
    %v3785 = vpack.c.b16 %v2191, %v2189
    %v3786 = vpack.c.b16 %v2194, %v2192
    %v3787 = vpack.c.b16 %v2195, %v2193
    %v3788 = vpack.c.b16 %v2198, %v2196
    %v3789 = vpack.c.b16 %v2199, %v2197
    %v3790 = vpack.c.b16 %v2202, %v2200
    %v3791 = vpack.c.b16 %v2203, %v2201
    %v3792 = vpack.c.b16 %v2206, %v2204
    %v3793 = vpack.c.b16 %v2207, %v2205
    %v3794 = vpack.c.b16 %v2210, %v2208
    %v3795 = vpack.c.b16 %v2211, %v2209
    %v3796 = vpack.c.b16 %v2214, %v2212
    %v3797 = vpack.c.b16 %v2215, %v2213
    %v3798 = vpack.c.b16 %v2218, %v2216
    %v3799 = vpack.c.b16 %v2219, %v2217
    %v3800 = vpack.c.b16 %v2222, %v2220
    %v3801 = vpack.c.b16 %v2223, %v2221
    %v3802 = vpack.c.b16 %v2226, %v2224
    %v3803 = vpack.c.b16 %v2227, %v2225
    %v3804 = vpack.c.b16 %v2230, %v2228
    %v3805 = vpack.c.b16 %v2231, %v2229
    %v3806 = vpack.c.b16 %v2234, %v2232
    %v3807 = vpack.c.b16 %v2235, %v2233
    %v3808 = vpack.c.b16 %v2238, %v2236
    %v3809 = vpack.c.b16 %v2239, %v2237
    %v3810 = vpack.c.b16 %v2242, %v2240
    %v3811 = vpack.c.b16 %v2243, %v2241
    %v3812 = vpack.c.b16 %v2246, %v2244
    %v3813 = vpack.c.b16 %v2247, %v2245
    %v3814 = vpack.c.b16 %v2250, %v2248
    %v3815 = vpack.c.b16 %v2251, %v2249
    %v3816 = vpack.c.b16 %v2254, %v2252
    %v3817 = vpack.c.b16 %v2255, %v2253
    %v3818 = vpack.c.b16 %v2258, %v2256
    %v3819 = vpack.c.b16 %v2259, %v2257
    %v3820 = vpack.c.b16 %v2262, %v2260
    %v3821 = vpack.c.b16 %v2263, %v2261
    %v3822 = vpack.c.b16 %v2266, %v2264
    %v3823 = vpack.c.b16 %v2267, %v2265
    %v3824 = vpack.c.b16 %v2270, %v2268
    %v3825 = vpack.c.b16 %v2271, %v2269
    %v3826 = vpack.c.b16 %v2274, %v2272
    %v3827 = vpack.c.b16 %v2275, %v2273
    %v3828 = vpack.c.b16 %v2278, %v2276
    %v3829 = vpack.c.b16 %v2279, %v2277
    %v3830 = vpack.c.b16 %v2282, %v2280
    %v3831 = vpack.c.b16 %v2283, %v2281
    %v3832 = vpack.c.b16 %v2286, %v2284
    %v3833 = vpack.c.b16 %v2287, %v2285
    %v3834 = vpack.c.b16 %v2290, %v2288
    %v3835 = vpack.c.b16 %v2291, %v2289
    %v3836 = vpack.c.b16 %v2294, %v2292
    %v3837 = vpack.c.b16 %v2295, %v2293
    %v3838 = vpack.c.b16 %v2298, %v2296
    %v3839 = vpack.c.b16 %v2299, %v2297
    %v3840 = vpack.c.b16 %v2302, %v2300
    %v3841 = vpack.c.b16 %v2303, %v2301
    %v3842 = vpack.c.b16 %v2306, %v2304
    %v3843 = vpack.c.b16 %v2307, %v2305
    %v3844 = vpack.c.b16 %v2310, %v2308
    %v3845 = vpack.c.b16 %v2311, %v2309
    %v3846 = vpack.c.b16 %v2314, %v2312
    %v3847 = vpack.c.b16 %v2315, %v2313
    %v3848 = vpack.c.b16 %v2318, %v2316
    %v3849 = vpack.c.b16 %v2319, %v2317
    %v3850 = vpack.c.b16 %v2322, %v2320
    %v3851 = vpack.c.b16 %v2323, %v2321
    %v3852 = vpack.c.b16 %v2326, %v2324
    %v3853 = vpack.c.b16 %v2327, %v2325
    %v3854 = vpack.c.b16 %v2330, %v2328
    %v3855 = vpack.c.b16 %v2331, %v2329
    %v3856 = vpack.c.b16 %v2334, %v2332
    %v3857 = vpack.c.b16 %v2335, %v2333
    %v3858 = vpack.c.b16 %v2338, %v2336
    %v3859 = vpack.c.b16 %v2339, %v2337
    %v3860 = vpack.c.b16 %v2342, %v2340
    %v3861 = vpack.c.b16 %v2343, %v2341
    %v3862 = vpack.c.b16 %v2346, %v2344
    %v3863 = vpack.c.b16 %v2347, %v2345
    %v3864 = vpack.c.b16 %v2350, %v2348
    %v3865 = vpack.c.b16 %v2351, %v2349
    %v3866 = vpack.c.b16 %v2354, %v2352
    %v3867 = vpack.c.b16 %v2355, %v2353
    %v3868 = vpack.c.b16 %v2358, %v2356
    %v3869 = vpack.c.b16 %v2359, %v2357
    %v3870 = vpack.c.b16 %v2362, %v2360
    %v3871 = vpack.c.b16 %v2363, %v2361
    %v3872 = vpack.c.b16 %v2366, %v2364
    %v3873 = vpack.c.b16 %v2367, %v2365
    %v3874 = vpack.c.b16 %v2370, %v2368
    %v3875 = vpack.c.b16 %v2371, %v2369
    %v3876 = vpack.c.b16 %v2374, %v2372
    %v3877 = vpack.c.b16 %v2375, %v2373
    %v3878 = vpack.c.b16 %v2378, %v2376
    %v3879 = vpack.c.b16 %v2379, %v2377
    %v3880 = vpack.c.b16 %v2382, %v2380
    %v3881 = vpack.c.b16 %v2383, %v2381
    %v3882 = vpack.c.b16 %v2386, %v2384
    %v3883 = vpack.c.b16 %v2387, %v2385
    %v3884 = vpack.c.b16 %v2390, %v2388
    %v3885 = vpack.c.b16 %v2391, %v2389
    %v3886 = vpack.c.b16 %v2394, %v2392
    %v3887 = vpack.c.b16 %v2395, %v2393
    %v3888 = vpack.c.b16 %v2398, %v2396
    %v3889 = vpack.c.b16 %v2399, %v2397
    %v3890 = vpack.c.b16 %v2402, %v2400
    %v3891 = vpack.c.b16 %v2403, %v2401
    %v3892 = vpack.c.b16 %v2406, %v2404
    %v3893 = vpack.c.b16 %v2407, %v2405
    %v3894 = vpack.c.b16 %v2410, %v2408
    %v3895 = vpack.c.b16 %v2411, %v2409
    %v3896 = vpack.c.b16 %v2414, %v2412
    %v3897 = vpack.c.b16 %v2415, %v2413
    %v3898 = vpack.c.b16 %v2418, %v2416
    %v3899 = vpack.c.b16 %v2419, %v2417
    %v3900 = vpack.c.b16 %v2422, %v2420
    %v3901 = vpack.c.b16 %v2423, %v2421
    %v3902 = vpack.c.b16 %v2426, %v2424
    %v3903 = vpack.c.b16 %v2427, %v2425
    %v3904 = vpack.c.b16 %v2430, %v2428
    %v3905 = vpack.c.b16 %v2431, %v2429
    %v3906 = vpack.c.b16 %v2434, %v2432
    %v3907 = vpack.c.b16 %v2435, %v2433
    %v3908 = vpack.c.b16 %v2438, %v2436
    %v3909 = vpack.c.b16 %v2439, %v2437
    %v3910 = vpack.c.b16 %v2442, %v2440
    %v3911 = vpack.c.b16 %v2443, %v2441
    %v3912 = vpack.c.b16 %v2446, %v2444
    %v3913 = vpack.c.b16 %v2447, %v2445
    %v3914 = vpack.c.b16 %v2450, %v2448
    %v3915 = vpack.c.b16 %v2451, %v2449
    %v3916 = vpack.c.b16 %v2454, %v2452
    %v3917 = vpack.c.b16 %v2455, %v2453
    %v3918 = vpack.c.b16 %v2458, %v2456
    %v3919 = vpack.c.b16 %v2459, %v2457
    %v3920 = vpack.c.b16 %v2462, %v2460
    %v3921 = vpack.c.b16 %v2463, %v2461
    %v3922 = vpack.c.b16 %v2466, %v2464
    %v3923 = vpack.c.b16 %v2467, %v2465
    %v3924 = vpack.c.b16 %v2470, %v2468
    %v3925 = vpack.c.b16 %v2471, %v2469
    %v3926 = vpack.c.b16 %v2474, %v2472
    %v3927 = vpack.c.b16 %v2475, %v2473
    %v3928 = vpack.c.b16 %v2478, %v2476
    %v3929 = vpack.c.b16 %v2479, %v2477
    %v3930 = vpack.c.b16 %v2482, %v2480
    %v3931 = vpack.c.b16 %v2483, %v2481
    %v3932 = vpack.c.b16 %v2486, %v2484
    %v3933 = vpack.c.b16 %v2487, %v2485
    %v3934 = vpack.c.b16 %v2490, %v2488
    %v3935 = vpack.c.b16 %v2491, %v2489
    %v3936 = vpack.c.b16 %v2494, %v2492
    %v3937 = vpack.c.b16 %v2495, %v2493
    %v3938 = vpack.c.b16 %v2498, %v2496
    %v3939 = vpack.c.b16 %v2499, %v2497
    %v3940 = vpack.c.b16 %v2502, %v2500
    %v3941 = vpack.c.b16 %v2503, %v2501
    %v3942 = vpack.c.b16 %v2506, %v2504
    %v3943 = vpack.c.b16 %v2507, %v2505
    %v3944 = vpack.c.b16 %v2510, %v2508
    %v3945 = vpack.c.b16 %v2511, %v2509
    %v3946 = vpack.c.b16 %v2514, %v2512
    %v3947 = vpack.c.b16 %v2515, %v2513
    %v3948 = vpack.c.b16 %v2518, %v2516
    %v3949 = vpack.c.b16 %v2519, %v2517
    %v3950 = vpack.c.b16 %v2522, %v2520
    %v3951 = vpack.c.b16 %v2523, %v2521
    %v3952 = vpack.c.b16 %v2526, %v2524
    %v3953 = vpack.c.b16 %v2527, %v2525
    %v3954 = vpack.c.b16 %v2530, %v2528
    %v3955 = vpack.c.b16 %v2531, %v2529
    %v3956 = vpack.c.b16 %v2534, %v2532
    %v3957 = vpack.c.b16 %v2535, %v2533
    %v3958 = vpack.c.b16 %v2538, %v2536
    %v3959 = vpack.c.b16 %v2539, %v2537
    %v3960 = vpack.c.b16 %v2542, %v2540
    %v3961 = vpack.c.b16 %v2543, %v2541
    %v3962 = vpack.c.b16 %v2546, %v2544
    %v3963 = vpack.c.b16 %v2547, %v2545
    %v3964 = vpack.c.b16 %v2550, %v2548
    %v3965 = vpack.c.b16 %v2551, %v2549
    %v3966 = vpack.c.b16 %v2554, %v2552
    %v3967 = vpack.c.b16 %v2555, %v2553
    %v3968 = vpack.c.b16 %v2558, %v2556
    %v3969 = vpack.c.b16 %v2559, %v2557
    %v3970 = vpack.c.b16 %v2562, %v2560
    %v3971 = vpack.c.b16 %v2563, %v2561
    %v3972 = vpack.c.b16 %v2566, %v2564
    %v3973 = vpack.c.b16 %v2567, %v2565
    %v3974 = vpack.c.b16 %v2570, %v2568
    %v3975 = vpack.c.b16 %v2571, %v2569
    %v3976 = vpack.c.b16 %v2574, %v2572
    %v3977 = vpack.c.b16 %v2575, %v2573
    %v3978 = vpack.c.b16 %v2578, %v2576
    %v3979 = vpack.c.b16 %v2579, %v2577
    %v3980 = vpack.c.b16 %v2582, %v2580
    %v3981 = vpack.c.b16 %v2583, %v2581
    %v3982 = vpack.c.b16 %v2586, %v2584
    %v3983 = vpack.c.b16 %v2587, %v2585
    %v3984 = vpack.c.b16 %v2590, %v2588
    %v3985 = vpack.c.b16 %v2591, %v2589
    %v3986 = vpack.c.b16 %v2594, %v2592
    %v3987 = vpack.c.b16 %v2595, %v2593
    %v3988 = vpack.c.b16 %v2598, %v2596
    %v3989 = vpack.c.b16 %v2599, %v2597
    %v3990 = vpack.c.b16 %v2602, %v2600
    %v3991 = vpack.c.b16 %v2603, %v2601
    %v3992 = vpack.c.b16 %v2606, %v2604
    %v3993 = vpack.c.b16 %v2607, %v2605
    %v3994 = vpack.c.b16 %v2610, %v2608
    %v3995 = vpack.c.b16 %v2611, %v2609
    %v3996 = vpack.c.b16 %v2614, %v2612
    %v3997 = vpack.c.b16 %v2615, %v2613
    %v3998 = vpack.c.b16 %v2618, %v2616
    %v3999 = vpack.c.b16 %v2619, %v2617
    %v4000 = vpack.c.b16 %v2622, %v2620
    %v4001 = vpack.c.b16 %v2623, %v2621
    %v4002 = vpack.c.b16 %v2626, %v2624
    %v4003 = vpack.c.b16 %v2627, %v2625
    %v4004 = vpack.c.b16 %v2630, %v2628
    %v4005 = vpack.c.b16 %v2631, %v2629
    %v4006 = vpack.c.b16 %v2634, %v2632
    %v4007 = vpack.c.b16 %v2635, %v2633
    %v4008 = vpack.c.b16 %v2638, %v2636
    %v4009 = vpack.c.b16 %v2639, %v2637
    %v4010 = vpack.c.b16 %v2642, %v2640
    %v4011 = vpack.c.b16 %v2643, %v2641
    %v4012 = vpack.c.b16 %v2646, %v2644
    %v4013 = vpack.c.b16 %v2647, %v2645
    %v4014 = vpack.c.b16 %v2650, %v2648
    %v4015 = vpack.c.b16 %v2651, %v2649
    %v4016 = vpack.c.b16 %v2654, %v2652
    %v4017 = vpack.c.b16 %v2655, %v2653
    %v4018 = vpack.c.b16 %v2658, %v2656
    %v4019 = vpack.c.b16 %v2659, %v2657
    %v4020 = vpack.c.b16 %v2662, %v2660
    %v4021 = vpack.c.b16 %v2663, %v2661
    %v4022 = vpack.c.b16 %v2666, %v2664
    %v4023 = vpack.c.b16 %v2667, %v2665
    %v4024 = vpack.c.b16 %v2670, %v2668
    %v4025 = vpack.c.b16 %v2671, %v2669
    %v4026 = vpack.c.b16 %v2674, %v2672
    %v4027 = vpack.c.b16 %v2675, %v2673
    %v4028 = vpack.c.b16 %v2678, %v2676
    %v4029 = vpack.c.b16 %v2679, %v2677
    %v4030 = vpack.c.b16 %v2682, %v2680
    %v4031 = vpack.c.b16 %v2683, %v2681
    %v4032 = vpack.c.b16 %v2686, %v2684
    %v4033 = vpack.c.b16 %v2687, %v2685
    %v4034 = vpack.c.b16 %v2690, %v2688
    %v4035 = vpack.c.b16 %v2691, %v2689
    %v4036 = vpack.c.b16 %v2694, %v2692
    %v4037 = vpack.c.b16 %v2695, %v2693
    %v4038 = vpack.c.b16 %v2698, %v2696
    %v4039 = vpack.c.b16 %v2699, %v2697
    %v4040 = vpack.c.b16 %v2702, %v2700
    %v4041 = vpack.c.b16 %v2703, %v2701
    %v4042 = vpack.c.b16 %v2706, %v2704
    %v4043 = vpack.c.b16 %v2707, %v2705
    %v4044 = vpack.c.b16 %v2710, %v2708
    %v4045 = vpack.c.b16 %v2711, %v2709
    %v4046 = vpack.c.b16 %v2714, %v2712
    %v4047 = vpack.c.b16 %v2715, %v2713
    %v4048 = vpack.c.b16 %v2718, %v2716
    %v4049 = vpack.c.b16 %v2719, %v2717
    %v4050 = vpack.c.b16 %v2722, %v2720
    %v4051 = vpack.c.b16 %v2723, %v2721
    %v4052 = vpack.c.b16 %v2726, %v2724
    %v4053 = vpack.c.b16 %v2727, %v2725
    %v4054 = vpack.c.b16 %v2730, %v2728
    %v4055 = vpack.c.b16 %v2731, %v2729
    %v4056 = vpack.c.b16 %v2734, %v2732
    %v4057 = vpack.c.b16 %v2735, %v2733
    %v4058 = vpack.c.b16 %v2738, %v2736
    %v4059 = vpack.c.b16 %v2739, %v2737
    %v4060 = vpack.c.b16 %v2742, %v2740
    %v4061 = vpack.c.b16 %v2743, %v2741
    %v4062 = vpack.c.b16 %v2746, %v2744
    %v4063 = vpack.c.b16 %v2747, %v2745
    %v4064 = vpack.c.b16 %v2750, %v2748
    %v4065 = vpack.c.b16 %v2751, %v2749
    %v4066 = vpack.c.b16 %v2754, %v2752
    %v4067 = vpack.c.b16 %v2755, %v2753
    %v4068 = vpack.c.b16 %v2758, %v2756
    %v4069 = vpack.c.b16 %v2759, %v2757
    %v4070 = vpack.c.b16 %v2762, %v2760
    %v4071 = vpack.c.b16 %v2763, %v2761
    %v4072 = vpack.c.b16 %v2766, %v2764
    %v4073 = vpack.c.b16 %v2767, %v2765
    %v4074 = vpack.c.b16 %v2770, %v2768
    %v4075 = vpack.c.b16 %v2771, %v2769
    %v4076 = vpack.c.b16 %v2774, %v2772
    %v4077 = vpack.c.b16 %v2775, %v2773
    %v4078 = vpack.c.b16 %v2778, %v2776
    %v4079 = vpack.c.b16 %v2779, %v2777
    %v4080 = vpack.c.b16 %v2782, %v2780
    %v4081 = vpack.c.b16 %v2783, %v2781
    %v4082 = vpack.c.b16 %v2786, %v2784
    %v4083 = vpack.c.b16 %v2787, %v2785
    %v4084 = vpack.c.b16 %v2790, %v2788
    %v4085 = vpack.c.b16 %v2791, %v2789
    %v4086 = vpack.c.b16 %v2794, %v2792
    %v4087 = vpack.c.b16 %v2795, %v2793
    %v4088 = vpack.c.b16 %v2798, %v2796
    %v4089 = vpack.c.b16 %v2799, %v2797
    %v4090 = vpack.c.b16 %v2802, %v2800
    %v4091 = vpack.c.b16 %v2803, %v2801
    %v4092 = vpack.c.b16 %v2806, %v2804
    %v4093 = vpack.c.b16 %v2807, %v2805
    %v4094 = vpack.c.b16 %v2810, %v2808
    %v4095 = vpack.c.b16 %v2811, %v2809
    %v4096 = vpack.c.b16 %v2814, %v2812
    %v4097 = vpack.c.b16 %v2815, %v2813
    %v4098 = vpack.c.b16 %v2818, %v2816
    %v4099 = vpack.c.b16 %v2819, %v2817
    %v4100 = vpack.c.b16 %v2822, %v2820
    %v4101 = vpack.c.b16 %v2823, %v2821
    %v4102 = vpack.c.b16 %v2826, %v2824
    %v4103 = vpack.c.b16 %v2827, %v2825
    %v4104 = vpack.c.b16 %v2830, %v2828
    %v4105 = vpack.c.b16 %v2831, %v2829
    %v4106 = vpack.c.b16 %v2834, %v2832
    %v4107 = vpack.c.b16 %v2835, %v2833
    %v4108 = vpack.c.b16 %v2838, %v2836
    %v4109 = vpack.c.b16 %v2839, %v2837
    %v4110 = vpack.c.b16 %v2842, %v2840
    %v4111 = vpack.c.b16 %v2843, %v2841
    %v4112 = vpack.c.b16 %v2846, %v2844
    %v4113 = vpack.c.b16 %v2847, %v2845
    %v4114 = vpack.c.b16 %v2850, %v2848
    %v4115 = vpack.c.b16 %v2851, %v2849
    %v4116 = vpack.c.b16 %v2854, %v2852
    %v4117 = vpack.c.b16 %v2855, %v2853
    %v4118 = vpack.c.b16 %v2858, %v2856
    %v4119 = vpack.c.b16 %v2859, %v2857
    %v4120 = vpack.c.b16 %v2862, %v2860
    %v4121 = vpack.c.b16 %v2863, %v2861
    %v4122 = vpack.c.b16 %v2866, %v2864
    %v4123 = vpack.c.b16 %v2867, %v2865
    %v4124 = vpack.c.b16 %v2870, %v2868
    %v4125 = vpack.c.b16 %v2871, %v2869
    %v4126 = vpack.c.b16 %v2874, %v2872
    %v4127 = vpack.c.b16 %v2875, %v2873
    %v4128 = vpack.c.b16 %v2878, %v2876
    %v4129 = vpack.c.b16 %v2879, %v2877
    %v4130 = vpack.c.b16 %v2882, %v2880
    %v4131 = vpack.c.b16 %v2883, %v2881
    %v4132 = vpack.c.b16 %v2886, %v2884
    %v4133 = vpack.c.b16 %v2887, %v2885
    %v4134 = vpack.c.b16 %v2890, %v2888
    %v4135 = vpack.c.b16 %v2891, %v2889
    %v4136 = vpack.c.b16 %v2894, %v2892
    %v4137 = vpack.c.b16 %v2895, %v2893
    %v4138 = vpack.c.b16 %v2898, %v2896
    %v4139 = vpack.c.b16 %v2899, %v2897
    %v4140 = vpack.c.b16 %v2902, %v2900
    %v4141 = vpack.c.b16 %v2903, %v2901
    %v4142 = vpack.c.b16 %v2906, %v2904
    %v4143 = vpack.c.b16 %v2907, %v2905
    %v4144 = vpack.c.b16 %v2910, %v2908
    %v4145 = vpack.c.b16 %v2911, %v2909
    %v4146 = vpack.c.b16 %v2914, %v2912
    %v4147 = vpack.c.b16 %v2915, %v2913
    %v4148 = vpack.c.b16 %v2918, %v2916
    %v4149 = vpack.c.b16 %v2919, %v2917
    %v4150 = vpack.c.b16 %v2922, %v2920
    %v4151 = vpack.c.b16 %v2923, %v2921
    %v4152 = vpack.c.b16 %v2926, %v2924
    %v4153 = vpack.c.b16 %v2927, %v2925
    %v4154 = vpack.c.b16 %v2930, %v2928
    %v4155 = vpack.c.b16 %v2931, %v2929
    %v4156 = vpack.c.b16 %v2934, %v2932
    %v4157 = vpack.c.b16 %v2935, %v2933
    %v4158 = vpack.c.b16 %v2938, %v2936
    %v4159 = vpack.c.b16 %v2939, %v2937
    %v4160 = vpack.c.b16 %v2942, %v2940
    %v4161 = vpack.c.b16 %v2943, %v2941
    %v4162 = vpack.c.b16 %v2946, %v2944
    %v4163 = vpack.c.b16 %v2947, %v2945
    %v4164 = vpack.c.b16 %v2950, %v2948
    %v4165 = vpack.c.b16 %v2951, %v2949
    %v4166 = vpack.c.b16 %v2954, %v2952
    %v4167 = vpack.c.b16 %v2955, %v2953
    %v4168 = vpack.c.b16 %v2958, %v2956
    %v4169 = vpack.c.b16 %v2959, %v2957
    %v4170 = vpack.c.b16 %v2962, %v2960
    %v4171 = vpack.c.b16 %v2963, %v2961
    %v4172 = vpack.c.b16 %v2966, %v2964
    %v4173 = vpack.c.b16 %v2967, %v2965
    %v4174 = vpack.c.b16 %v2970, %v2968
    %v4175 = vpack.c.b16 %v2971, %v2969
    %v4176 = vpack.c.b16 %v2974, %v2972
    %v4177 = vpack.c.b16 %v2975, %v2973
    %v4178 = vpack.c.b16 %v2978, %v2976
    %v4179 = vpack.c.b16 %v2979, %v2977
    %v4180 = vpack.c.b16 %v2982, %v2980
    %v4181 = vpack.c.b16 %v2983, %v2981
    %v4182 = vpack.c.b16 %v2986, %v2984
    %v4183 = vpack.c.b16 %v2987, %v2985
    %v4184 = vpack.c.b16 %v2990, %v2988
    %v4185 = vpack.c.b16 %v2991, %v2989
    %v4186 = vpack.c.b16 %v2994, %v2992
    %v4187 = vpack.c.b16 %v2995, %v2993
    %v4188 = vpack.c.b16 %v2998, %v2996
    %v4189 = vpack.c.b16 %v2999, %v2997
    %v4190 = vpack.c.b16 %v3002, %v3000
    %v4191 = vpack.c.b16 %v3003, %v3001
    %v4192 = vpack.c.b16 %v3006, %v3004
    %v4193 = vpack.c.b16 %v3007, %v3005
    %v4194 = vpack.c.b16 %v3010, %v3008
    %v4195 = vpack.c.b16 %v3011, %v3009
    %v4196 = vpack.c.b16 %v3014, %v3012
    %v4197 = vpack.c.b16 %v3015, %v3013
    %v4198 = vpack.c.b16 %v3018, %v3016
    %v4199 = vpack.c.b16 %v3019, %v3017
    %v4200 = vpack.c.b16 %v3022, %v3020
    %v4201 = vpack.c.b16 %v3023, %v3021
    %v4202 = vpack.c.b16 %v3026, %v3024
    %v4203 = vpack.c.b16 %v3027, %v3025
    %v4204 = vpack.c.b16 %v3030, %v3028
    %v4205 = vpack.c.b16 %v3031, %v3029
    %v4206 = vpack.c.b16 %v3034, %v3032
    %v4207 = vpack.c.b16 %v3035, %v3033
    %v4208 = vpack.c.b16 %v3038, %v3036
    %v4209 = vpack.c.b16 %v3039, %v3037
    %v4210 = vpack.c.b16 %v3042, %v3040
    %v4211 = vpack.c.b16 %v3043, %v3041
    %v4212 = vpack.c.b16 %v3046, %v3044
    %v4213 = vpack.c.b16 %v3047, %v3045
    %v4214 = vpack.c.b16 %v3050, %v3048
    %v4215 = vpack.c.b16 %v3051, %v3049
    %v4216 = vpack.c.b16 %v3054, %v3052
    %v4217 = vpack.c.b16 %v3055, %v3053
    %v4218 = vpack.c.b16 %v3058, %v3056
    %v4219 = vpack.c.b16 %v3059, %v3057
    %v4220 = vpack.c.b16 %v3062, %v3060
    %v4221 = vpack.c.b16 %v3063, %v3061
    %v4222 = vpack.c.b16 %v3066, %v3064
    %v4223 = vpack.c.b16 %v3067, %v3065
    %v4224 = vpack.c.b16 %v3070, %v3068
    %v4225 = vpack.c.b16 %v3071, %v3069
    %v4226 = vpack.c.b16 %v3074, %v3072
    %v4227 = vpack.c.b16 %v3075, %v3073
    %v4228 = vpack.c.b16 %v3078, %v3076
    %v4229 = vpack.c.b16 %v3079, %v3077
    %v4230 = vpack.c.b16 %v3082, %v3080
    %v4231 = vpack.c.b16 %v3083, %v3081
    %v4232 = vpack.c.b16 %v3086, %v3084
    %v4233 = vpack.c.b16 %v3087, %v3085
    %v4234 = vpack.c.b16 %v3090, %v3088
    %v4235 = vpack.c.b16 %v3091, %v3089
    %v4236 = vpack.c.b16 %v3094, %v3092
    %v4237 = vpack.c.b16 %v3095, %v3093
    %v4238 = vpack.c.b16 %v3098, %v3096
    %v4239 = vpack.c.b16 %v3099, %v3097
    %v4240 = vpack.c.b16 %v3102, %v3100
    %v4241 = vpack.c.b16 %v3103, %v3101
    %v4242 = vpack.c.b16 %v3106, %v3104
    %v4243 = vpack.c.b16 %v3107, %v3105
    %v4244 = vpack.c.b16 %v3110, %v3108
    %v4245 = vpack.c.b16 %v3111, %v3109
    %v4246 = vpack.c.b16 %v3114, %v3112
    %v4247 = vpack.c.b16 %v3115, %v3113
    %v4248 = vpack.c.b16 %v3118, %v3116
    %v4249 = vpack.c.b16 %v3119, %v3117
    %v4250 = vpack.c.b16 %v3122, %v3120
    %v4251 = vpack.c.b16 %v3123, %v3121
    %v4252 = vpack.c.b16 %v3126, %v3124
    %v4253 = vpack.c.b16 %v3127, %v3125
    %v4254 = vpack.c.b16 %v3130, %v3128
    %v4255 = vpack.c.b16 %v3131, %v3129
    %v4256 = vpack.c.b16 %v3134, %v3132
    %v4257 = vpack.c.b16 %v3135, %v3133
    %v4258 = vpack.c.b16 %v3138, %v3136
    %v4259 = vpack.c.b16 %v3139, %v3137
    %v4260 = vpack.c.b16 %v3142, %v3140
    %v4261 = vpack.c.b16 %v3143, %v3141
    %v4262 = vpack.c.b16 %v3146, %v3144
    %v4263 = vpack.c.b16 %v3147, %v3145
    %v4264 = vpack.c.b16 %v3150, %v3148
    %v4265 = vpack.c.b16 %v3151, %v3149
    %v4266 = vpack.c.b16 %v3154, %v3152
    %v4267 = vpack.c.b16 %v3155, %v3153
    %v4268 = vpack.c.b16 %v3158, %v3156
    %v4269 = vpack.c.b16 %v3159, %v3157
    %v4270 = vpack.c.b16 %v3162, %v3160
    %v4271 = vpack.c.b16 %v3163, %v3161
    %v4272 = vpack.c.b16 %v3166, %v3164
    %v4273 = vpack.c.b16 %v3167, %v3165
    %v4274 = vpack.c.b16 %v3170, %v3168
    %v4275 = vpack.c.b16 %v3171, %v3169
    %v4276 = vpack.c.b16 %v3174, %v3172
    %v4277 = vpack.c.b16 %v3175, %v3173
    %v4278 = vpack.c.b16 %v3178, %v3176
    %v4279 = vpack.c.b16 %v3179, %v3177
    %v4280 = vpack.c.b16 %v3182, %v3180
    %v4281 = vpack.c.b16 %v3183, %v3181
    %v4282 = vpack.c.b16 %v3186, %v3184
    %v4283 = vpack.c.b16 %v3187, %v3185
    %v4284 = vpack.c.b16 %v3190, %v3188
    %v4285 = vpack.c.b16 %v3191, %v3189
    %v4286 = vpack.c.b16 %v3194, %v3192
    %v4287 = vpack.c.b16 %v3195, %v3193
    %v4288 = vpack.c.b16 %v3198, %v3196
    %v4289 = vpack.c.b16 %v3199, %v3197
    %v4290 = vpack.c.b16 %v3202, %v3200
    %v4291 = vpack.c.b16 %v3203, %v3201
    %v4292 = vpack.c.b16 %v3206, %v3204
    %v4293 = vpack.c.b16 %v3207, %v3205
    %v4294 = vpack.c.b16 %v3210, %v3208
    %v4295 = vpack.c.b16 %v3211, %v3209
    %v4296 = vpack.c.b16 %v3214, %v3212
    %v4297 = vpack.c.b16 %v3215, %v3213
    %v4298 = vpack.c.b16 %v3218, %v3216
    %v4299 = vpack.c.b16 %v3219, %v3217
    %v4300 = vpack.c.b16 %v3222, %v3220
    %v4301 = vpack.c.b16 %v3223, %v3221
    %v4302 = vpack.c.b16 %v3226, %v3224
    %v4303 = vpack.c.b16 %v3227, %v3225
    %v4304 = vpack.c.b16 %v3230, %v3228
    %v4305 = vpack.c.b16 %v3231, %v3229
    %v4306 = vpack.c.b16 %v3234, %v3232
    %v4307 = vpack.c.b16 %v3235, %v3233
    %v4308 = vpack.c.b16 %v3238, %v3236
    %v4309 = vpack.c.b16 %v3239, %v3237
    %v4310 = vpack.c.b16 %v3242, %v3240
    %v4311 = vpack.c.b16 %v3243, %v3241
    %v4312 = vpack.c.b16 %v3246, %v3244
    %v4313 = vpack.c.b16 %v3247, %v3245
    %v4314 = vpack.c.b16 %v3250, %v3248
    %v4315 = vpack.c.b16 %v3251, %v3249
    %v4316 = vpack.c.b16 %v3254, %v3252
    %v4317 = vpack.c.b16 %v3255, %v3253
    %v4318 = vpack.c.b16 %v3258, %v3256
    %v4319 = vpack.c.b16 %v3259, %v3257
    %v4320 = vpack.c.b16 %v3262, %v3260
    %v4321 = vpack.c.b16 %v3263, %v3261
    %v4322 = vpack.c.b16 %v3266, %v3264
    %v4323 = vpack.c.b16 %v3267, %v3265
    %v4324 = vpack.c.b16 %v3270, %v3268
    %v4325 = vpack.c.b16 %v3271, %v3269
    %v4326 = vpack.c.b16 %v3274, %v3272
    %v4327 = vpack.c.b16 %v3275, %v3273
    %v4328 = vpack.c.b16 %v3278, %v3276
    %v4329 = vpack.c.b16 %v3279, %v3277
    %v4330 = vpack.c.b16 %v3282, %v3280
    %v4331 = vpack.c.b16 %v3283, %v3281
    %v4332 = vpack.c.b16 %v3286, %v3284
    %v4333 = vpack.c.b16 %v3287, %v3285
    %v4334 = vpack.c.b16 %v3290, %v3288
    %v4335 = vpack.c.b16 %v3291, %v3289
    %v4336 = vpack.c.b16 %v3294, %v3292
    %v4337 = vpack.c.b16 %v3295, %v3293
    %v4338 = vpack.c.b16 %v3298, %v3296
    %v4339 = vpack.c.b16 %v3299, %v3297
    %v4340 = vpack.c.b16 %v3302, %v3300
    %v4341 = vpack.c.b16 %v3303, %v3301
    %v4342 = vpack.c.b16 %v3306, %v3304
    %v4343 = vpack.c.b16 %v3307, %v3305
    %v4344 = vpack.c.b16 %v3310, %v3308
    %v4345 = vpack.c.b16 %v3311, %v3309
    %v4346 = vpack.c.b16 %v3314, %v3312
    %v4347 = vpack.c.b16 %v3315, %v3313
    %v4348 = vpack.c.b16 %v3318, %v3316
    %v4349 = vpack.c.b16 %v3319, %v3317
    %v4350 = vpack.c.b16 %v3322, %v3320
    %v4351 = vpack.c.b16 %v3323, %v3321
    %v4352 = vpack.c.b16 %v3326, %v3324
    %v4353 = vpack.c.b16 %v3327, %v3325
    %v4354 = vpack.c.b16 %v3330, %v3328
    %v4355 = vpack.c.b16 %v3331, %v3329
    %v4356 = vpack.c.b16 %v3334, %v3332
    %v4357 = vpack.c.b16 %v3335, %v3333
    %v4358 = vpack.c.b16 %v3338, %v3336
    %v4359 = vpack.c.b16 %v3339, %v3337
    %v4360 = vpack.c.b16 %v3342, %v3340
    %v4361 = vpack.c.b16 %v3343, %v3341
    %v4362 = vpack.c.b16 %v3346, %v3344
    %v4363 = vpack.c.b16 %v3347, %v3345
    %v4364 = vpack.c.b16 %v3350, %v3348
    %v4365 = vpack.c.b16 %v3351, %v3349
    %v4366 = vpack.c.b16 %v3354, %v3352
    %v4367 = vpack.c.b16 %v3355, %v3353
    %v4368 = vpack.c.b16 %v3358, %v3356
    %v4369 = vpack.c.b16 %v3359, %v3357
    %v4370 = vpack.c.b16 %v3362, %v3360
    %v4371 = vpack.c.b16 %v3363, %v3361
    %v4372 = vpack.c.b16 %v3366, %v3364
    %v4373 = vpack.c.b16 %v3367, %v3365
    %v4374 = vpack.c.b16 %v3370, %v3368
    %v4375 = vpack.c.b16 %v3371, %v3369
    %v4376 = vpack.c.b16 %v3374, %v3372
    %v4377 = vpack.c.b16 %v3375, %v3373
    %v4378 = vpack.c.b16 %v3378, %v3376
    %v4379 = vpack.c.b16 %v3379, %v3377
    %v4380 = vpack.c.b16 %v3382, %v3380
    %v4381 = vpack.c.b16 %v3383, %v3381
    %v4382 = vpack.c.b16 %v3386, %v3384
    %v4383 = vpack.c.b16 %v3387, %v3385
    %v4384 = vpack.c.b16 %v3390, %v3388
    %v4385 = vpack.c.b16 %v3391, %v3389
    %v4386 = vpack.c.b16 %v3394, %v3392
    %v4387 = vpack.c.b16 %v3395, %v3393
    %v4388 = vpack.c.b16 %v3398, %v3396
    %v4389 = vpack.c.b16 %v3399, %v3397
    %v4390 = vpack.c.b16 %v3402, %v3400
    %v4391 = vpack.c.b16 %v3403, %v3401
    %v4392 = vpack.c.b16 %v3406, %v3404
    %v4393 = vpack.c.b16 %v3407, %v3405
    %v4394 = vpack.c.b16 %v3410, %v3408
    %v4395 = vpack.c.b16 %v3411, %v3409
    %v4396 = vpack.c.b16 %v3414, %v3412
    %v4397 = vpack.c.b16 %v3415, %v3413
    %v4398 = vpack.c.b16 %v3418, %v3416
    %v4399 = vpack.c.b16 %v3419, %v3417
    %v4400 = vpack.c.b16 %v3422, %v3420
    %v4401 = vpack.c.b16 %v3423, %v3421
    %v4402 = vpack.c.b16 %v3426, %v3424
    %v4403 = vpack.c.b16 %v3427, %v3425
    %v4404 = vpack.c.b16 %v3430, %v3428
    %v4405 = vpack.c.b16 %v3431, %v3429
    %v4406 = vpack.c.b16 %v3434, %v3432
    %v4407 = vpack.c.b16 %v3435, %v3433
    %v4408 = vpack.c.b16 %v3438, %v3436
    %v4409 = vpack.c.b16 %v3439, %v3437
    %v4410 = vpack.c.b16 %v3442, %v3440
    %v4411 = vpack.c.b16 %v3443, %v3441
    %v4412 = vpack.c.b16 %v3446, %v3444
    %v4413 = vpack.c.b16 %v3447, %v3445
    %v4414 = vpack.c.b16 %v3450, %v3448
    %v4415 = vpack.c.b16 %v3451, %v3449
    %v4416 = vpack.c.b16 %v3454, %v3452
    %v4417 = vpack.c.b16 %v3455, %v3453
    %v4418 = vpack.c.b16 %v3458, %v3456
    %v4419 = vpack.c.b16 %v3459, %v3457
    %v4420 = vpack.c.b16 %v3462, %v3460
    %v4421 = vpack.c.b16 %v3463, %v3461
    %v4422 = vpack.c.b16 %v3466, %v3464
    %v4423 = vpack.c.b16 %v3467, %v3465
    %v4424 = vpack.c.b16 %v3470, %v3468
    %v4425 = vpack.c.b16 %v3471, %v3469
    %v4426 = vpack.c.b16 %v3474, %v3472
    %v4427 = vpack.c.b16 %v3475, %v3473
    %v4428 = vpack.c.b16 %v3478, %v3476
    %v4429 = vpack.c.b16 %v3479, %v3477
    %v4430 = vpack.c.b16 %v3482, %v3480
    %v4431 = vpack.c.b16 %v3483, %v3481
    %v4432 = vpack.c.b16 %v3486, %v3484
    %v4433 = vpack.c.b16 %v3487, %v3485
    %v4434 = vpack.c.b16 %v3490, %v3488
    %v4435 = vpack.c.b16 %v3491, %v3489
    %v4436 = vpack.c.b16 %v3494, %v3492
    %v4437 = vpack.c.b16 %v3495, %v3493
    %v4438 = vpack.c.b16 %v3498, %v3496
    %v4439 = vpack.c.b16 %v3499, %v3497
    %v4440 = vpack.c.b16 %v3502, %v3500
    %v4441 = vpack.c.b16 %v3503, %v3501
    %v4442 = vpack.c.b16 %v3506, %v3504
    %v4443 = vpack.c.b16 %v3507, %v3505
    %v4444 = vpack.c.b16 %v3510, %v3508
    %v4445 = vpack.c.b16 %v3511, %v3509
    %v4446 = vpack.c.b16 %v3514, %v3512
    %v4447 = vpack.c.b16 %v3515, %v3513
    %v4448 = vpack.c.b16 %v3518, %v3516
    %v4449 = vpack.c.b16 %v3519, %v3517
    %v4450 = vpack.c.b16 %v3522, %v3520
    %v4451 = vpack.c.b16 %v3523, %v3521
    %v4452 = vpack.c.b16 %v3526, %v3524
    %v4453 = vpack.c.b16 %v3527, %v3525
    %v4454 = vpack.c.b16 %v3530, %v3528
    %v4455 = vpack.c.b16 %v3531, %v3529
    %v4456 = vpack.c.b16 %v3534, %v3532
    %v4457 = vpack.c.b16 %v3535, %v3533
    %v4458 = vpack.c.b16 %v3538, %v3536
    %v4459 = vpack.c.b16 %v3539, %v3537
    %v4460 = vpack.c.b16 %v3542, %v3540
    %v4461 = vpack.c.b16 %v3543, %v3541
    %v4462 = vpack.c.b16 %v3546, %v3544
    %v4463 = vpack.c.b16 %v3547, %v3545
    %v4464 = vpack.c.b16 %v3550, %v3548
    %v4465 = vpack.c.b16 %v3551, %v3549
    %v4466 = vpack.c.b16 %v3554, %v3552
    %v4467 = vpack.c.b16 %v3555, %v3553
    %v4468 = vpack.c.b16 %v3558, %v3556
    %v4469 = vpack.c.b16 %v3559, %v3557
    %v4470 = vpack.c.b16 %v3562, %v3560
    %v4471 = vpack.c.b16 %v3563, %v3561
    %v4472 = vpack.c.b16 %v3566, %v3564
    %v4473 = vpack.c.b16 %v3567, %v3565
    %v4474 = vpack.c.b16 %v3570, %v3568
    %v4475 = vpack.c.b16 %v3571, %v3569
    %v4476 = vpack.c.b16 %v3574, %v3572
    %v4477 = vpack.c.b16 %v3575, %v3573
    %v4478 = vpack.c.b16 %v3578, %v3576
    %v4479 = vpack.c.b16 %v3579, %v3577
    %v4480 = vpack.c.b16 %v3582, %v3580
    %v4481 = vpack.c.b16 %v3583, %v3581
    %v4482 = vpack.c.b16 %v3586, %v3584
    %v4483 = vpack.c.b16 %v3587, %v3585
    %v4484 = vpack.c.b16 %v3590, %v3588
    %v4485 = vpack.c.b16 %v3591, %v3589
    %v4486 = vpack.c.b16 %v3594, %v3592
    %v4487 = vpack.c.b16 %v3595, %v3593
    %v4488 = vpack.c.b16 %v3598, %v3596
    %v4489 = vpack.c.b16 %v3599, %v3597
    %v4490 = vpack.c.b16 %v3602, %v3600
    %v4491 = vpack.c.b16 %v3603, %v3601
    %v4492 = vpack.c.b16 %v3606, %v3604
    %v4493 = vpack.c.b16 %v3607, %v3605
    %v4494 = vpack.c.b16 %v3610, %v3608
    %v4495 = vpack.c.b16 %v3611, %v3609
    %v4496 = vpack.c.b16 %v3614, %v3612
    %v4497 = vpack.c.b16 %v3615, %v3613
    %v4498 = vpack.c.b16 %v3618, %v3616
    %v4499 = vpack.c.b16 %v3619, %v3617
    %v4500 = vpack.c.b16 %v3622, %v3620
    %v4501 = vpack.c.b16 %v3623, %v3621
    %v4502 = vpack.c.b16 %v3626, %v3624
    %v4503 = vpack.c.b16 %v3627, %v3625
    %v4504 = vpack.c.b16 %v3630, %v3628
    %v4505 = vpack.c.b16 %v3631, %v3629
    %v4506 = vpack.c.b16 %v3634, %v3632
    %v4507 = vpack.c.b16 %v3635, %v3633
    %v4508 = vpack.c.b16 %v3638, %v3636
    %v4509 = vpack.c.b16 %v3639, %v3637
    %v4510 = vpack.c.b16 %v3642, %v3640
    %v4511 = vpack.c.b16 %v3643, %v3641
    %v4512 = vpack.c.b16 %v3646, %v3644
    %v4513 = vpack.c.b16 %v3647, %v3645
    %v4514 = vpack.c.b16 %v3650, %v3648
    %v4515 = vpack.c.b16 %v3651, %v3649
    %v4516 = vpack.c.b16 %v3654, %v3652
    %v4517 = vpack.c.b16 %v3655, %v3653
    %v4518 = vpack.c.b16 %v3658, %v3656
    %v4519 = vpack.c.b16 %v3659, %v3657
    %v4520 = vpack.c.b16 %v3662, %v3660
    %v4521 = vpack.c.b16 %v3663, %v3661
    %v4522 = vpack.c.b16 %v3666, %v3664
    %v4523 = vpack.c.b16 %v3667, %v3665
    %v4524 = vpack.c.b16 %v3670, %v3668
    %v4525 = vpack.c.b16 %v3671, %v3669
    %v4526 = vpack.c.b16 %v3674, %v3672
    %v4527 = vpack.c.b16 %v3675, %v3673
    %v4528 = vpack.c.b16 %v3678, %v3676
    %v4529 = vpack.c.b16 %v3679, %v3677
    %v4530 = vpack.c.b16 %v3682, %v3680
    %v4531 = vpack.c.b16 %v3683, %v3681
    %v4532 = vpack.c.b16 %v3686, %v3684
    %v4533 = vpack.c.b16 %v3687, %v3685
    %v4534 = vpack.c.b16 %v3690, %v3688
    %v4535 = vpack.c.b16 %v3691, %v3689
    %v4536 = vpack.c.b16 %v3694, %v3692
    %v4537 = vpack.c.b16 %v3695, %v3693
    %v4538 = vpack.c.b16 %v3698, %v3696
    %v4539 = vpack.c.b16 %v3699, %v3697
    %v4540 = vpack.c.b16 %v3702, %v3700
    %v4541 = vpack.c.b16 %v3703, %v3701
    %v4542 = vpack.c.b16 %v3706, %v3704
    %v4543 = vpack.c.b16 %v3707, %v3705
    %v4544 = vpack.c.b16 %v3710, %v3708
    %v4545 = vpack.c.b16 %v3711, %v3709
    %v4546 = vpack.c.b16 %v3714, %v3712
    %v4547 = vpack.c.b16 %v3715, %v3713
    %v4548 = vpack.c.b16 %v3718, %v3716
    %v4549 = vpack.c.b16 %v3719, %v3717
    %v4550 = vpack.c.b16 %v3722, %v3720
    %v4551 = vpack.c.b16 %v3723, %v3721
    %v4552 = vpack.c.b16 %v3726, %v3724
    %v4553 = vpack.c.b16 %v3727, %v3725
    %v4554 = vpack.c.b16 %v3730, %v3728
    %v4555 = vpack.c.b16 %v3731, %v3729
    %v4556 = vpack.c.b16 %v3734, %v3732
    %v4557 = vpack.c.b16 %v3735, %v3733
    %v4558 = vpack.c.b16 %v3738, %v3736
    %v4559 = vpack.c.b16 %v3739, %v3737
    %v4560 = vpack.c.b16 %v3742, %v3740
    %v4561 = vpack.c.b16 %v3743, %v3741
    %v4562 = vpack.c.b16 %v3746, %v3744
    %v4563 = vpack.c.b16 %v3747, %v3745
    %v4564 = vpack.c.b16 %v3750, %v3748
    %v4565 = vpack.c.b16 %v3751, %v3749
    %v4566 = vpack.c.b16 %v3754, %v3752
    %v4567 = vpack.c.b16 %v3755, %v3753
    %v4568 = vpack.c.b16 %v3758, %v3756
    %v4569 = vpack.c.b16 %v3759, %v3757
    %v4570 = vpack.c.b16 %v3762, %v3760
    %v4571 = vpack.c.b16 %v3763, %v3761
    %v4572 = vpack.c.b16 %v3766, %v3764
    %v4573 = vpack.c.b16 %v3767, %v3765
    %v4574 = vpack.c.b16 %v3770, %v3768
    %v4575 = vpack.c.b16 %v3771, %v3769
    %v4576 = vpack.c.b16 %v3774, %v3772
    %v4577 = vpack.c.b16 %v3775, %v3773
    %v4578 = vpack.c.b16 %v3778, %v3776
    %v4579 = vpack.c.b16 %v3779, %v3777
    %5380 = vmatprep.subr.bf16.mxu0 %v3781
    %5381 = vmatpush1.bf16.msra.mxu0 %v3780
    %5382 = vmatprep.subr.bf16.mxu0 %v3783
    %5383 = vmatpush1.bf16.msra.mxu0 %v3782
    %5384 = vmatprep.subr.bf16.mxu0 %v3785
    %5385 = vmatpush1.bf16.msra.mxu0 %v3784
    %5386 = vmatprep.subr.bf16.mxu0 %v3787
    %5387 = vmatpush1.bf16.msra.mxu0 %v3786
    %5388 = vmatprep.subr.bf16.mxu0 %v3789
    %5389 = vmatpush1.bf16.msra.mxu0 %v3788
    %5390 = vmatprep.subr.bf16.mxu0 %v3791
    %5391 = vmatpush1.bf16.msra.mxu0 %v3790
    %5392 = vmatprep.subr.bf16.mxu0 %v3793
    %5393 = vmatpush1.bf16.msra.mxu0 %v3792
    %5394 = vmatprep.subr.bf16.mxu0 %v3795
    %5395 = vmatpush1.bf16.msra.mxu0 %v3794
    %5396 = vmatprep.subr.bf16.mxu0 %v3797
    %5397 = vmatpush1.bf16.msra.mxu0 %v3796
    %5398 = vmatprep.subr.bf16.mxu0 %v3799
    %5399 = vmatpush1.bf16.msra.mxu0 %v3798
    %5400 = vmatprep.subr.bf16.mxu0 %v3801
    %5401 = vmatpush1.bf16.msra.mxu0 %v3800
    %5402 = vmatprep.subr.bf16.mxu0 %v3803
    %5403 = vmatpush1.bf16.msra.mxu0 %v3802
    %5404 = vmatprep.subr.bf16.mxu0 %v3805
    %5405 = vmatpush1.bf16.msra.mxu0 %v3804
    %5406 = vmatprep.subr.bf16.mxu0 %v3807
    %5407 = vmatpush1.bf16.msra.mxu0 %v3806
    %5408 = vmatprep.subr.bf16.mxu0 %v3809
    %5409 = vmatpush1.bf16.msra.mxu0 %v3808
    %5410 = vmatprep.subr.bf16.mxu0 %v3811
    %5411 = vmatpush1.bf16.msra.mxu0 %v3810
    %5412 = vmatprep.mubr.bf16.mxu0 %v946
    %5413 = vmatmul.mubr.bf16.gmra.mrb[0].mxu0 %v932
    %v5414 = vpop.f32.mrb[0].mxu0
    %v5415 = vadd.f32 %v855, %v5414
    %v5416 = vpop.f32.mrb[0].mxu0
    %v5417 = vadd.f32 %v859, %v5416
    %v5418 = vpop.f32.mrb[0].mxu0
    %v5419 = vpop.f32.mrb[0].mxu0
    %5420 = vdwg.mxu0
    %5421 = vmatprep.subr.bf16.mxu0 %v3813
    %5422 = vmatpush1.bf16.msra.mxu0 %v3812
    %5423 = vmatprep.subr.bf16.mxu0 %v3815
    %5424 = vmatpush1.bf16.msra.mxu0 %v3814
    %5425 = vmatprep.subr.bf16.mxu0 %v3817
    %5426 = vmatpush1.bf16.msra.mxu0 %v3816
    %5427 = vmatprep.subr.bf16.mxu0 %v3819
    %5428 = vmatpush1.bf16.msra.mxu0 %v3818
    %5429 = vmatprep.subr.bf16.mxu0 %v3821
    %5430 = vmatpush1.bf16.msra.mxu0 %v3820
    %5431 = vmatprep.subr.bf16.mxu0 %v3823
    %5432 = vmatpush1.bf16.msra.mxu0 %v3822
    %5433 = vmatprep.subr.bf16.mxu0 %v3825
    %5434 = vmatpush1.bf16.msra.mxu0 %v3824
    %5435 = vmatprep.subr.bf16.mxu0 %v3827
    %5436 = vmatpush1.bf16.msra.mxu0 %v3826
    %5437 = vmatprep.subr.bf16.mxu0 %v3829
    %5438 = vmatpush1.bf16.msra.mxu0 %v3828
    %5439 = vmatprep.subr.bf16.mxu0 %v3831
    %5440 = vmatpush1.bf16.msra.mxu0 %v3830
    %5441 = vmatprep.subr.bf16.mxu0 %v3833
    %5442 = vmatpush1.bf16.msra.mxu0 %v3832
    %5443 = vmatprep.subr.bf16.mxu0 %v3835
    %5444 = vmatpush1.bf16.msra.mxu0 %v3834
    %5445 = vmatprep.subr.bf16.mxu0 %v3837
    %5446 = vmatpush1.bf16.msra.mxu0 %v3836
    %5447 = vmatprep.subr.bf16.mxu0 %v3839
    %5448 = vmatpush1.bf16.msra.mxu0 %v3838
    %5449 = vmatprep.subr.bf16.mxu0 %v3841
    %5450 = vmatpush1.bf16.msra.mxu0 %v3840
    %5451 = vmatprep.subr.bf16.mxu0 %v3843
    %5452 = vmatpush1.bf16.msra.mxu0 %v3842
    %5453 = vmatprep.mubr.bf16.mxu0 %v956
    %5454 = vmatmul.mubr.bf16.gmra.mrb[0].mxu0 %v954
    %v5455 = vpop.f32.mrb[0].mxu0
    %v5456 = vadd.f32 %v5415, %v5455
    %v5457 = vpop.f32.mrb[0].mxu0
    %v5458 = vadd.f32 %v5417, %v5457
    %v5459 = vpop.f32.mrb[0].mxu0
    %v5460 = vpop.f32.mrb[0].mxu0
    %5461 = vdwg.mxu0
    %5462 = vmatprep.subr.bf16.mxu0 %v3845
    %5463 = vmatpush1.bf16.msra.mxu0 %v3844
    %5464 = vmatprep.subr.bf16.mxu0 %v3847
    %5465 = vmatpush1.bf16.msra.mxu0 %v3846
    %5466 = vmatprep.subr.bf16.mxu0 %v3849
    %5467 = vmatpush1.bf16.msra.mxu0 %v3848
    %5468 = vmatprep.subr.bf16.mxu0 %v3851
    %5469 = vmatpush1.bf16.msra.mxu0 %v3850
    %5470 = vmatprep.subr.bf16.mxu0 %v3853
    %5471 = vmatpush1.bf16.msra.mxu0 %v3852
    %5472 = vmatprep.subr.bf16.mxu0 %v3855
    %5473 = vmatpush1.bf16.msra.mxu0 %v3854
    %5474 = vmatprep.subr.bf16.mxu0 %v3857
    %5475 = vmatpush1.bf16.msra.mxu0 %v3856
    %5476 = vmatprep.subr.bf16.mxu0 %v3859
    %5477 = vmatpush1.bf16.msra.mxu0 %v3858
    %5478 = vmatprep.subr.bf16.mxu0 %v3861
    %5479 = vmatpush1.bf16.msra.mxu0 %v3860
    %5480 = vmatprep.subr.bf16.mxu0 %v3863
    %5481 = vmatpush1.bf16.msra.mxu0 %v3862
    %5482 = vmatprep.subr.bf16.mxu0 %v3865
    %5483 = vmatpush1.bf16.msra.mxu0 %v3864
    %5484 = vmatprep.subr.bf16.mxu0 %v3867
    %5485 = vmatpush1.bf16.msra.mxu0 %v3866
    %5486 = vmatprep.subr.bf16.mxu0 %v3869
    %5487 = vmatpush1.bf16.msra.mxu0 %v3868
    %5488 = vmatprep.subr.bf16.mxu0 %v3871
    %5489 = vmatpush1.bf16.msra.mxu0 %v3870
    %5490 = vmatprep.subr.bf16.mxu0 %v3873
    %5491 = vmatpush1.bf16.msra.mxu0 %v3872
    %5492 = vmatprep.subr.bf16.mxu0 %v3875
    %5493 = vmatpush1.bf16.msra.mxu0 %v3874
    %5494 = vmatprep.mubr.bf16.mxu0 %v953
    %5495 = vmatmul.mubr.bf16.gmra.mrb[0].mxu0 %v939
    %v5496 = vpop.f32.mrb[0].mxu0
    %v5497 = vadd.f32 %v5456, %v5496
    %v5498 = vpop.f32.mrb[0].mxu0
    %v5499 = vadd.f32 %v5458, %v5498
    %v5500 = vpop.f32.mrb[0].mxu0
    %v5501 = vpop.f32.mrb[0].mxu0
    %5502 = vdwg.mxu0
    %5503 = vmatprep.subr.bf16.mxu0 %v3877
    %5504 = vmatpush1.bf16.msra.mxu0 %v3876
    %5505 = vmatprep.subr.bf16.mxu0 %v3879
    %5506 = vmatpush1.bf16.msra.mxu0 %v3878
    %5507 = vmatprep.subr.bf16.mxu0 %v3881
    %5508 = vmatpush1.bf16.msra.mxu0 %v3880
    %5509 = vmatprep.subr.bf16.mxu0 %v3883
    %5510 = vmatpush1.bf16.msra.mxu0 %v3882
    %5511 = vmatprep.subr.bf16.mxu0 %v3885
    %5512 = vmatpush1.bf16.msra.mxu0 %v3884
    %5513 = vmatprep.subr.bf16.mxu0 %v3887
    %5514 = vmatpush1.bf16.msra.mxu0 %v3886
    %5515 = vmatprep.subr.bf16.mxu0 %v3889
    %5516 = vmatpush1.bf16.msra.mxu0 %v3888
    %5517 = vmatprep.subr.bf16.mxu0 %v3891
    %5518 = vmatpush1.bf16.msra.mxu0 %v3890
    %5519 = vmatprep.subr.bf16.mxu0 %v3893
    %5520 = vmatpush1.bf16.msra.mxu0 %v3892
    %5521 = vmatprep.subr.bf16.mxu0 %v3895
    %5522 = vmatpush1.bf16.msra.mxu0 %v3894
    %5523 = vmatprep.subr.bf16.mxu0 %v3897
    %5524 = vmatpush1.bf16.msra.mxu0 %v3896
    %5525 = vmatprep.subr.bf16.mxu0 %v3899
    %5526 = vmatpush1.bf16.msra.mxu0 %v3898
    %5527 = vmatprep.subr.bf16.mxu0 %v3901
    %5528 = vmatpush1.bf16.msra.mxu0 %v3900
    %5529 = vmatprep.subr.bf16.mxu0 %v3903
    %5530 = vmatpush1.bf16.msra.mxu0 %v3902
    %5531 = vmatprep.subr.bf16.mxu0 %v3905
    %5532 = vmatpush1.bf16.msra.mxu0 %v3904
    %5533 = vmatprep.subr.bf16.mxu0 %v3907
    %5534 = vmatpush1.bf16.msra.mxu0 %v3906
    %5535 = vmatprep.mubr.bf16.mxu0 %v957
    %5536 = vmatmul.mubr.bf16.gmra.mrb[0].mxu0 %v955
    %v5537 = vpop.f32.mrb[0].mxu0
    %v5538 = vadd.f32 %v5497, %v5537
    %v5539 = vpop.f32.mrb[0].mxu0
    %v5540 = vadd.f32 %v5499, %v5539
    %v5541 = vpop.f32.mrb[0].mxu0
    %v5542 = vpop.f32.mrb[0].mxu0
    %5543 = vdwg.mxu0
    %5544 = vmatprep.subr.bf16.mxu0 %v3909
    %5545 = vmatpush1.bf16.msra.mxu0 %v3908
    %5546 = vmatprep.subr.bf16.mxu0 %v3911
    %5547 = vmatpush1.bf16.msra.mxu0 %v3910
    %5548 = vmatprep.subr.bf16.mxu0 %v3913
    %5549 = vmatpush1.bf16.msra.mxu0 %v3912
    %5550 = vmatprep.subr.bf16.mxu0 %v3915
    %5551 = vmatpush1.bf16.msra.mxu0 %v3914
    %5552 = vmatprep.subr.bf16.mxu0 %v3917
    %5553 = vmatpush1.bf16.msra.mxu0 %v3916
    %5554 = vmatprep.subr.bf16.mxu0 %v3919
    %5555 = vmatpush1.bf16.msra.mxu0 %v3918
    %5556 = vmatprep.subr.bf16.mxu0 %v3921
    %5557 = vmatpush1.bf16.msra.mxu0 %v3920
    %5558 = vmatprep.subr.bf16.mxu0 %v3923
    %5559 = vmatpush1.bf16.msra.mxu0 %v3922
    %5560 = vmatprep.subr.bf16.mxu0 %v3925
    %5561 = vmatpush1.bf16.msra.mxu0 %v3924
    %5562 = vmatprep.subr.bf16.mxu0 %v3927
    %5563 = vmatpush1.bf16.msra.mxu0 %v3926
    %5564 = vmatprep.subr.bf16.mxu0 %v3929
    %5565 = vmatpush1.bf16.msra.mxu0 %v3928
    %5566 = vmatprep.subr.bf16.mxu0 %v3931
    %5567 = vmatpush1.bf16.msra.mxu0 %v3930
    %5568 = vmatprep.subr.bf16.mxu0 %v3933
    %5569 = vmatpush1.bf16.msra.mxu0 %v3932
    %5570 = vmatprep.subr.bf16.mxu0 %v3935
    %5571 = vmatpush1.bf16.msra.mxu0 %v3934
    %5572 = vmatprep.subr.bf16.mxu0 %v3937
    %5573 = vmatpush1.bf16.msra.mxu0 %v3936
    %5574 = vmatprep.subr.bf16.mxu0 %v3939
    %5575 = vmatpush1.bf16.msra.mxu0 %v3938
    %5576 = vmatprep.mubr.bf16.mxu0 %v1014
    %5577 = vmatmul.mubr.bf16.gmra.mrb[0].mxu0 %v1000
    %v5578 = vpop.f32.mrb[0].mxu0
    %v5579 = vadd.f32 %v5538, %v5578
    %v5580 = vpop.f32.mrb[0].mxu0
    %v5581 = vadd.f32 %v5540, %v5580
    %v5582 = vpop.f32.mrb[0].mxu0
    %v5583 = vpop.f32.mrb[0].mxu0
    %5584 = vdwg.mxu0
    %5585 = vmatprep.subr.bf16.mxu0 %v3941
    %5586 = vmatpush1.bf16.msra.mxu0 %v3940
    %5587 = vmatprep.subr.bf16.mxu0 %v3943
    %5588 = vmatpush1.bf16.msra.mxu0 %v3942
    %5589 = vmatprep.subr.bf16.mxu0 %v3945
    %5590 = vmatpush1.bf16.msra.mxu0 %v3944
    %5591 = vmatprep.subr.bf16.mxu0 %v3947
    %5592 = vmatpush1.bf16.msra.mxu0 %v3946
    %5593 = vmatprep.subr.bf16.mxu0 %v3949
    %5594 = vmatpush1.bf16.msra.mxu0 %v3948
    %5595 = vmatprep.subr.bf16.mxu0 %v3951
    %5596 = vmatpush1.bf16.msra.mxu0 %v3950
    %5597 = vmatprep.subr.bf16.mxu0 %v3953
    %5598 = vmatpush1.bf16.msra.mxu0 %v3952
    %5599 = vmatprep.subr.bf16.mxu0 %v3955
    %5600 = vmatpush1.bf16.msra.mxu0 %v3954
    %5601 = vmatprep.subr.bf16.mxu0 %v3957
    %5602 = vmatpush1.bf16.msra.mxu0 %v3956
    %5603 = vmatprep.subr.bf16.mxu0 %v3959
    %5604 = vmatpush1.bf16.msra.mxu0 %v3958
    %5605 = vmatprep.subr.bf16.mxu0 %v3961
    %5606 = vmatpush1.bf16.msra.mxu0 %v3960
    %5607 = vmatprep.subr.bf16.mxu0 %v3963
    %5608 = vmatpush1.bf16.msra.mxu0 %v3962
    %5609 = vmatprep.subr.bf16.mxu0 %v3965
    %5610 = vmatpush1.bf16.msra.mxu0 %v3964
    %5611 = vmatprep.subr.bf16.mxu0 %v3967
    %5612 = vmatpush1.bf16.msra.mxu0 %v3966
    %5613 = vmatprep.subr.bf16.mxu0 %v3969
    %5614 = vmatpush1.bf16.msra.mxu0 %v3968
    %5615 = vmatprep.subr.bf16.mxu0 %v3971
    %5616 = vmatpush1.bf16.msra.mxu0 %v3970
    %5617 = vmatprep.mubr.bf16.mxu0 %v1024
    %5618 = vmatmul.mubr.bf16.gmra.mrb[0].mxu0 %v1022
    %v5619 = vpop.f32.mrb[0].mxu0
    %v5620 = vadd.f32 %v5579, %v5619
    %v5621 = vpop.f32.mrb[0].mxu0
    %v5622 = vadd.f32 %v5581, %v5621
    %v5623 = vpop.f32.mrb[0].mxu0
    %v5624 = vpop.f32.mrb[0].mxu0
    %5625 = vdwg.mxu0
    %5626 = vmatprep.subr.bf16.mxu0 %v3973
    %5627 = vmatpush1.bf16.msra.mxu0 %v3972
    %5628 = vmatprep.subr.bf16.mxu0 %v3975
    %5629 = vmatpush1.bf16.msra.mxu0 %v3974
    %5630 = vmatprep.subr.bf16.mxu0 %v3977
    %5631 = vmatpush1.bf16.msra.mxu0 %v3976
    %5632 = vmatprep.subr.bf16.mxu0 %v3979
    %5633 = vmatpush1.bf16.msra.mxu0 %v3978
    %5634 = vmatprep.subr.bf16.mxu0 %v3981
    %5635 = vmatpush1.bf16.msra.mxu0 %v3980
    %5636 = vmatprep.subr.bf16.mxu0 %v3983
    %5637 = vmatpush1.bf16.msra.mxu0 %v3982
    %5638 = vmatprep.subr.bf16.mxu0 %v3985
    %5639 = vmatpush1.bf16.msra.mxu0 %v3984
    %5640 = vmatprep.subr.bf16.mxu0 %v3987
    %5641 = vmatpush1.bf16.msra.mxu0 %v3986
    %5642 = vmatprep.subr.bf16.mxu0 %v3989
    %5643 = vmatpush1.bf16.msra.mxu0 %v3988
    %5644 = vmatprep.subr.bf16.mxu0 %v3991
    %5645 = vmatpush1.bf16.msra.mxu0 %v3990
    %5646 = vmatprep.subr.bf16.mxu0 %v3993
    %5647 = vmatpush1.bf16.msra.mxu0 %v3992
    %5648 = vmatprep.subr.bf16.mxu0 %v3995
    %5649 = vmatpush1.bf16.msra.mxu0 %v3994
    %5650 = vmatprep.subr.bf16.mxu0 %v3997
    %5651 = vmatpush1.bf16.msra.mxu0 %v3996
    %5652 = vmatprep.subr.bf16.mxu0 %v3999
    %5653 = vmatpush1.bf16.msra.mxu0 %v3998
    %5654 = vmatprep.subr.bf16.mxu0 %v4001
    %5655 = vmatpush1.bf16.msra.mxu0 %v4000
    %5656 = vmatprep.subr.bf16.mxu0 %v4003
    %5657 = vmatpush1.bf16.msra.mxu0 %v4002
    %5658 = vmatprep.mubr.bf16.mxu0 %v1021
    %5659 = vmatmul.mubr.bf16.gmra.mrb[0].mxu0 %v1007
    %v5660 = vpop.f32.mrb[0].mxu0
    %v5661 = vadd.f32 %v5620, %v5660
    %v5662 = vpop.f32.mrb[0].mxu0
    %v5663 = vadd.f32 %v5622, %v5662
    %v5664 = vpop.f32.mrb[0].mxu0
    %v5665 = vpop.f32.mrb[0].mxu0
    %5666 = vdwg.mxu0
    %5667 = vmatprep.subr.bf16.mxu0 %v4005
    %5668 = vmatpush1.bf16.msra.mxu0 %v4004
    %5669 = vmatprep.subr.bf16.mxu0 %v4007
    %5670 = vmatpush1.bf16.msra.mxu0 %v4006
    %5671 = vmatprep.subr.bf16.mxu0 %v4009
    %5672 = vmatpush1.bf16.msra.mxu0 %v4008
    %5673 = vmatprep.subr.bf16.mxu0 %v4011
    %5674 = vmatpush1.bf16.msra.mxu0 %v4010
    %5675 = vmatprep.subr.bf16.mxu0 %v4013
    %5676 = vmatpush1.bf16.msra.mxu0 %v4012
    %5677 = vmatprep.subr.bf16.mxu0 %v4015
    %5678 = vmatpush1.bf16.msra.mxu0 %v4014
    %5679 = vmatprep.subr.bf16.mxu0 %v4017
    %5680 = vmatpush1.bf16.msra.mxu0 %v4016
    %5681 = vmatprep.subr.bf16.mxu0 %v4019
    %5682 = vmatpush1.bf16.msra.mxu0 %v4018
    %5683 = vmatprep.subr.bf16.mxu0 %v4021
    %5684 = vmatpush1.bf16.msra.mxu0 %v4020
    %5685 = vmatprep.subr.bf16.mxu0 %v4023
    %5686 = vmatpush1.bf16.msra.mxu0 %v4022
    %5687 = vmatprep.subr.bf16.mxu0 %v4025
    %5688 = vmatpush1.bf16.msra.mxu0 %v4024
    %5689 = vmatprep.subr.bf16.mxu0 %v4027
    %5690 = vmatpush1.bf16.msra.mxu0 %v4026
    %5691 = vmatprep.subr.bf16.mxu0 %v4029
    %5692 = vmatpush1.bf16.msra.mxu0 %v4028
    %5693 = vmatprep.subr.bf16.mxu0 %v4031
    %5694 = vmatpush1.bf16.msra.mxu0 %v4030
    %5695 = vmatprep.subr.bf16.mxu0 %v4033
    %5696 = vmatpush1.bf16.msra.mxu0 %v4032
    %5697 = vmatprep.subr.bf16.mxu0 %v4035
    %5698 = vmatpush1.bf16.msra.mxu0 %v4034
    %5699 = vmatprep.mubr.bf16.mxu0 %v1025
    %5700 = vmatmul.mubr.bf16.gmra.mrb[0].mxu0 %v1023
    %v5701 = vpop.f32.mrb[0].mxu0
    %v5702 = vadd.f32 %v5661, %v5701
    %v5703 = vpop.f32.mrb[0].mxu0
    %v5704 = vadd.f32 %v5663, %v5703
    %v5705 = vpop.f32.mrb[0].mxu0
    %v5706 = vpop.f32.mrb[0].mxu0
    %5707 = vdwg.mxu0
    %5708 = vmatprep.subr.bf16.mxu0 %v4037
    %5709 = vmatpush1.bf16.msra.mxu0 %v4036
    %5710 = vmatprep.subr.bf16.mxu0 %v4039
    %5711 = vmatpush1.bf16.msra.mxu0 %v4038
    %5712 = vmatprep.subr.bf16.mxu0 %v4041
    %5713 = vmatpush1.bf16.msra.mxu0 %v4040
    %5714 = vmatprep.subr.bf16.mxu0 %v4043
    %5715 = vmatpush1.bf16.msra.mxu0 %v4042
    %5716 = vmatprep.subr.bf16.mxu0 %v4045
    %5717 = vmatpush1.bf16.msra.mxu0 %v4044
    %5718 = vmatprep.subr.bf16.mxu0 %v4047
    %5719 = vmatpush1.bf16.msra.mxu0 %v4046
    %5720 = vmatprep.subr.bf16.mxu0 %v4049
    %5721 = vmatpush1.bf16.msra.mxu0 %v4048
    %5722 = vmatprep.subr.bf16.mxu0 %v4051
    %5723 = vmatpush1.bf16.msra.mxu0 %v4050
    %5724 = vmatprep.subr.bf16.mxu0 %v4053
    %5725 = vmatpush1.bf16.msra.mxu0 %v4052
    %5726 = vmatprep.subr.bf16.mxu0 %v4055
    %5727 = vmatpush1.bf16.msra.mxu0 %v4054
    %5728 = vmatprep.subr.bf16.mxu0 %v4057
    %5729 = vmatpush1.bf16.msra.mxu0 %v4056
    %5730 = vmatprep.subr.bf16.mxu0 %v4059
    %5731 = vmatpush1.bf16.msra.mxu0 %v4058
    %5732 = vmatprep.subr.bf16.mxu0 %v4061
    %5733 = vmatpush1.bf16.msra.mxu0 %v4060
    %5734 = vmatprep.subr.bf16.mxu0 %v4063
    %5735 = vmatpush1.bf16.msra.mxu0 %v4062
    %5736 = vmatprep.subr.bf16.mxu0 %v4065
    %5737 = vmatpush1.bf16.msra.mxu0 %v4064
    %5738 = vmatprep.subr.bf16.mxu0 %v4067
    %5739 = vmatpush1.bf16.msra.mxu0 %v4066
    %5740 = vmatprep.mubr.bf16.mxu0 %v1082
    %5741 = vmatmul.mubr.bf16.gmra.mrb[0].mxu0 %v1068
    %v5742 = vpop.f32.mrb[0].mxu0
    %v5743 = vadd.f32 %v5702, %v5742
    %v5744 = vpop.f32.mrb[0].mxu0
    %v5745 = vadd.f32 %v5704, %v5744
    %v5746 = vpop.f32.mrb[0].mxu0
    %v5747 = vpop.f32.mrb[0].mxu0
    %5748 = vdwg.mxu0
    %5749 = vmatprep.subr.bf16.mxu0 %v4069
    %5750 = vmatpush1.bf16.msra.mxu0 %v4068
    %5751 = vmatprep.subr.bf16.mxu0 %v4071
    %5752 = vmatpush1.bf16.msra.mxu0 %v4070
    %5753 = vmatprep.subr.bf16.mxu0 %v4073
    %5754 = vmatpush1.bf16.msra.mxu0 %v4072
    %5755 = vmatprep.subr.bf16.mxu0 %v4075
    %5756 = vmatpush1.bf16.msra.mxu0 %v4074
    %5757 = vmatprep.subr.bf16.mxu0 %v4077
    %5758 = vmatpush1.bf16.msra.mxu0 %v4076
    %5759 = vmatprep.subr.bf16.mxu0 %v4079
    %5760 = vmatpush1.bf16.msra.mxu0 %v4078
    %5761 = vmatprep.subr.bf16.mxu0 %v4081
    %5762 = vmatpush1.bf16.msra.mxu0 %v4080
    %5763 = vmatprep.subr.bf16.mxu0 %v4083
    %5764 = vmatpush1.bf16.msra.mxu0 %v4082
    %5765 = vmatprep.subr.bf16.mxu0 %v4085
    %5766 = vmatpush1.bf16.msra.mxu0 %v4084
    %5767 = vmatprep.subr.bf16.mxu0 %v4087
    %5768 = vmatpush1.bf16.msra.mxu0 %v4086
    %5769 = vmatprep.subr.bf16.mxu0 %v4089
    %5770 = vmatpush1.bf16.msra.mxu0 %v4088
    %5771 = vmatprep.subr.bf16.mxu0 %v4091
    %5772 = vmatpush1.bf16.msra.mxu0 %v4090
    %5773 = vmatprep.subr.bf16.mxu0 %v4093
    %5774 = vmatpush1.bf16.msra.mxu0 %v4092
    %5775 = vmatprep.subr.bf16.mxu0 %v4095
    %5776 = vmatpush1.bf16.msra.mxu0 %v4094
    %5777 = vmatprep.subr.bf16.mxu0 %v4097
    %5778 = vmatpush1.bf16.msra.mxu0 %v4096
    %5779 = vmatprep.subr.bf16.mxu0 %v4099
    %5780 = vmatpush1.bf16.msra.mxu0 %v4098
    %5781 = vmatprep.mubr.bf16.mxu0 %v1092
    %5782 = vmatmul.mubr.bf16.gmra.mrb[0].mxu0 %v1090
    %v5783 = vpop.f32.mrb[0].mxu0
    %v5784 = vadd.f32 %v5743, %v5783
    %v5785 = vpop.f32.mrb[0].mxu0
    %v5786 = vadd.f32 %v5745, %v5785
    %v5787 = vpop.f32.mrb[0].mxu0
    %v5788 = vpop.f32.mrb[0].mxu0
    %5789 = vdwg.mxu0
    %5790 = vmatprep.subr.bf16.mxu0 %v4101
    %5791 = vmatpush1.bf16.msra.mxu0 %v4100
    %5792 = vmatprep.subr.bf16.mxu0 %v4103
    %5793 = vmatpush1.bf16.msra.mxu0 %v4102
    %5794 = vmatprep.subr.bf16.mxu0 %v4105
    %5795 = vmatpush1.bf16.msra.mxu0 %v4104
    %5796 = vmatprep.subr.bf16.mxu0 %v4107
    %5797 = vmatpush1.bf16.msra.mxu0 %v4106
    %5798 = vmatprep.subr.bf16.mxu0 %v4109
    %5799 = vmatpush1.bf16.msra.mxu0 %v4108
    %5800 = vmatprep.subr.bf16.mxu0 %v4111
    %5801 = vmatpush1.bf16.msra.mxu0 %v4110
    %5802 = vmatprep.subr.bf16.mxu0 %v4113
    %5803 = vmatpush1.bf16.msra.mxu0 %v4112
    %5804 = vmatprep.subr.bf16.mxu0 %v4115
    %5805 = vmatpush1.bf16.msra.mxu0 %v4114
    %5806 = vmatprep.subr.bf16.mxu0 %v4117
    %5807 = vmatpush1.bf16.msra.mxu0 %v4116
    %5808 = vmatprep.subr.bf16.mxu0 %v4119
    %5809 = vmatpush1.bf16.msra.mxu0 %v4118
    %5810 = vmatprep.subr.bf16.mxu0 %v4121
    %5811 = vmatpush1.bf16.msra.mxu0 %v4120
    %5812 = vmatprep.subr.bf16.mxu0 %v4123
    %5813 = vmatpush1.bf16.msra.mxu0 %v4122
    %5814 = vmatprep.subr.bf16.mxu0 %v4125
    %5815 = vmatpush1.bf16.msra.mxu0 %v4124
    %5816 = vmatprep.subr.bf16.mxu0 %v4127
    %5817 = vmatpush1.bf16.msra.mxu0 %v4126
    %5818 = vmatprep.subr.bf16.mxu0 %v4129
    %5819 = vmatpush1.bf16.msra.mxu0 %v4128
    %5820 = vmatprep.subr.bf16.mxu0 %v4131
    %5821 = vmatpush1.bf16.msra.mxu0 %v4130
    %5822 = vmatprep.mubr.bf16.mxu0 %v1089
    %5823 = vmatmul.mubr.bf16.gmra.mrb[0].mxu0 %v1075
    %v5824 = vpop.f32.mrb[0].mxu0
    %v5825 = vadd.f32 %v5784, %v5824
    %v5826 = vpop.f32.mrb[0].mxu0
    %v5827 = vadd.f32 %v5786, %v5826
    %v5828 = vpop.f32.mrb[0].mxu0
    %v5829 = vpop.f32.mrb[0].mxu0
    %5830 = vdwg.mxu0
    %5831 = vmatprep.subr.bf16.mxu0 %v4133
    %5832 = vmatpush1.bf16.msra.mxu0 %v4132
    %5833 = vmatprep.subr.bf16.mxu0 %v4135
    %5834 = vmatpush1.bf16.msra.mxu0 %v4134
    %5835 = vmatprep.subr.bf16.mxu0 %v4137
    %5836 = vmatpush1.bf16.msra.mxu0 %v4136
    %5837 = vmatprep.subr.bf16.mxu0 %v4139
    %5838 = vmatpush1.bf16.msra.mxu0 %v4138
    %5839 = vmatprep.subr.bf16.mxu0 %v4141
    %5840 = vmatpush1.bf16.msra.mxu0 %v4140
    %5841 = vmatprep.subr.bf16.mxu0 %v4143
    %5842 = vmatpush1.bf16.msra.mxu0 %v4142
    %5843 = vmatprep.subr.bf16.mxu0 %v4145
    %5844 = vmatpush1.bf16.msra.mxu0 %v4144
    %5845 = vmatprep.subr.bf16.mxu0 %v4147
    %5846 = vmatpush1.bf16.msra.mxu0 %v4146
    %5847 = vmatprep.subr.bf16.mxu0 %v4149
    %5848 = vmatpush1.bf16.msra.mxu0 %v4148
    %5849 = vmatprep.subr.bf16.mxu0 %v4151
    %5850 = vmatpush1.bf16.msra.mxu0 %v4150
    %5851 = vmatprep.subr.bf16.mxu0 %v4153
    %5852 = vmatpush1.bf16.msra.mxu0 %v4152
    %5853 = vmatprep.subr.bf16.mxu0 %v4155
    %5854 = vmatpush1.bf16.msra.mxu0 %v4154
    %5855 = vmatprep.subr.bf16.mxu0 %v4157
    %5856 = vmatpush1.bf16.msra.mxu0 %v4156
    %5857 = vmatprep.subr.bf16.mxu0 %v4159
    %5858 = vmatpush1.bf16.msra.mxu0 %v4158
    %5859 = vmatprep.subr.bf16.mxu0 %v4161
    %5860 = vmatpush1.bf16.msra.mxu0 %v4160
    %5861 = vmatprep.subr.bf16.mxu0 %v4163
    %5862 = vmatpush1.bf16.msra.mxu0 %v4162
    %5863 = vmatprep.mubr.bf16.mxu0 %v1093
    %5864 = vmatmul.mubr.bf16.gmra.mrb[0].mxu0 %v1091
    %v5865 = vpop.f32.mrb[0].mxu0
    %v5866 = vadd.f32 %v5825, %v5865
    %v5867 = vpop.f32.mrb[0].mxu0
    %v5868 = vadd.f32 %v5827, %v5867
    %v5869 = vpop.f32.mrb[0].mxu0
    %v5870 = vpop.f32.mrb[0].mxu0
    %5871 = vdwg.mxu0
    %5872 = vmatprep.subr.bf16.mxu0 %v4165
    %5873 = vmatpush1.bf16.msra.mxu0 %v4164
    %5874 = vmatprep.subr.bf16.mxu0 %v4167
    %5875 = vmatpush1.bf16.msra.mxu0 %v4166
    %5876 = vmatprep.subr.bf16.mxu0 %v4169
    %5877 = vmatpush1.bf16.msra.mxu0 %v4168
    %5878 = vmatprep.subr.bf16.mxu0 %v4171
    %5879 = vmatpush1.bf16.msra.mxu0 %v4170
    %5880 = vmatprep.subr.bf16.mxu0 %v4173
    %5881 = vmatpush1.bf16.msra.mxu0 %v4172
    %5882 = vmatprep.subr.bf16.mxu0 %v4175
    %5883 = vmatpush1.bf16.msra.mxu0 %v4174
    %5884 = vmatprep.subr.bf16.mxu0 %v4177
    %5885 = vmatpush1.bf16.msra.mxu0 %v4176
    %5886 = vmatprep.subr.bf16.mxu0 %v4179
    %5887 = vmatpush1.bf16.msra.mxu0 %v4178
    %5888 = vmatprep.subr.bf16.mxu0 %v4181
    %5889 = vmatpush1.bf16.msra.mxu0 %v4180
    %5890 = vmatprep.subr.bf16.mxu0 %v4183
    %5891 = vmatpush1.bf16.msra.mxu0 %v4182
    %5892 = vmatprep.subr.bf16.mxu0 %v4185
    %5893 = vmatpush1.bf16.msra.mxu0 %v4184
    %5894 = vmatprep.subr.bf16.mxu0 %v4187
    %5895 = vmatpush1.bf16.msra.mxu0 %v4186
    %5896 = vmatprep.subr.bf16.mxu0 %v4189
    %5897 = vmatpush1.bf16.msra.mxu0 %v4188
    %5898 = vmatprep.subr.bf16.mxu0 %v4191
    %5899 = vmatpush1.bf16.msra.mxu0 %v4190
    %5900 = vmatprep.subr.bf16.mxu0 %v4193
    %5901 = vmatpush1.bf16.msra.mxu0 %v4192
    %5902 = vmatprep.subr.bf16.mxu0 %v4195
    %5903 = vmatpush1.bf16.msra.mxu0 %v4194
    %5904 = vmatprep.mubr.bf16.mxu0 %v1150
    %5905 = vmatmul.mubr.bf16.gmra.mrb[0].mxu0 %v1136
    %v5906 = vpop.f32.mrb[0].mxu0
    %v5907 = vadd.f32 %v5866, %v5906
    %v5908 = vpop.f32.mrb[0].mxu0
    %v5909 = vadd.f32 %v5868, %v5908
    %v5910 = vpop.f32.mrb[0].mxu0
    %v5911 = vpop.f32.mrb[0].mxu0
    %5912 = vdwg.mxu0
    %5913 = vmatprep.subr.bf16.mxu0 %v4197
    %5914 = vmatpush1.bf16.msra.mxu0 %v4196
    %5915 = vmatprep.subr.bf16.mxu0 %v4199
    %5916 = vmatpush1.bf16.msra.mxu0 %v4198
    %5917 = vmatprep.subr.bf16.mxu0 %v4201
    %5918 = vmatpush1.bf16.msra.mxu0 %v4200
    %5919 = vmatprep.subr.bf16.mxu0 %v4203
    %5920 = vmatpush1.bf16.msra.mxu0 %v4202
    %5921 = vmatprep.subr.bf16.mxu0 %v4205
    %5922 = vmatpush1.bf16.msra.mxu0 %v4204
    %5923 = vmatprep.subr.bf16.mxu0 %v4207
    %5924 = vmatpush1.bf16.msra.mxu0 %v4206
    %5925 = vmatprep.subr.bf16.mxu0 %v4209
    %5926 = vmatpush1.bf16.msra.mxu0 %v4208
    %5927 = vmatprep.subr.bf16.mxu0 %v4211
    %5928 = vmatpush1.bf16.msra.mxu0 %v4210
    %5929 = vmatprep.subr.bf16.mxu0 %v4213
    %5930 = vmatpush1.bf16.msra.mxu0 %v4212
    %5931 = vmatprep.subr.bf16.mxu0 %v4215
    %5932 = vmatpush1.bf16.msra.mxu0 %v4214
    %5933 = vmatprep.subr.bf16.mxu0 %v4217
    %5934 = vmatpush1.bf16.msra.mxu0 %v4216
    %5935 = vmatprep.subr.bf16.mxu0 %v4219
    %5936 = vmatpush1.bf16.msra.mxu0 %v4218
    %5937 = vmatprep.subr.bf16.mxu0 %v4221
    %5938 = vmatpush1.bf16.msra.mxu0 %v4220
    %5939 = vmatprep.subr.bf16.mxu0 %v4223
    %5940 = vmatpush1.bf16.msra.mxu0 %v4222
    %5941 = vmatprep.subr.bf16.mxu0 %v4225
    %5942 = vmatpush1.bf16.msra.mxu0 %v4224
    %5943 = vmatprep.subr.bf16.mxu0 %v4227
    %5944 = vmatpush1.bf16.msra.mxu0 %v4226
    %5945 = vmatprep.mubr.bf16.mxu0 %v1160
    %5946 = vmatmul.mubr.bf16.gmra.mrb[0].mxu0 %v1158
    %v5947 = vpop.f32.mrb[0].mxu0
    %v5948 = vadd.f32 %v5907, %v5947
    %v5949 = vpop.f32.mrb[0].mxu0
    %v5950 = vadd.f32 %v5909, %v5949
    %v5951 = vpop.f32.mrb[0].mxu0
    %v5952 = vpop.f32.mrb[0].mxu0
    %5953 = vdwg.mxu0
    %5954 = vmatprep.subr.bf16.mxu0 %v4229
    %5955 = vmatpush1.bf16.msra.mxu0 %v4228
    %5956 = vmatprep.subr.bf16.mxu0 %v4231
    %5957 = vmatpush1.bf16.msra.mxu0 %v4230
    %5958 = vmatprep.subr.bf16.mxu0 %v4233
    %5959 = vmatpush1.bf16.msra.mxu0 %v4232
    %5960 = vmatprep.subr.bf16.mxu0 %v4235
    %5961 = vmatpush1.bf16.msra.mxu0 %v4234
    %5962 = vmatprep.subr.bf16.mxu0 %v4237
    %5963 = vmatpush1.bf16.msra.mxu0 %v4236
    %5964 = vmatprep.subr.bf16.mxu0 %v4239
    %5965 = vmatpush1.bf16.msra.mxu0 %v4238
    %5966 = vmatprep.subr.bf16.mxu0 %v4241
    %5967 = vmatpush1.bf16.msra.mxu0 %v4240
    %5968 = vmatprep.subr.bf16.mxu0 %v4243
    %5969 = vmatpush1.bf16.msra.mxu0 %v4242
    %5970 = vmatprep.subr.bf16.mxu0 %v4245
    %5971 = vmatpush1.bf16.msra.mxu0 %v4244
    %5972 = vmatprep.subr.bf16.mxu0 %v4247
    %5973 = vmatpush1.bf16.msra.mxu0 %v4246
    %5974 = vmatprep.subr.bf16.mxu0 %v4249
    %5975 = vmatpush1.bf16.msra.mxu0 %v4248
    %5976 = vmatprep.subr.bf16.mxu0 %v4251
    %5977 = vmatpush1.bf16.msra.mxu0 %v4250
    %5978 = vmatprep.subr.bf16.mxu0 %v4253
    %5979 = vmatpush1.bf16.msra.mxu0 %v4252
    %5980 = vmatprep.subr.bf16.mxu0 %v4255
    %5981 = vmatpush1.bf16.msra.mxu0 %v4254
    %5982 = vmatprep.subr.bf16.mxu0 %v4257
    %5983 = vmatpush1.bf16.msra.mxu0 %v4256
    %5984 = vmatprep.subr.bf16.mxu0 %v4259
    %5985 = vmatpush1.bf16.msra.mxu0 %v4258
    %5986 = vmatprep.mubr.bf16.mxu0 %v1157
    %5987 = vmatmul.mubr.bf16.gmra.mrb[0].mxu0 %v1143
    %v5988 = vpop.f32.mrb[0].mxu0
    %v5989 = vadd.f32 %v5948, %v5988
    %v5990 = vpop.f32.mrb[0].mxu0
    %v5991 = vadd.f32 %v5950, %v5990
    %v5992 = vpop.f32.mrb[0].mxu0
    %v5993 = vpop.f32.mrb[0].mxu0
    %5994 = vdwg.mxu0
    %5995 = vmatprep.subr.bf16.mxu0 %v4261
    %5996 = vmatpush1.bf16.msra.mxu0 %v4260
    %5997 = vmatprep.subr.bf16.mxu0 %v4263
    %5998 = vmatpush1.bf16.msra.mxu0 %v4262
    %5999 = vmatprep.subr.bf16.mxu0 %v4265
    %6000 = vmatpush1.bf16.msra.mxu0 %v4264
    %6001 = vmatprep.subr.bf16.mxu0 %v4267
    %6002 = vmatpush1.bf16.msra.mxu0 %v4266
    %6003 = vmatprep.subr.bf16.mxu0 %v4269
    %6004 = vmatpush1.bf16.msra.mxu0 %v4268
    %6005 = vmatprep.subr.bf16.mxu0 %v4271
    %6006 = vmatpush1.bf16.msra.mxu0 %v4270
    %6007 = vmatprep.subr.bf16.mxu0 %v4273
    %6008 = vmatpush1.bf16.msra.mxu0 %v4272
    %6009 = vmatprep.subr.bf16.mxu0 %v4275
    %6010 = vmatpush1.bf16.msra.mxu0 %v4274
    %6011 = vmatprep.subr.bf16.mxu0 %v4277
    %6012 = vmatpush1.bf16.msra.mxu0 %v4276
    %6013 = vmatprep.subr.bf16.mxu0 %v4279
    %6014 = vmatpush1.bf16.msra.mxu0 %v4278
    %6015 = vmatprep.subr.bf16.mxu0 %v4281
    %6016 = vmatpush1.bf16.msra.mxu0 %v4280
    %6017 = vmatprep.subr.bf16.mxu0 %v4283
    %6018 = vmatpush1.bf16.msra.mxu0 %v4282
    %6019 = vmatprep.subr.bf16.mxu0 %v4285
    %6020 = vmatpush1.bf16.msra.mxu0 %v4284
    %6021 = vmatprep.subr.bf16.mxu0 %v4287
    %6022 = vmatpush1.bf16.msra.mxu0 %v4286
    %6023 = vmatprep.subr.bf16.mxu0 %v4289
    %6024 = vmatpush1.bf16.msra.mxu0 %v4288
    %6025 = vmatprep.subr.bf16.mxu0 %v4291
    %6026 = vmatpush1.bf16.msra.mxu0 %v4290
    %6027 = vmatprep.mubr.bf16.mxu0 %v1161
    %6028 = vmatmul.mubr.bf16.gmra.mrb[0].mxu0 %v1159
    %v6029 = vpop.f32.mrb[0].mxu0
    %v6030 = vadd.f32 %v5989, %v6029
    %v6031 = vpop.f32.mrb[0].mxu0
    %v6032 = vadd.f32 %v5991, %v6031
    %v6033 = vpop.f32.mrb[0].mxu0
    %v6034 = vpop.f32.mrb[0].mxu0
    %6035 = vdwg.mxu0
    %6036 = vmatprep.subr.bf16.mxu0 %v4293
    %6037 = vmatpush1.bf16.msra.mxu0 %v4292
    %6038 = vmatprep.subr.bf16.mxu0 %v4295
    %6039 = vmatpush1.bf16.msra.mxu0 %v4294
    %6040 = vmatprep.subr.bf16.mxu0 %v4297
    %6041 = vmatpush1.bf16.msra.mxu0 %v4296
    %6042 = vmatprep.subr.bf16.mxu0 %v4299
    %6043 = vmatpush1.bf16.msra.mxu0 %v4298
    %6044 = vmatprep.subr.bf16.mxu0 %v4301
    %6045 = vmatpush1.bf16.msra.mxu0 %v4300
    %6046 = vmatprep.subr.bf16.mxu0 %v4303
    %6047 = vmatpush1.bf16.msra.mxu0 %v4302
    %6048 = vmatprep.subr.bf16.mxu0 %v4305
    %6049 = vmatpush1.bf16.msra.mxu0 %v4304
    %6050 = vmatprep.subr.bf16.mxu0 %v4307
    %6051 = vmatpush1.bf16.msra.mxu0 %v4306
    %6052 = vmatprep.subr.bf16.mxu0 %v4309
    %6053 = vmatpush1.bf16.msra.mxu0 %v4308
    %6054 = vmatprep.subr.bf16.mxu0 %v4311
    %6055 = vmatpush1.bf16.msra.mxu0 %v4310
    %6056 = vmatprep.subr.bf16.mxu0 %v4313
    %6057 = vmatpush1.bf16.msra.mxu0 %v4312
    %6058 = vmatprep.subr.bf16.mxu0 %v4315
    %6059 = vmatpush1.bf16.msra.mxu0 %v4314
    %6060 = vmatprep.subr.bf16.mxu0 %v4317
    %6061 = vmatpush1.bf16.msra.mxu0 %v4316
    %6062 = vmatprep.subr.bf16.mxu0 %v4319
    %6063 = vmatpush1.bf16.msra.mxu0 %v4318
    %6064 = vmatprep.subr.bf16.mxu0 %v4321
    %6065 = vmatpush1.bf16.msra.mxu0 %v4320
    %6066 = vmatprep.subr.bf16.mxu0 %v4323
    %6067 = vmatpush1.bf16.msra.mxu0 %v4322
    %6068 = vmatprep.mubr.bf16.mxu0 %v1218
    %6069 = vmatmul.mubr.bf16.gmra.mrb[0].mxu0 %v1204
    %v6070 = vpop.f32.mrb[0].mxu0
    %v6071 = vadd.f32 %v6030, %v6070
    %v6072 = vpop.f32.mrb[0].mxu0
    %v6073 = vadd.f32 %v6032, %v6072
    %v6074 = vpop.f32.mrb[0].mxu0
    %v6075 = vpop.f32.mrb[0].mxu0
    %6076 = vdwg.mxu0
    %6077 = vmatprep.subr.bf16.mxu0 %v4325
    %6078 = vmatpush1.bf16.msra.mxu0 %v4324
    %6079 = vmatprep.subr.bf16.mxu0 %v4327
    %6080 = vmatpush1.bf16.msra.mxu0 %v4326
    %6081 = vmatprep.subr.bf16.mxu0 %v4329
    %6082 = vmatpush1.bf16.msra.mxu0 %v4328
    %6083 = vmatprep.subr.bf16.mxu0 %v4331
    %6084 = vmatpush1.bf16.msra.mxu0 %v4330
    %6085 = vmatprep.subr.bf16.mxu0 %v4333
    %6086 = vmatpush1.bf16.msra.mxu0 %v4332
    %6087 = vmatprep.subr.bf16.mxu0 %v4335
    %6088 = vmatpush1.bf16.msra.mxu0 %v4334
    %6089 = vmatprep.subr.bf16.mxu0 %v4337
    %6090 = vmatpush1.bf16.msra.mxu0 %v4336
    %6091 = vmatprep.subr.bf16.mxu0 %v4339
    %6092 = vmatpush1.bf16.msra.mxu0 %v4338
    %6093 = vmatprep.subr.bf16.mxu0 %v4341
    %6094 = vmatpush1.bf16.msra.mxu0 %v4340
    %6095 = vmatprep.subr.bf16.mxu0 %v4343
    %6096 = vmatpush1.bf16.msra.mxu0 %v4342
    %6097 = vmatprep.subr.bf16.mxu0 %v4345
    %6098 = vmatpush1.bf16.msra.mxu0 %v4344
    %6099 = vmatprep.subr.bf16.mxu0 %v4347
    %6100 = vmatpush1.bf16.msra.mxu0 %v4346
    %6101 = vmatprep.subr.bf16.mxu0 %v4349
    %6102 = vmatpush1.bf16.msra.mxu0 %v4348
    %6103 = vmatprep.subr.bf16.mxu0 %v4351
    %6104 = vmatpush1.bf16.msra.mxu0 %v4350
    %6105 = vmatprep.subr.bf16.mxu0 %v4353
    %6106 = vmatpush1.bf16.msra.mxu0 %v4352
    %6107 = vmatprep.subr.bf16.mxu0 %v4355
    %6108 = vmatpush1.bf16.msra.mxu0 %v4354
    %6109 = vmatprep.mubr.bf16.mxu0 %v1228
    %6110 = vmatmul.mubr.bf16.gmra.mrb[0].mxu0 %v1226
    %v6111 = vpop.f32.mrb[0].mxu0
    %v6112 = vadd.f32 %v6071, %v6111
    %v6113 = vpop.f32.mrb[0].mxu0
    %v6114 = vadd.f32 %v6073, %v6113
    %v6115 = vpop.f32.mrb[0].mxu0
    %v6116 = vpop.f32.mrb[0].mxu0
    %6117 = vdwg.mxu0
    %6118 = vmatprep.subr.bf16.mxu0 %v4357
    %6119 = vmatpush1.bf16.msra.mxu0 %v4356
    %6120 = vmatprep.subr.bf16.mxu0 %v4359
    %6121 = vmatpush1.bf16.msra.mxu0 %v4358
    %6122 = vmatprep.subr.bf16.mxu0 %v4361
    %6123 = vmatpush1.bf16.msra.mxu0 %v4360
    %6124 = vmatprep.subr.bf16.mxu0 %v4363
    %6125 = vmatpush1.bf16.msra.mxu0 %v4362
    %6126 = vmatprep.subr.bf16.mxu0 %v4365
    %6127 = vmatpush1.bf16.msra.mxu0 %v4364
    %6128 = vmatprep.subr.bf16.mxu0 %v4367
    %6129 = vmatpush1.bf16.msra.mxu0 %v4366
    %6130 = vmatprep.subr.bf16.mxu0 %v4369
    %6131 = vmatpush1.bf16.msra.mxu0 %v4368
    %6132 = vmatprep.subr.bf16.mxu0 %v4371
    %6133 = vmatpush1.bf16.msra.mxu0 %v4370
    %6134 = vmatprep.subr.bf16.mxu0 %v4373
    %6135 = vmatpush1.bf16.msra.mxu0 %v4372
    %6136 = vmatprep.subr.bf16.mxu0 %v4375
    %6137 = vmatpush1.bf16.msra.mxu0 %v4374
    %6138 = vmatprep.subr.bf16.mxu0 %v4377
    %6139 = vmatpush1.bf16.msra.mxu0 %v4376
    %6140 = vmatprep.subr.bf16.mxu0 %v4379
    %6141 = vmatpush1.bf16.msra.mxu0 %v4378
    %6142 = vmatprep.subr.bf16.mxu0 %v4381
    %6143 = vmatpush1.bf16.msra.mxu0 %v4380
    %6144 = vmatprep.subr.bf16.mxu0 %v4383
    %6145 = vmatpush1.bf16.msra.mxu0 %v4382
    %6146 = vmatprep.subr.bf16.mxu0 %v4385
    %6147 = vmatpush1.bf16.msra.mxu0 %v4384
    %6148 = vmatprep.subr.bf16.mxu0 %v4387
    %6149 = vmatpush1.bf16.msra.mxu0 %v4386
    %6150 = vmatprep.mubr.bf16.mxu0 %v1225
    %6151 = vmatmul.mubr.bf16.gmra.mrb[0].mxu0 %v1211
    %v6152 = vpop.f32.mrb[0].mxu0
    %v6153 = vadd.f32 %v6112, %v6152
    %v6154 = vpop.f32.mrb[0].mxu0
    %v6155 = vadd.f32 %v6114, %v6154
    %v6156 = vpop.f32.mrb[0].mxu0
    %v6157 = vpop.f32.mrb[0].mxu0
    %6158 = vdwg.mxu0
    %6159 = vmatprep.subr.bf16.mxu0 %v4389
    %6160 = vmatpush1.bf16.msra.mxu0 %v4388
    %6161 = vmatprep.subr.bf16.mxu0 %v4391
    %6162 = vmatpush1.bf16.msra.mxu0 %v4390
    %6163 = vmatprep.subr.bf16.mxu0 %v4393
    %6164 = vmatpush1.bf16.msra.mxu0 %v4392
    %6165 = vmatprep.subr.bf16.mxu0 %v4395
    %6166 = vmatpush1.bf16.msra.mxu0 %v4394
    %6167 = vmatprep.subr.bf16.mxu0 %v4397
    %6168 = vmatpush1.bf16.msra.mxu0 %v4396
    %6169 = vmatprep.subr.bf16.mxu0 %v4399
    %6170 = vmatpush1.bf16.msra.mxu0 %v4398
    %6171 = vmatprep.subr.bf16.mxu0 %v4401
    %6172 = vmatpush1.bf16.msra.mxu0 %v4400
    %6173 = vmatprep.subr.bf16.mxu0 %v4403
    %6174 = vmatpush1.bf16.msra.mxu0 %v4402
    %6175 = vmatprep.subr.bf16.mxu0 %v4405
    %6176 = vmatpush1.bf16.msra.mxu0 %v4404
    %6177 = vmatprep.subr.bf16.mxu0 %v4407
    %6178 = vmatpush1.bf16.msra.mxu0 %v4406
    %6179 = vmatprep.subr.bf16.mxu0 %v4409
    %6180 = vmatpush1.bf16.msra.mxu0 %v4408
    %6181 = vmatprep.subr.bf16.mxu0 %v4411
    %6182 = vmatpush1.bf16.msra.mxu0 %v4410
    %6183 = vmatprep.subr.bf16.mxu0 %v4413
    %6184 = vmatpush1.bf16.msra.mxu0 %v4412
    %6185 = vmatprep.subr.bf16.mxu0 %v4415
    %6186 = vmatpush1.bf16.msra.mxu0 %v4414
    %6187 = vmatprep.subr.bf16.mxu0 %v4417
    %6188 = vmatpush1.bf16.msra.mxu0 %v4416
    %6189 = vmatprep.subr.bf16.mxu0 %v4419
    %6190 = vmatpush1.bf16.msra.mxu0 %v4418
    %6191 = vmatprep.mubr.bf16.mxu0 %v1229
    %6192 = vmatmul.mubr.bf16.gmra.mrb[0].mxu0 %v1227
    %v6193 = vpop.f32.mrb[0].mxu0
    %v6194 = vadd.f32 %v6153, %v6193
    %v6195 = vpop.f32.mrb[0].mxu0
    %v6196 = vadd.f32 %v6155, %v6195
    %v6197 = vpop.f32.mrb[0].mxu0
    %v6198 = vpop.f32.mrb[0].mxu0
    %6199 = vdwg.mxu0
    %6200 = vmatprep.subr.bf16.mxu0 %v4421
    %6201 = vmatpush1.bf16.msra.mxu0 %v4420
    %6202 = vmatprep.subr.bf16.mxu0 %v4423
    %6203 = vmatpush1.bf16.msra.mxu0 %v4422
    %6204 = vmatprep.subr.bf16.mxu0 %v4425
    %6205 = vmatpush1.bf16.msra.mxu0 %v4424
    %6206 = vmatprep.subr.bf16.mxu0 %v4427
    %6207 = vmatpush1.bf16.msra.mxu0 %v4426
    %6208 = vmatprep.subr.bf16.mxu0 %v4429
    %6209 = vmatpush1.bf16.msra.mxu0 %v4428
    %6210 = vmatprep.subr.bf16.mxu0 %v4431
    %6211 = vmatpush1.bf16.msra.mxu0 %v4430
    %6212 = vmatprep.subr.bf16.mxu0 %v4433
    %6213 = vmatpush1.bf16.msra.mxu0 %v4432
    %6214 = vmatprep.subr.bf16.mxu0 %v4435
    %6215 = vmatpush1.bf16.msra.mxu0 %v4434
    %6216 = vmatprep.subr.bf16.mxu0 %v4437
    %6217 = vmatpush1.bf16.msra.mxu0 %v4436
    %6218 = vmatprep.subr.bf16.mxu0 %v4439
    %6219 = vmatpush1.bf16.msra.mxu0 %v4438
    %6220 = vmatprep.subr.bf16.mxu0 %v4441
    %6221 = vmatpush1.bf16.msra.mxu0 %v4440
    %6222 = vmatprep.subr.bf16.mxu0 %v4443
    %6223 = vmatpush1.bf16.msra.mxu0 %v4442
    %6224 = vmatprep.subr.bf16.mxu0 %v4445
    %6225 = vmatpush1.bf16.msra.mxu0 %v4444
    %6226 = vmatprep.subr.bf16.mxu0 %v4447
    %6227 = vmatpush1.bf16.msra.mxu0 %v4446
    %6228 = vmatprep.subr.bf16.mxu0 %v4449
    %6229 = vmatpush1.bf16.msra.mxu0 %v4448
    %6230 = vmatprep.subr.bf16.mxu0 %v4451
    %6231 = vmatpush1.bf16.msra.mxu0 %v4450
    %6232 = vmatprep.mubr.bf16.mxu0 %v1286
    %6233 = vmatmul.mubr.bf16.gmra.mrb[0].mxu0 %v1272
    %v6234 = vpop.f32.mrb[0].mxu0
    %v6235 = vadd.f32 %v6194, %v6234
    %v6236 = vpop.f32.mrb[0].mxu0
    %v6237 = vadd.f32 %v6196, %v6236
    %v6238 = vpop.f32.mrb[0].mxu0
    %v6239 = vpop.f32.mrb[0].mxu0
    %6240 = vdwg.mxu0
    %6241 = vmatprep.subr.bf16.mxu0 %v4453
    %6242 = vmatpush1.bf16.msra.mxu0 %v4452
    %6243 = vmatprep.subr.bf16.mxu0 %v4455
    %6244 = vmatpush1.bf16.msra.mxu0 %v4454
    %6245 = vmatprep.subr.bf16.mxu0 %v4457
    %6246 = vmatpush1.bf16.msra.mxu0 %v4456
    %6247 = vmatprep.subr.bf16.mxu0 %v4459
    %6248 = vmatpush1.bf16.msra.mxu0 %v4458
    %6249 = vmatprep.subr.bf16.mxu0 %v4461
    %6250 = vmatpush1.bf16.msra.mxu0 %v4460
    %6251 = vmatprep.subr.bf16.mxu0 %v4463
    %6252 = vmatpush1.bf16.msra.mxu0 %v4462
    %6253 = vmatprep.subr.bf16.mxu0 %v4465
    %6254 = vmatpush1.bf16.msra.mxu0 %v4464
    %6255 = vmatprep.subr.bf16.mxu0 %v4467
    %6256 = vmatpush1.bf16.msra.mxu0 %v4466
    %6257 = vmatprep.subr.bf16.mxu0 %v4469
    %6258 = vmatpush1.bf16.msra.mxu0 %v4468
    %6259 = vmatprep.subr.bf16.mxu0 %v4471
    %6260 = vmatpush1.bf16.msra.mxu0 %v4470
    %6261 = vmatprep.subr.bf16.mxu0 %v4473
    %6262 = vmatpush1.bf16.msra.mxu0 %v4472
    %6263 = vmatprep.subr.bf16.mxu0 %v4475
    %6264 = vmatpush1.bf16.msra.mxu0 %v4474
    %6265 = vmatprep.subr.bf16.mxu0 %v4477
    %6266 = vmatpush1.bf16.msra.mxu0 %v4476
    %6267 = vmatprep.subr.bf16.mxu0 %v4479
    %6268 = vmatpush1.bf16.msra.mxu0 %v4478
    %6269 = vmatprep.subr.bf16.mxu0 %v4481
    %6270 = vmatpush1.bf16.msra.mxu0 %v4480
    %6271 = vmatprep.subr.bf16.mxu0 %v4483
    %6272 = vmatpush1.bf16.msra.mxu0 %v4482
    %6273 = vmatprep.mubr.bf16.mxu0 %v1296
    %6274 = vmatmul.mubr.bf16.gmra.mrb[0].mxu0 %v1294
    %v6275 = vpop.f32.mrb[0].mxu0
    %v6276 = vadd.f32 %v6235, %v6275
    %v6277 = vpop.f32.mrb[0].mxu0
    %v6278 = vadd.f32 %v6237, %v6277
    %v6279 = vpop.f32.mrb[0].mxu0
    %v6280 = vpop.f32.mrb[0].mxu0
    %6281 = vdwg.mxu0
    %6282 = vmatprep.subr.bf16.mxu0 %v4485
    %6283 = vmatpush1.bf16.msra.mxu0 %v4484
    %6284 = vmatprep.subr.bf16.mxu0 %v4487
    %6285 = vmatpush1.bf16.msra.mxu0 %v4486
    %6286 = vmatprep.subr.bf16.mxu0 %v4489
    %6287 = vmatpush1.bf16.msra.mxu0 %v4488
    %6288 = vmatprep.subr.bf16.mxu0 %v4491
    %6289 = vmatpush1.bf16.msra.mxu0 %v4490
    %6290 = vmatprep.subr.bf16.mxu0 %v4493
    %6291 = vmatpush1.bf16.msra.mxu0 %v4492
    %6292 = vmatprep.subr.bf16.mxu0 %v4495
    %6293 = vmatpush1.bf16.msra.mxu0 %v4494
    %6294 = vmatprep.subr.bf16.mxu0 %v4497
    %6295 = vmatpush1.bf16.msra.mxu0 %v4496
    %6296 = vmatprep.subr.bf16.mxu0 %v4499
    %6297 = vmatpush1.bf16.msra.mxu0 %v4498
    %6298 = vmatprep.subr.bf16.mxu0 %v4501
    %6299 = vmatpush1.bf16.msra.mxu0 %v4500
    %6300 = vmatprep.subr.bf16.mxu0 %v4503
    %6301 = vmatpush1.bf16.msra.mxu0 %v4502
    %6302 = vmatprep.subr.bf16.mxu0 %v4505
    %6303 = vmatpush1.bf16.msra.mxu0 %v4504
    %6304 = vmatprep.subr.bf16.mxu0 %v4507
    %6305 = vmatpush1.bf16.msra.mxu0 %v4506
    %6306 = vmatprep.subr.bf16.mxu0 %v4509
    %6307 = vmatpush1.bf16.msra.mxu0 %v4508
    %6308 = vmatprep.subr.bf16.mxu0 %v4511
    %6309 = vmatpush1.bf16.msra.mxu0 %v4510
    %6310 = vmatprep.subr.bf16.mxu0 %v4513
    %6311 = vmatpush1.bf16.msra.mxu0 %v4512
    %6312 = vmatprep.subr.bf16.mxu0 %v4515
    %6313 = vmatpush1.bf16.msra.mxu0 %v4514
    %6314 = vmatprep.mubr.bf16.mxu0 %v1293
    %6315 = vmatmul.mubr.bf16.gmra.mrb[0].mxu0 %v1279
    %v6316 = vpop.f32.mrb[0].mxu0
    %v6317 = vadd.f32 %v6276, %v6316
    %v6318 = vpop.f32.mrb[0].mxu0
    %v6319 = vadd.f32 %v6278, %v6318
    %v6320 = vpop.f32.mrb[0].mxu0
    %v6321 = vpop.f32.mrb[0].mxu0
    %6322 = vdwg.mxu0
    %6323 = vmatprep.subr.bf16.mxu0 %v4517
    %6324 = vmatpush1.bf16.msra.mxu0 %v4516
    %6325 = vmatprep.subr.bf16.mxu0 %v4519
    %6326 = vmatpush1.bf16.msra.mxu0 %v4518
    %6327 = vmatprep.subr.bf16.mxu0 %v4521
    %6328 = vmatpush1.bf16.msra.mxu0 %v4520
    %6329 = vmatprep.subr.bf16.mxu0 %v4523
    %6330 = vmatpush1.bf16.msra.mxu0 %v4522
    %6331 = vmatprep.subr.bf16.mxu0 %v4525
    %6332 = vmatpush1.bf16.msra.mxu0 %v4524
    %6333 = vmatprep.subr.bf16.mxu0 %v4527
    %6334 = vmatpush1.bf16.msra.mxu0 %v4526
    %6335 = vmatprep.subr.bf16.mxu0 %v4529
    %6336 = vmatpush1.bf16.msra.mxu0 %v4528
    %6337 = vmatprep.subr.bf16.mxu0 %v4531
    %6338 = vmatpush1.bf16.msra.mxu0 %v4530
    %6339 = vmatprep.subr.bf16.mxu0 %v4533
    %6340 = vmatpush1.bf16.msra.mxu0 %v4532
    %6341 = vmatprep.subr.bf16.mxu0 %v4535
    %6342 = vmatpush1.bf16.msra.mxu0 %v4534
    %6343 = vmatprep.subr.bf16.mxu0 %v4537
    %6344 = vmatpush1.bf16.msra.mxu0 %v4536
    %6345 = vmatprep.subr.bf16.mxu0 %v4539
    %6346 = vmatpush1.bf16.msra.mxu0 %v4538
    %6347 = vmatprep.subr.bf16.mxu0 %v4541
    %6348 = vmatpush1.bf16.msra.mxu0 %v4540
    %6349 = vmatprep.subr.bf16.mxu0 %v4543
    %6350 = vmatpush1.bf16.msra.mxu0 %v4542
    %6351 = vmatprep.subr.bf16.mxu0 %v4545
    %6352 = vmatpush1.bf16.msra.mxu0 %v4544
    %6353 = vmatprep.subr.bf16.mxu0 %v4547
    %6354 = vmatpush1.bf16.msra.mxu0 %v4546
    %6355 = vmatprep.mubr.bf16.mxu0 %v1297
    %6356 = vmatmul.mubr.bf16.gmra.mrb[0].mxu0 %v1295
    %v6357 = vpop.f32.mrb[0].mxu0
    %v6358 = vadd.f32 %v6317, %v6357
    %v6359 = vpop.f32.mrb[0].mxu0
    %v6360 = vadd.f32 %v6319, %v6359
    %v6361 = vpop.f32.mrb[0].mxu0
    %v6362 = vpop.f32.mrb[0].mxu0
    %6363 = vdwg.mxu0
    %6364 = vmatprep.subr.bf16.mxu0 %v4549
    %6365 = vmatpush1.bf16.msra.mxu0 %v4548
    %6366 = vmatprep.subr.bf16.mxu0 %v4551
    %6367 = vmatpush1.bf16.msra.mxu0 %v4550
    %6368 = vmatprep.subr.bf16.mxu0 %v4553
    %6369 = vmatpush1.bf16.msra.mxu0 %v4552
    %6370 = vmatprep.subr.bf16.mxu0 %v4555
    %6371 = vmatpush1.bf16.msra.mxu0 %v4554
    %6372 = vmatprep.subr.bf16.mxu0 %v4557
    %6373 = vmatpush1.bf16.msra.mxu0 %v4556
    %6374 = vmatprep.subr.bf16.mxu0 %v4559
    %6375 = vmatpush1.bf16.msra.mxu0 %v4558
    %6376 = vmatprep.subr.bf16.mxu0 %v4561
    %6377 = vmatpush1.bf16.msra.mxu0 %v4560
    %6378 = vmatprep.subr.bf16.mxu0 %v4563
    %6379 = vmatpush1.bf16.msra.mxu0 %v4562
    %6380 = vmatprep.subr.bf16.mxu0 %v4565
    %6381 = vmatpush1.bf16.msra.mxu0 %v4564
    %6382 = vmatprep.subr.bf16.mxu0 %v4567
    %6383 = vmatpush1.bf16.msra.mxu0 %v4566
    %6384 = vmatprep.subr.bf16.mxu0 %v4569
    %6385 = vmatpush1.bf16.msra.mxu0 %v4568
    %6386 = vmatprep.subr.bf16.mxu0 %v4571
    %6387 = vmatpush1.bf16.msra.mxu0 %v4570
    %6388 = vmatprep.subr.bf16.mxu0 %v4573
    %6389 = vmatpush1.bf16.msra.mxu0 %v4572
    %6390 = vmatprep.subr.bf16.mxu0 %v4575
    %6391 = vmatpush1.bf16.msra.mxu0 %v4574
    %6392 = vmatprep.subr.bf16.mxu0 %v4577
    %6393 = vmatpush1.bf16.msra.mxu0 %v4576
    %6394 = vmatprep.subr.bf16.mxu0 %v4579
    %6395 = vmatpush1.bf16.msra.mxu0 %v4578
    %6396 = vmatprep.mubr.bf16.mxu0 %v1329
    %6397 = vmatmul.mubr.bf16.gmra.mrb[0].mxu0 %v1322
    %v6398 = vpop.f32.mrb[0].mxu0
    %v6399 = vadd.f32 %v6358, %v6398
    %v6400 = vpop.f32.mrb[0].mxu0
    %v6401 = vadd.f32 %v6360, %v6400
    %v6402 = vpop.f32.mrb[0].mxu0
    %v6403 = vpop.f32.mrb[0].mxu0
    %6404 = vdwg.mxu0
    %v6405 = vmax.f32 %v6399, 0.0
    %v6406 = vmax.f32 %v6401, 0.0
    %v6407 = vld [vmem:[%s3] sm:$0x3]
    %v6409 = vlaneseq
    %v6410 = vshrl.u32 %v6409, 7
    %v6411 = vsub.s32 0, %v6410
    %v6412 = vrot.slane %v6407, %v6411
    %v6413 = vlaneseq
    %v6414 = vshrl.u32 %v6413, 7
    %v6415 = vsub.s32 1, %v6414
    %v6416 = vrot.slane %v6407, %v6415
    %v6419 = vmul.f32 %v6405, %v6412
    %v6420 = vmul.f32 %v6406, %v6416
    %vm6421 = vcmask 588800
    %v6422 = vsel %vm6421, %v6420, 0.0
    %v6423 = vadd.f32 %v6419, %v6422
    %6424 = vadd.xlane.f32.xlu0 %v6423
    %v6425 = vpop.xlane.xlu0 %6424
    %v6426 = vld [vmem:[#allocation2] sm:$0x1]
    %v6428 = vlaneseq
    %v6429 = vshrl.u32 %v6428, 7
    %v6430 = vsub.s32 0, %v6429
    %v6431 = vrot.slane %v6426, %v6430
    %v6433 = vadd.f32 %v6425, %v6431
    %vm6434 = vcmask 7168
    %6435 = vst.msk [vmem:[#allocation3] sm:$0xff] %vm6434, %v6433
    // Predicated region
    $region22: #{tpu_custom_call.1} parent=1 // pred_check
      _
    $region23: #{tpu_custom_call.1} parent=1 // pred_check_branch
      %6437 = sbr.rel (0) target = $region25
    $region24: #{tpu_custom_call.1} parent=1 // pred_region
      // Predicated region
      $region26: #{tpu_custom_call.1} parent=24 // pred_check
        _
      $region27: #{tpu_custom_call.1} parent=24 // pred_check_branch
        %6439 = sbr.rel (0) target = $region29
      $region28: #{tpu_custom_call.1} parent=24 // pred_region
        // Predicated region
        $region30: #{tpu_custom_call.1} parent=28 // pred_check
          _
        $region31: #{tpu_custom_call.1} parent=28 // pred_check_branch
          %6441 = sbr.rel target = $region33
        $region32: #{tpu_custom_call.1} parent=28 // pred_region
          // Predicated region
          $region45: #{tpu_custom_call.1} parent=32 // pred_check
            _
          $region46: #{tpu_custom_call.1} parent=32 // pred_check_branch
            %6456 = sbr.rel (0) target = $region48
          $region47: #{tpu_custom_call.1} parent=32 // pred_region
            loop: start=0, step=1, limit=1
            $region49: #{tpu_custom_call.1} parent=47 // loop_pre_header
              _
            $region50: #{tpu_custom_call.1} parent=47 // loop_header
              %s6459 = sphi 0, %s6463
              %p6460 = scmp.ge.s32.totalorder %s6459, 1
              %s6464 = sphi [#allocation3], [#allocation3]
              %s6465 = sphi %s5, %s5
            $region51: #{tpu_custom_call.1} parent=47 // loop_header_branch
              %6462 = sbr.rel (%p6460) target = $region55
            $region52: #{tpu_custom_call.1} parent=47 // loop_body
              %v6466 = vld [vmem:[%s6464] sm:$0x3]
              %6467 = vst [vmem:[%s6465] sm:$0x3] %v6466
            $region53: #{tpu_custom_call.1} parent=47 // loop_footer
              %s6463 = sadd.s32 1, %s6459
            $region54: #{tpu_custom_call.1} parent=47 // loop_footer_branch
              %6458 = sbr.rel target = $region50
            $region55: #{tpu_custom_call.1} parent=47 // loop_exit
              _
          $region48: #{tpu_custom_call.1} parent=32 // pred_fallthru
            _
        $region33: #{tpu_custom_call.1} parent=28 // pred_fallthru
          _
        // Predicated region
        $region34: #{tpu_custom_call.1} parent=28 // pred_check
          _
        $region35: #{tpu_custom_call.1} parent=28 // pred_check_branch
          %6443 = sbr.rel (0) target = $region37
        $region36: #{tpu_custom_call.1} parent=28 // pred_region
          loop: start=0, step=1, limit=1
          $region38: #{tpu_custom_call.1} parent=36 // loop_pre_header
            _
          $region39: #{tpu_custom_call.1} parent=36 // loop_header
            %s6446 = sphi 0, %s6450
            %p6447 = scmp.ge.s32.totalorder %s6446, 1
            %s6451 = sphi [#allocation3], [#allocation3]
            %s6452 = sphi %s5, %s5
          $region40: #{tpu_custom_call.1} parent=36 // loop_header_branch
            %6449 = sbr.rel (%p6447) target = $region44
          $region41: #{tpu_custom_call.1} parent=36 // loop_body
            %v6453 = vld [vmem:[%s6451] sm:$0x3]
            %6454 = vst [vmem:[%s6452] sm:$0x3] %v6453
          $region42: #{tpu_custom_call.1} parent=36 // loop_footer
            %s6450 = sadd.s32 1, %s6446
          $region43: #{tpu_custom_call.1} parent=36 // loop_footer_branch
            %6445 = sbr.rel target = $region39
          $region44: #{tpu_custom_call.1} parent=36 // loop_exit
            _
        $region37: #{tpu_custom_call.1} parent=28 // pred_fallthru
          _
      $region29: #{tpu_custom_call.1} parent=24 // pred_fallthru
        _
      %6468 = vnop
    $region25: #{tpu_custom_call.1} parent=1 // pred_fallthru
      _
    // Predicated region
    $region56: #{tpu_custom_call.1} parent=1 // pred_check
      _
    $region57: #{tpu_custom_call.1} parent=1 // pred_check_branch
      %6470 = sbr.rel (0) target = $region59
    $region58: #{tpu_custom_call.1} parent=1 // pred_region
      _
    $region59: #{tpu_custom_call.1} parent=1 // pred_fallthru
      _

</llo_original>
